<compile_context>
chip_gen: v7x
topology: tpu7x:2x2x1
jax: 0.10.0
libtpu: 0.0.40
codegen_flags: <defaults>
</compile_context>

<pallas_src>
import functools
import math

import jax
import jax.numpy as jnp
from jax.experimental import pallas as pl
from jax.experimental.pallas import tpu as pltpu


VMEM_LIMIT = 32 * 1024 * 1024  # explicit scoped-VMEM budget (safe on v5e/v6e/v7x)


# ----------------------------- helpers --------------------------------------

def _pick_tile(dim, pref, align):
    """Largest tile <= pref that divides dim and is a multiple of align,
    falling back to the full dim (always legal per Pallas tiling rules)."""
    if dim <= pref:
        return dim
    t = (pref // align) * align
    while t >= align:
        if dim % t == 0:
            return t
        t -= align
    return dim


def _ln_math(x, g, b):
    # f32 LayerNorm, eps=1e-5 (PyTorch default)
    mean = jnp.mean(x, axis=-1, keepdims=True)
    var = jnp.mean(jnp.square(x - mean), axis=-1, keepdims=True)
    inv = jax.lax.rsqrt(var + 1e-5)
    return (x - mean) * inv * g + b


_CONTRACT_LAST = (((1,), (1,)), ((), ()))  # x[...,K] @ w[...,K]^T without transpose


# ----------------------------- Pallas kernels -------------------------------

def _linear_kernel(x_ref, w_ref, b_ref, o_ref, acc_ref, *, relu):
    # grid = (M_tiles, N_tiles, K_tiles); K is the trailing reduction axis.
    k = pl.program_id(2)

    @pl.when(k == 0)
    def _():
        acc_ref[...] = jnp.zeros_like(acc_ref)

    acc_ref[...] += jax.lax.dot_general(
        x_ref[...], w_ref[...],
        dimension_numbers=_CONTRACT_LAST,
        preferred_element_type=jnp.float32)

    @pl.when(k == pl.num_programs(2) - 1)
    def _():
        y = acc_ref[...] + b_ref[...]
        if relu:
            y = jnp.maximum(y, 0.0)
        o_ref[...] = y.astype(o_ref.dtype)


def _linear_add_ln_kernel(x_ref, w_ref, b_ref, res_ref, g_ref, be_ref,
                          o_ref, acc_ref):
    # out = LayerNorm(res + x @ w^T + b); grid = (M_tiles, K_tiles)
    k = pl.program_id(1)

    @pl.when(k == 0)
    def _():
        acc_ref[...] = jnp.zeros_like(acc_ref)

    acc_ref[...] += jax.lax.dot_general(
        x_ref[...], w_ref[...],
        dimension_numbers=_CONTRACT_LAST,
        preferred_element_type=jnp.float32)

    @pl.when(k == pl.num_programs(1) - 1)
    def _():
        y = acc_ref[...] + b_ref[...] + res_ref[...]
        o_ref[...] = _ln_math(y, g_ref[...], be_ref[...]).astype(o_ref.dtype)


def _ffn_add_ln_kernel(x_ref, w1_ref, b1_ref, w2_ref, b2_ref, g_ref, be_ref,
                       o_ref):
    # out = LayerNorm(x + relu(x@w1^T+b1)@w2^T + b2); grid = (M_tiles,)
    # hidden activation never leaves VMEM.
    x = x_ref[...]                                # f32 residual
    xb = x.astype(jnp.bfloat16)
    h = jax.lax.dot_general(xb, w1_ref[...],
                            dimension_numbers=_CONTRACT_LAST,
                            preferred_element_type=jnp.float32) + b1_ref[...]
    h = jnp.maximum(h, 0.0).astype(jnp.bfloat16)
    y = jax.lax.dot_general(h, w2_ref[...],
                            dimension_numbers=_CONTRACT_LAST,
                            preferred_element_type=jnp.float32) + b2_ref[...]
    o_ref[...] = _ln_math(x + y, g_ref[...], be_ref[...])


def _layernorm_kernel(x_ref, g_ref, b_ref, o_ref):
    o_ref[...] = _ln_math(x_ref[...], g_ref[...], b_ref[...])


def _attention_kernel(q_ref, k_ref, v_ref, o_ref, *, scale):
    # one (batch*head) per grid step; q/k/v bf16, softmax in f32.
    # TODO(synk): for long sequences, switch to a flash-style online-softmax
    # loop over K/V blocks instead of materializing the full [S,S] score tile.
    q = q_ref[0]
    k = k_ref[0]
    v = v_ref[0]
    s = jax.lax.dot_general(q, k,
                            dimension_numbers=_CONTRACT_LAST,
                            preferred_element_type=jnp.float32) * scale
    m = jnp.max(s, axis=-1, keepdims=True)
    p = jnp.exp(s - m)
    denom = jnp.sum(p, axis=-1, keepdims=True)
    p = p * pl.reciprocal(denom, approx=True)
    out = jnp.dot(p.astype(v.dtype), v, preferred_element_type=jnp.float32)
    o_ref[0] = out.astype(o_ref.dtype)


# ----------------------------- kernel wrappers -------------------------------

def linear(x2d, w, b, relu=False, out_dtype=jnp.float32):
    """y = x @ w^T + b.  x:[M,K], w:[N,K] (bf16), b:[1,N] (f32)."""
    M, K = x2d.shape
    N = w.shape[0]
    tm = _pick_tile(M, 256, 8)
    tn = _pick_tile(N, 256, 128)
    tk = _pick_tile(K, 512, 128)
    grid = (M // tm, N // tn, K // tk)
    return pl.pallas_call(
        functools.partial(_linear_kernel, relu=relu),
        out_shape=jax.ShapeDtypeStruct((M, N), out_dtype),
        grid_spec=pltpu.PrefetchScalarGridSpec(
            num_scalar_prefetch=0,
            grid=grid,
            in_specs=[
                pl.BlockSpec((tm, tk), lambda i, j, k: (i, k)),
                pl.BlockSpec((tn, tk), lambda i, j, k: (j, k)),
                pl.BlockSpec((1, tn), lambda i, j, k: (0, j)),
            ],
            out_specs=pl.BlockSpec((tm, tn), lambda i, j, k: (i, j)),
            scratch_shapes=[pltpu.VMEM((tm, tn), jnp.float32)],
        ),
        compiler_params=pltpu.CompilerParams(
            dimension_semantics=("parallel", "parallel", "arbitrary"),
            vmem_limit_bytes=VMEM_LIMIT,
        ),
    )(x2d.astype(jnp.bfloat16), w, b)


def linear_add_ln(x2d, w, b, res2d, g, be):
    """LayerNorm(res + x @ w^T + b).  x:[M,K] bf16, w:[E,K] bf16, res:[M,E] f32."""
    M, K = x2d.shape
    N = w.shape[0]
    tm = _pick_tile(M, 256, 8)
    tk = _pick_tile(K, 512, 128)
    grid = (M // tm, K // tk)
    return pl.pallas_call(
        _linear_add_ln_kernel,
        out_shape=jax.ShapeDtypeStruct((M, N), jnp.float32),
        grid_spec=pltpu.PrefetchScalarGridSpec(
            num_scalar_prefetch=0,
            grid=grid,
            in_specs=[
                pl.BlockSpec((tm, tk), lambda i, k: (i, k)),
                pl.BlockSpec((N, tk), lambda i, k: (0, k)),
                pl.BlockSpec((1, N), lambda i, k: (0, 0)),
                pl.BlockSpec((tm, N), lambda i, k: (i, 0)),
                pl.BlockSpec((1, N), lambda i, k: (0, 0)),
                pl.BlockSpec((1, N), lambda i, k: (0, 0)),
            ],
            out_specs=pl.BlockSpec((tm, N), lambda i, k: (i, 0)),
            scratch_shapes=[pltpu.VMEM((tm, N), jnp.float32)],
        ),
        compiler_params=pltpu.CompilerParams(
            dimension_semantics=("parallel", "arbitrary"),
            vmem_limit_bytes=VMEM_LIMIT,
        ),
    )(x2d.astype(jnp.bfloat16), w, b, res2d, g, be)


def ffn_add_ln(x2d, w1, b1, w2, b2, g, be):
    """LayerNorm(x + relu(x@w1^T+b1)@w2^T + b2), hidden kept in VMEM."""
    # TODO(synk): for very large hidden_dim / embed_dim, tile the FFN reduction
    # dims with accumulators instead of keeping full weight tiles per M-step.
    M, E = x2d.shape
    Hd = w1.shape[0]
    tm = _pick_tile(M, 256, 8)
    grid = (M // tm,)
    return pl.pallas_call(
        _ffn_add_ln_kernel,
        out_shape=jax.ShapeDtypeStruct((M, E), jnp.float32),
        grid_spec=pltpu.PrefetchScalarGridSpec(
            num_scalar_prefetch=0,
            grid=grid,
            in_specs=[
                pl.BlockSpec((tm, E), lambda i: (i, 0)),
                pl.BlockSpec((Hd, E), lambda i: (0, 0)),
                pl.BlockSpec((1, Hd), lambda i: (0, 0)),
                pl.BlockSpec((E, Hd), lambda i: (0, 0)),
                pl.BlockSpec((1, E), lambda i: (0, 0)),
                pl.BlockSpec((1, E), lambda i: (0, 0)),
                pl.BlockSpec((1, E), lambda i: (0, 0)),
            ],
            out_specs=pl.BlockSpec((tm, E), lambda i: (i, 0)),
        ),
        compiler_params=pltpu.CompilerParams(
            dimension_semantics=("parallel",),
            vmem_limit_bytes=VMEM_LIMIT,
        ),
    )(x2d, w1, b1, w2, b2, g, be)


def layernorm(x2d, g, b):
    M, D = x2d.shape
    tm = _pick_tile(M, 512, 8)
    grid = (M // tm,)
    return pl.pallas_call(
        _layernorm_kernel,
        out_shape=jax.ShapeDtypeStruct((M, D), jnp.float32),
        grid_spec=pltpu.PrefetchScalarGridSpec(
            num_scalar_prefetch=0,
            grid=grid,
            in_specs=[
                pl.BlockSpec((tm, D), lambda i: (i, 0)),
                pl.BlockSpec((1, D), lambda i: (0, 0)),
                pl.BlockSpec((1, D), lambda i: (0, 0)),
            ],
            out_specs=pl.BlockSpec((tm, D), lambda i: (i, 0)),
        ),
        compiler_params=pltpu.CompilerParams(
            dimension_semantics=("parallel",),
            vmem_limit_bytes=VMEM_LIMIT,
        ),
    )(x2d, g, b)


def scaled_dot_attention(qh, kh, vh, scale):
    """qh:[B*H,Sq,Dh], kh/vh:[B*H,Sk,Dh] bf16 -> [B*H,Sq,Dh] bf16."""
    BH, Sq, Dh = qh.shape
    Sk = kh.shape[1]
    return pl.pallas_call(
        functools.partial(_attention_kernel, scale=scale),
        out_shape=jax.ShapeDtypeStruct((BH, Sq, Dh), jnp.bfloat16),
        grid_spec=pltpu.PrefetchScalarGridSpec(
            num_scalar_prefetch=0,
            grid=(BH,),
            in_specs=[
                pl.BlockSpec((1, Sq, Dh), lambda i: (i, 0, 0)),
                pl.BlockSpec((1, Sk, Dh), lambda i: (i, 0, 0)),
                pl.BlockSpec((1, Sk, Dh), lambda i: (i, 0, 0)),
            ],
            out_specs=pl.BlockSpec((1, Sq, Dh), lambda i: (i, 0, 0)),
        ),
        compiler_params=pltpu.CompilerParams(
            dimension_semantics=("parallel",),
            vmem_limit_bytes=VMEM_LIMIT,
        ),
    )(qh, kh, vh)


# --------------------------- transformer pieces -----------------------------

def attention_block(q_src, kv_src, p, num_heads, ln_w, ln_b, fuse_qkv):
    """Post-norm attention sublayer: LN(q_src + MHA(q_src, kv_src) @ Wo + bo)."""
    B, Sq, E = q_src.shape
    Sk = kv_src.shape[1]
    H = num_heads
    Dh = E // H

    q_res = q_src.reshape(B * Sq, E)  # f32 residual for the post-norm epilogue

    if fuse_qkv:
        # self-attention: single fused [3E, E] projection
        qkv = linear(q_res, p["in_proj_weight"], p["in_proj_bias"],
                     out_dtype=jnp.bfloat16)                        # [B*Sq, 3E]
        q2d, k2d, v2d = qkv[:, :E], qkv[:, E:2 * E], qkv[:, 2 * E:]
    else:
        # cross-attention: Q from q_src, fused [2E, E] KV projection from kv_src
        kv_flat = kv_src.reshape(B * Sk, E)
        q2d = linear(q_res, p["q_weight"], p["q_bias"], out_dtype=jnp.bfloat16)
        kv = linear(kv_flat, p["kv_weight"], p["kv_bias"],
                    out_dtype=jnp.bfloat16)                         # [B*Sk, 2E]
        k2d, v2d = kv[:, :E], kv[:, E:]

    def to_heads(t2d, S_t):
        return (t2d.reshape(B, S_t, H, Dh)
                   .transpose(0, 2, 1, 3)
                   .reshape(B * H, S_t, Dh))

    attn = scaled_dot_attention(to_heads(q2d, Sq), to_heads(k2d, Sk),
                                to_heads(v2d, Sk), 1.0 / math.sqrt(Dh))
    attn2d = (attn.reshape(B, H, Sq, Dh)
                  .transpose(0, 2, 1, 3)
                  .reshape(B * Sq, E))

    # fused: out_proj matmul + residual add + LayerNorm
    out2d = linear_add_ln(attn2d, p["out_proj_weight"], p["out_proj_bias"],
                          q_res, ln_w, ln_b)
    return out2d.reshape(B, Sq, E)


def encoder_layer(x, p, num_heads):
    B, S, E = x.shape
    x2 = attention_block(x, x, p["self_attn"], num_heads,
                         p["norm1_w"], p["norm1_b"], fuse_qkv=True)
    y = ffn_add_ln(x2.reshape(B * S, E), p["lin1_w"], p["lin1_b"],
                   p["lin2_w"], p["lin2_b"], p["norm2_w"], p["norm2_b"])
    return y.reshape(B, S, E)


def decoder_layer(x, memory, p, num_heads):
    B, S, E = x.shape
    x2 = attention_block(x, x, p["self_attn"], num_heads,
                         p["norm1_w"], p["norm1_b"], fuse_qkv=True)
    x3 = attention_block(x2, memory, p["cross_attn"], num_heads,
                         p["norm2_w"], p["norm2_b"], fuse_qkv=False)
    y = ffn_add_ln(x3.reshape(B * S, E), p["lin1_w"], p["lin1_b"],
                   p["lin2_w"], p["lin2_b"], p["norm3_w"], p["norm3_b"])
    return y.reshape(B, S, E)


def llama_model2_forward(params, x, num_heads):
    # x: [B, S] int32 token ids
    B, S = x.shape
    E = params["embedding"].shape[1]

    # embedding gather (plain JAX glue)
    emb = jnp.take(params["embedding"], x, axis=0)  # [B, S, E] f32

    # encoder (src = embedded)
    mem = emb
    for lp in params["enc_layers"]:
        mem = encoder_layer(mem, lp, num_heads)
    mem = layernorm(mem.reshape(-1, E),
                    params["enc_norm_w"], params["enc_norm_b"]).reshape(B, S, E)

    # decoder (tgt = embedded, memory = encoder output)
    out = emb
    for lp in params["dec_layers"]:
        out = decoder_layer(out, mem, lp, num_heads)
    out2d = layernorm(out.reshape(-1, E),
                      params["dec_norm_w"], params["dec_norm_b"])

    # final vocab projection
    logits = linear(out2d, params["fc_w"], params["fc_b"])
    return logits.reshape(B, S, -1)


# ----------------------------- parameter init -------------------------------

def init_params(key, vocab_size, embed_dim, hidden_dim, num_layers, num_heads):
    del num_heads  # shapes don't depend on it
    keys = iter(jax.random.split(key, 4096))
    E, Hd = embed_dim, hidden_dim

    def w(shape, scale=0.02, dtype=jnp.bfloat16):
        # matmul weights stored bf16 (MXU operands); accumulation stays f32
        return (scale * jax.random.normal(next(keys), shape)).astype(dtype)

    def zeros(shape):
        return jnp.zeros(shape, jnp.float32)

    def ones(shape):
        return jnp.ones(shape, jnp.float32)

    def self_attn_p():
        return dict(
            in_proj_weight=w((3 * E, E)),
            in_proj_bias=zeros((1, 3 * E)),
            out_proj_weight=w((E, E)),
            out_proj_bias=zeros((1, E)),
        )

    def cross_attn_p():
        # in_proj split once at init into Q and fused-KV (different inputs)
        return dict(
            q_weight=w((E, E)),
            q_bias=zeros((1, E)),
            kv_weight=w((2 * E, E)),
            kv_bias=zeros((1, 2 * E)),
            out_proj_weight=w((E, E)),
            out_proj_bias=zeros((1, E)),
        )

    def enc_layer_p():
        return dict(
            self_attn=self_attn_p(),
            lin1_w=w((Hd, E)), lin1_b=zeros((1, Hd)),
            lin2_w=w((E, Hd)), lin2_b=zeros((1, E)),
            norm1_w=ones((1, E)), norm1_b=zeros((1, E)),
            norm2_w=ones((1, E)), norm2_b=zeros((1, E)),
        )

    def dec_layer_p():
        d = enc_layer_p()
        d.update(
            cross_attn=cross_attn_p(),
            norm3_w=ones((1, E)),
            norm3_b=zeros((1, E)),
        )
        return d

    return dict(
        embedding=w((vocab_size, E), scale=1.0, dtype=jnp.float32),
        enc_layers=[enc_layer_p() for _ in range(num_layers)],
        dec_layers=[dec_layer_p() for _ in range(num_layers)],
        enc_norm_w=ones((1, E)), enc_norm_b=zeros((1, E)),
        dec_norm_w=ones((1, E)), dec_norm_b=zeros((1, E)),
        fc_w=w((vocab_size, E)),
        fc_b=zeros((1, vocab_size)),
    )


# ---------------------------------- main -------------------------------------

if __name__ == "__main__":
    # small but lane-dense config (E / hidden / vocab multiples of 128)
    vocab_size = 256
    embed_dim = 128
    hidden_dim = 256
    num_layers = 2
    num_heads = 4
    dropout = 0.0  # treated as identity in this inference kernel

    batch, seq = 2, 16

    key = jax.random.PRNGKey(0)
    k_params, k_tokens = jax.random.split(key)

    params = init_params(k_params, vocab_size, embed_dim, hidden_dim,
                         num_layers, num_heads)
    tokens = jax.random.randint(k_tokens, (batch, seq), 0, vocab_size,
                                dtype=jnp.int32)

    fwd = jax.jit(functools.partial(llama_model2_forward, num_heads=num_heads))
    logits = fwd(params, tokens)
    jax.block_until_ready(logits)

    assert logits.shape == (batch, seq, vocab_size)
    assert logits.dtype == jnp.float32
    print("KERNEL_OK")
</pallas_src>

<mosaic_0001>
module attributes {stable_mosaic.version = 11 : i64} {
  func.func @_linear_kernel(%arg0: i32, %arg1: i32, %arg2: i32, %arg3: memref<32x128xbf16, #tpu.memory_space<vmem>>, %arg4: memref<128x128xbf16, #tpu.memory_space<vmem>>, %arg5: memref<1x128xf32, #tpu.memory_space<vmem>>, %arg6: memref<32x128xbf16, #tpu.memory_space<vmem>>, %arg7: memref<32x128xf32, #tpu.memory_space<vmem>>) attributes {dimension_semantics = [#tpu.dimension_semantics<parallel>, #tpu.dimension_semantics<parallel>, #tpu.dimension_semantics<arbitrary>], iteration_bounds = array<i64: 1, 3, 1>, scalar_prefetch = 0 : i64, scratch_operands = 1 : i64, tpu.core_type = #tpu.core_type<tc>, window_params = [{transform_indices = @transform_0, window_bounds = array<i64: 32, 128>}, {transform_indices = @transform_1, window_bounds = array<i64: 128, 128>}, {transform_indices = @transform_2, window_bounds = array<i64: 1, 128>}, {transform_indices = @transform_3, window_bounds = array<i64: 32, 128>}]} {
    %c0_i32 = arith.constant 0 : i32
    %0 = arith.cmpi eq, %arg2, %c0_i32 : i32
    %1 = arith.extui %0 : i1 to i32
    %c0_i32_0 = arith.constant 0 : i32
    %2 = arith.cmpi ne, %1, %c0_i32_0 : i32
    scf.if %2 {
      %cst_10 = arith.constant 0.000000e+00 : f32
      %12 = vector.broadcast %cst_10 : f32 to vector<32x128xf32>
      %c0_11 = arith.constant 0 : index
      %c0_12 = arith.constant 0 : index
      %13 = vector.load %arg7[%c0_11, %c0_12] : memref<32x128xf32, #tpu.memory_space<vmem>>, vector<32x128xf32>
      tpu.vector_store %arg7[%c0_11, %c0_12], %12 {strides = array<i32>} : memref<32x128xf32, #tpu.memory_space<vmem>>, vector<32x128xf32>,
    } else {
    }
    %c0 = arith.constant 0 : index
    %c0_1 = arith.constant 0 : index
    %3 = vector.load %arg7[%c0, %c0_1] : memref<32x128xf32, #tpu.memory_space<vmem>>, vector<32x128xf32>
    %c0_2 = arith.constant 0 : index
    %c0_3 = arith.constant 0 : index
    %4 = vector.load %arg3[%c0_2, %c0_3] : memref<32x128xbf16, #tpu.memory_space<vmem>>, vector<32x128xbf16>
    %c0_4 = arith.constant 0 : index
    %c0_5 = arith.constant 0 : index
    %5 = vector.load %arg4[%c0_4, %c0_5] : memref<128x128xbf16, #tpu.memory_space<vmem>>, vector<128x128xbf16>
    %cst = arith.constant dense<0.000000e+00> : vector<32x128xf32>
    %6 = tpu.matmul %4, %5, %cst {dimension_numbers = #tpu.dot_dimension_numbers<[1], [1], [0], [0], [0, 0, 1, 0], [], []>} : vector<32x128xbf16>, vector<128x128xbf16>, vector<32x128xf32> -> vector<32x128xf32>
    %7 = arith.addf %3, %6 : vector<32x128xf32>
    %c0_6 = arith.constant 0 : index
    %c0_7 = arith.constant 0 : index
    %8 = vector.load %arg7[%c0_6, %c0_7] : memref<32x128xf32, #tpu.memory_space<vmem>>, vector<32x128xf32>
    tpu.vector_store %arg7[%c0_6, %c0_7], %7 {strides = array<i32>} : memref<32x128xf32, #tpu.memory_space<vmem>>, vector<32x128xf32>,
    %c0_i32_8 = arith.constant 0 : i32
    %9 = arith.cmpi eq, %arg2, %c0_i32_8 : i32
    %10 = arith.extui %9 : i1 to i32
    %c0_i32_9 = arith.constant 0 : i32
    %11 = arith.cmpi ne, %10, %c0_i32_9 : i32
    scf.if %11 {
      %c0_10 = arith.constant 0 : index
      %c0_11 = arith.constant 0 : index
      %12 = vector.load %arg7[%c0_10, %c0_11] : memref<32x128xf32, #tpu.memory_space<vmem>>, vector<32x128xf32>
      %c0_12 = arith.constant 0 : index
      %c0_13 = arith.constant 0 : index
      %13 = vector.load %arg5[%c0_12, %c0_13] : memref<1x128xf32, #tpu.memory_space<vmem>>, vector<1x128xf32>
      %14 = vector.broadcast %13 : vector<1x128xf32> to vector<32x128xf32>
      %15 = arith.addf %12, %14 : vector<32x128xf32>
      %16 = arith.truncf %15 : vector<32x128xf32> to vector<32x128xbf16>
      %c0_14 = arith.constant 0 : index
      %c0_15 = arith.constant 0 : index
      %17 = vector.load %arg6[%c0_14, %c0_15] : memref<32x128xbf16, #tpu.memory_space<vmem>>, vector<32x128xbf16>
      tpu.vector_store %arg6[%c0_14, %c0_15], %16 {strides = array<i32>} : memref<32x128xbf16, #tpu.memory_space<vmem>>, vector<32x128xbf16>,
    } else {
    }
    return
  }
  func.func @transform_0(%arg0: i32, %arg1: i32, %arg2: i32) -> (i32, i32) {
    %c0_i32 = arith.constant 0 : i32
    return %arg0, %arg2 : i32, i32
  }
  func.func @transform_1(%arg0: i32, %arg1: i32, %arg2: i32) -> (i32, i32) {
    %c0_i32 = arith.constant 0 : i32
    return %arg1, %arg2 : i32, i32
  }
  func.func @transform_2(%arg0: i32, %arg1: i32, %arg2: i32) -> (i32, i32) {
    %c0_i32 = arith.constant 0 : i32
    %c0_i32_0 = arith.constant 0 : i32
    return %c0_i32, %arg1 : i32, i32
  }
  func.func @transform_3(%arg0: i32, %arg1: i32, %arg2: i32) -> (i32, i32) {
    %c0_i32 = arith.constant 0 : i32
    return %arg0, %arg1 : i32, i32
  }
}

module attributes {stable_mosaic.version = 11 : i64} {
  func.func @_attention_kernel(%arg0: i32, %arg1: memref<1x16x32xbf16, #tpu.memory_space<vmem>>, %arg2: memref<1x16x32xbf16, #tpu.memory_space<vmem>>, %arg3: memref<1x16x32xbf16, #tpu.memory_space<vmem>>, %arg4: memref<1x16x32xbf16, #tpu.memory_space<vmem>>) attributes {dimension_semantics = [#tpu.dimension_semantics<parallel>], iteration_bounds = array<i64: 8>, scalar_prefetch = 0 : i64, scratch_operands = 0 : i64, tpu.core_type = #tpu.core_type<tc>, window_params = [{transform_indices = @transform_0, window_bounds = array<i64: 1, 16, 32>}, {transform_indices = @transform_1, window_bounds = array<i64: 1, 16, 32>}, {transform_indices = @transform_2, window_bounds = array<i64: 1, 16, 32>}, {transform_indices = @transform_3, window_bounds = array<i64: 1, 16, 32>}]} {
    %c0 = arith.constant 0 : index
    %c0_0 = arith.constant 0 : index
    %c0_1 = arith.constant 0 : index
    %0 = vector.load %arg1[%c0, %c0_0, %c0_1] : memref<1x16x32xbf16, #tpu.memory_space<vmem>>, vector<1x16x32xbf16>
    %1 = vector.shape_cast %0 : vector<1x16x32xbf16> to vector<16x32xbf16>
    %c0_2 = arith.constant 0 : index
    %c0_3 = arith.constant 0 : index
    %c0_4 = arith.constant 0 : index
    %2 = vector.load %arg2[%c0_2, %c0_3, %c0_4] : memref<1x16x32xbf16, #tpu.memory_space<vmem>>, vector<1x16x32xbf16>
    %3 = vector.shape_cast %2 : vector<1x16x32xbf16> to vector<16x32xbf16>
    %c0_5 = arith.constant 0 : index
    %c0_6 = arith.constant 0 : index
    %c0_7 = arith.constant 0 : index
    %4 = vector.load %arg3[%c0_5, %c0_6, %c0_7] : memref<1x16x32xbf16, #tpu.memory_space<vmem>>, vector<1x16x32xbf16>
    %5 = vector.shape_cast %4 : vector<1x16x32xbf16> to vector<16x32xbf16>
    %cst = arith.constant dense<0.000000e+00> : vector<16x16xf32>
    %6 = tpu.matmul %1, %3, %cst {dimension_numbers = #tpu.dot_dimension_numbers<[1], [1], [0], [0], [0, 0, 1, 0], [], []>} : vector<16x32xbf16>, vector<16x32xbf16>, vector<16x16xf32> -> vector<16x16xf32>
    %cst_8 = arith.constant 0.176776692 : f32
    %7 = vector.broadcast %cst_8 : f32 to vector<16x16xf32>
    %8 = arith.mulf %6, %7 : vector<16x16xf32>
    %cst_9 = arith.constant dense<0xFF800000> : vector<16xf32>
    %9 = vector.multi_reduction <maximumf>, %8, %cst_9 [1] : vector<16x16xf32> to vector<16xf32>
    %10 = vector.shape_cast %9 : vector<16xf32> to vector<16x1xf32>
    %11 = vector.broadcast %10 : vector<16x1xf32> to vector<16x16xf32>
    %12 = arith.subf %8, %11 : vector<16x16xf32>
    %13 = math.exp %12 : vector<16x16xf32>
    %cst_10 = arith.constant dense<0.000000e+00> : vector<16xf32>
    %14 = vector.multi_reduction <add>, %13, %cst_10 [1] : vector<16x16xf32> to vector<16xf32>
    %15 = vector.shape_cast %14 : vector<16xf32> to vector<16x1xf32>
    %16 = tpu.reciprocal %15 {approx = true} : vector<16x1xf32> -> vector<16x1xf32>
    %17 = vector.broadcast %16 : vector<16x1xf32> to vector<16x16xf32>
    %18 = arith.mulf %13, %17 : vector<16x16xf32>
    %19 = arith.truncf %18 : vector<16x16xf32> to vector<16x16xbf16>
    %cst_11 = arith.constant dense<0.000000e+00> : vector<16x32xf32>
    %20 = tpu.matmul %19, %5, %cst_11 {dimension_numbers = #tpu.dot_dimension_numbers<[1], [0], [0], [1], [0, 0, 1, 1], [], []>} : vector<16x16xbf16>, vector<16x32xbf16>, vector<16x32xf32> -> vector<16x32xf32>
    %21 = arith.truncf %20 : vector<16x32xf32> to vector<16x32xbf16>
    %c0_12 = arith.constant 0 : index
    %c0_13 = arith.constant 0 : index
    %c0_14 = arith.constant 0 : index
    %22 = vector.load %arg4[%c0_12, %c0_13, %c0_14] : memref<1x16x32xbf16, #tpu.memory_space<vmem>>, vector<1x16x32xbf16>
    %23 = vector.shape_cast %22 : vector<1x16x32xbf16> to vector<16x32xbf16>
    %24 = vector.shape_cast %21 : vector<16x32xbf16> to vector<1x16x32xbf16>
    tpu.vector_store %arg4[%c0_12, %c0_13, %c0_14], %24 {strides = array<i32>} : memref<1x16x32xbf16, #tpu.memory_space<vmem>>, vector<1x16x32xbf16>,
    return
  }
  func.func @transform_0(%arg0: i32) -> (i32, i32, i32) {
    %c0_i32 = arith.constant 0 : i32
    %c0_i32_0 = arith.constant 0 : i32
    %c0_i32_1 = arith.constant 0 : i32
    return %arg0, %c0_i32, %c0_i32_0 : i32, i32, i32
  }
  func.func @transform_1(%arg0: i32) -> (i32, i32, i32) {
    %c0_i32 = arith.constant 0 : i32
    %c0_i32_0 = arith.constant 0 : i32
    %c0_i32_1 = arith.constant 0 : i32
    return %arg0, %c0_i32, %c0_i32_0 : i32, i32, i32
  }
  func.func @transform_2(%arg0: i32) -> (i32, i32, i32) {
    %c0_i32 = arith.constant 0 : i32
    %c0_i32_0 = arith.constant 0 : i32
    %c0_i32_1 = arith.constant 0 : i32
    return %arg0, %c0_i32, %c0_i32_0 : i32, i32, i32
  }
  func.func @transform_3(%arg0: i32) -> (i32, i32, i32) {
    %c0_i32 = arith.constant 0 : i32
    %c0_i32_0 = arith.constant 0 : i32
    %c0_i32_1 = arith.constant 0 : i32
    return %arg0, %c0_i32, %c0_i32_0 : i32, i32, i32
  }
}

module attributes {stable_mosaic.version = 11 : i64} {
  func.func @_linear_add_ln_kernel(%arg0: i32, %arg1: i32, %arg2: memref<32x128xbf16, #tpu.memory_space<vmem>>, %arg3: memref<128x128xbf16, #tpu.memory_space<vmem>>, %arg4: memref<1x128xf32, #tpu.memory_space<vmem>>, %arg5: memref<32x128xf32, #tpu.memory_space<vmem>>, %arg6: memref<1x128xf32, #tpu.memory_space<vmem>>, %arg7: memref<1x128xf32, #tpu.memory_space<vmem>>, %arg8: memref<32x128xf32, #tpu.memory_space<vmem>>, %arg9: memref<32x128xf32, #tpu.memory_space<vmem>>) attributes {dimension_semantics = [#tpu.dimension_semantics<parallel>, #tpu.dimension_semantics<arbitrary>], iteration_bounds = array<i64: 1, 1>, scalar_prefetch = 0 : i64, scratch_operands = 1 : i64, tpu.core_type = #tpu.core_type<tc>, window_params = [{transform_indices = @transform_0, window_bounds = array<i64: 32, 128>}, {transform_indices = @transform_1, window_bounds = array<i64: 128, 128>}, {pipeline_mode = #tpu.pipeline_mode<synchronous>, transform_indices = @transform_2, window_bounds = array<i64: 1, 128>}, {transform_indices = @transform_3, window_bounds = array<i64: 32, 128>}, {pipeline_mode = #tpu.pipeline_mode<synchronous>, transform_indices = @transform_4, window_bounds = array<i64: 1, 128>}, {pipeline_mode = #tpu.pipeline_mode<synchronous>, transform_indices = @transform_5, window_bounds = array<i64: 1, 128>}, {transform_indices = @transform_6, window_bounds = array<i64: 32, 128>}]} {
    %c0_i32 = arith.constant 0 : i32
    %0 = arith.cmpi eq, %arg1, %c0_i32 : i32
    %1 = arith.extui %0 : i1 to i32
    %c0_i32_0 = arith.constant 0 : i32
    %2 = arith.cmpi ne, %1, %c0_i32_0 : i32
    scf.if %2 {
      %cst_10 = arith.constant 0.000000e+00 : f32
      %12 = vector.broadcast %cst_10 : f32 to vector<32x128xf32>
      %c0_11 = arith.constant 0 : index
      %c0_12 = arith.constant 0 : index
      %13 = vector.load %arg9[%c0_11, %c0_12] : memref<32x128xf32, #tpu.memory_space<vmem>>, vector<32x128xf32>
      tpu.vector_store %arg9[%c0_11, %c0_12], %12 {strides = array<i32>} : memref<32x128xf32, #tpu.memory_space<vmem>>, vector<32x128xf32>,
    } else {
    }
    %c0 = arith.constant 0 : index
    %c0_1 = arith.constant 0 : index
    %3 = vector.load %arg9[%c0, %c0_1] : memref<32x128xf32, #tpu.memory_space<vmem>>, vector<32x128xf32>
    %c0_2 = arith.constant 0 : index
    %c0_3 = arith.constant 0 : index
    %4 = vector.load %arg2[%c0_2, %c0_3] : memref<32x128xbf16, #tpu.memory_space<vmem>>, vector<32x128xbf16>
    %c0_4 = arith.constant 0 : index
    %c0_5 = arith.constant 0 : index
    %5 = vector.load %arg3[%c0_4, %c0_5] : memref<128x128xbf16, #tpu.memory_space<vmem>>, vector<128x128xbf16>
    %cst = arith.constant dense<0.000000e+00> : vector<32x128xf32>
    %6 = tpu.matmul %4, %5, %cst {dimension_numbers = #tpu.dot_dimension_numbers<[1], [1], [0], [0], [0, 0, 1, 0], [], []>} : vector<32x128xbf16>, vector<128x128xbf16>, vector<32x128xf32> -> vector<32x128xf32>
    %7 = arith.addf %3, %6 : vector<32x128xf32>
    %c0_6 = arith.constant 0 : index
    %c0_7 = arith.constant 0 : index
    %8 = vector.load %arg9[%c0_6, %c0_7] : memref<32x128xf32, #tpu.memory_space<vmem>>, vector<32x128xf32>
    tpu.vector_store %arg9[%c0_6, %c0_7], %7 {strides = array<i32>} : memref<32x128xf32, #tpu.memory_space<vmem>>, vector<32x128xf32>,
    %c0_i32_8 = arith.constant 0 : i32
    %9 = arith.cmpi eq, %arg1, %c0_i32_8 : i32
    %10 = arith.extui %9 : i1 to i32
    %c0_i32_9 = arith.constant 0 : i32
    %11 = arith.cmpi ne, %10, %c0_i32_9 : i32
    scf.if %11 {
      %c0_10 = arith.constant 0 : index
      %c0_11 = arith.constant 0 : index
      %12 = vector.load %arg9[%c0_10, %c0_11] : memref<32x128xf32, #tpu.memory_space<vmem>>, vector<32x128xf32>
      %c0_12 = arith.constant 0 : index
      %c0_13 = arith.constant 0 : index
      %13 = vector.load %arg4[%c0_12, %c0_13] : memref<1x128xf32, #tpu.memory_space<vmem>>, vector<1x128xf32>
      %14 = vector.broadcast %13 : vector<1x128xf32> to vector<32x128xf32>
      %15 = arith.addf %12, %14 : vector<32x128xf32>
      %c0_14 = arith.constant 0 : index
      %c0_15 = arith.constant 0 : index
      %16 = vector.load %arg5[%c0_14, %c0_15] : memref<32x128xf32, #tpu.memory_space<vmem>>, vector<32x128xf32>
      %17 = arith.addf %15, %16 : vector<32x128xf32>
      %c0_16 = arith.constant 0 : index
      %c0_17 = arith.constant 0 : index
      %18 = vector.load %arg6[%c0_16, %c0_17] : memref<1x128xf32, #tpu.memory_space<vmem>>, vector<1x128xf32>
      %c0_18 = arith.constant 0 : index
      %c0_19 = arith.constant 0 : index
      %19 = vector.load %arg7[%c0_18, %c0_19] : memref<1x128xf32, #tpu.memory_space<vmem>>, vector<1x128xf32>
      %cst_20 = arith.constant dense<0.000000e+00> : vector<32xf32>
      %20 = vector.multi_reduction <add>, %17, %cst_20 [1] : vector<32x128xf32> to vector<32xf32>
      %21 = vector.shape_cast %20 : vector<32xf32> to vector<32x1xf32>
      %cst_21 = arith.constant 1.280000e+02 : f32
      %22 = vector.broadcast %cst_21 : f32 to vector<32x1xf32>
      %23 = arith.divf %21, %22 : vector<32x1xf32>
      %24 = vector.broadcast %23 : vector<32x1xf32> to vector<32x128xf32>
      %25 = arith.subf %17, %24 : vector<32x128xf32>
      %26 = arith.mulf %25, %25 : vector<32x128xf32>
      %cst_22 = arith.constant dense<0.000000e+00> : vector<32xf32>
      %27 = vector.multi_reduction <add>, %26, %cst_22 [1] : vector<32x128xf32> to vector<32xf32>
      %28 = vector.shape_cast %27 : vector<32xf32> to vector<32x1xf32>
      %cst_23 = arith.constant 1.280000e+02 : f32
      %29 = vector.broadcast %cst_23 : f32 to vector<32x1xf32>
      %30 = arith.divf %28, %29 : vector<32x1xf32>
      %cst_24 = arith.constant 9.99999974E-6 : f32
      %31 = vector.broadcast %cst_24 : f32 to vector<32x1xf32>
      %32 = arith.addf %30, %31 : vector<32x1xf32>
      %33 = math.rsqrt %32 : vector<32x1xf32>
      %34 = vector.broadcast %23 : vector<32x1xf32> to vector<32x128xf32>
      %35 = arith.subf %17, %34 : vector<32x128xf32>
      %36 = vector.broadcast %33 : vector<32x1xf32> to vector<32x128xf32>
      %37 = arith.mulf %35, %36 : vector<32x128xf32>
      %38 = vector.broadcast %18 : vector<1x128xf32> to vector<32x128xf32>
      %39 = arith.mulf %37, %38 : vector<32x128xf32>
      %40 = vector.broadcast %19 : vector<1x128xf32> to vector<32x128xf32>
      %41 = arith.addf %39, %40 : vector<32x128xf32>
      %c0_25 = arith.constant 0 : index
      %c0_26 = arith.constant 0 : index
      %42 = vector.load %arg8[%c0_25, %c0_26] : memref<32x128xf32, #tpu.memory_space<vmem>>, vector<32x128xf32>
      tpu.vector_store %arg8[%c0_25, %c0_26], %41 {strides = array<i32>} : memref<32x128xf32, #tpu.memory_space<vmem>>, vector<32x128xf32>,
    } else {
    }
    return
  }
  func.func @transform_0(%arg0: i32, %arg1: i32) -> (i32, i32) {
    %c0_i32 = arith.constant 0 : i32
    return %arg0, %arg1 : i32, i32
  }
  func.func @transform_1(%arg0: i32, %arg1: i32) -> (i32, i32) {
    %c0_i32 = arith.constant 0 : i32
    %c0_i32_0 = arith.constant 0 : i32
    return %c0_i32, %arg1 : i32, i32
  }
  func.func @transform_2(%arg0: i32, %arg1: i32) -> (i32, i32) {
    %c0_i32 = arith.constant 0 : i32
    %c0_i32_0 = arith.constant 0 : i32
    %c0_i32_1 = arith.constant 0 : i32
    return %c0_i32, %c0_i32_0 : i32, i32
  }
  func.func @transform_3(%arg0: i32, %arg1: i32) -> (i32, i32) {
    %c0_i32 = arith.constant 0 : i32
    %c0_i32_0 = arith.constant 0 : i32
    return %arg0, %c0_i32 : i32, i32
  }
  func.func @transform_4(%arg0: i32, %arg1: i32) -> (i32, i32) {
    %c0_i32 = arith.constant 0 : i32
    %c0_i32_0 = arith.constant 0 : i32
    %c0_i32_1 = arith.constant 0 : i32
    return %c0_i32, %c0_i32_0 : i32, i32
  }
  func.func @transform_5(%arg0: i32, %arg1: i32) -> (i32, i32) {
    %c0_i32 = arith.constant 0 : i32
    %c0_i32_0 = arith.constant 0 : i32
    %c0_i32_1 = arith.constant 0 : i32
    return %c0_i32, %c0_i32_0 : i32, i32
  }
  func.func @transform_6(%arg0: i32, %arg1: i32) -> (i32, i32) {
    %c0_i32 = arith.constant 0 : i32
    %c0_i32_0 = arith.constant 0 : i32
    return %arg0, %c0_i32 : i32, i32
  }
}

module attributes {stable_mosaic.version = 11 : i64} {
  func.func @_linear_kernel(%arg0: i32, %arg1: i32, %arg2: i32, %arg3: memref<32x128xbf16, #tpu.memory_space<vmem>>, %arg4: memref<128x128xbf16, #tpu.memory_space<vmem>>, %arg5: memref<1x128xf32, #tpu.memory_space<vmem>>, %arg6: memref<32x128xbf16, #tpu.memory_space<vmem>>, %arg7: memref<32x128xf32, #tpu.memory_space<vmem>>) attributes {dimension_semantics = [#tpu.dimension_semantics<parallel>, #tpu.dimension_semantics<parallel>, #tpu.dimension_semantics<arbitrary>], iteration_bounds = array<i64: 1, 1, 1>, scalar_prefetch = 0 : i64, scratch_operands = 1 : i64, tpu.core_type = #tpu.core_type<tc>, window_params = [{transform_indices = @transform_0, window_bounds = array<i64: 32, 128>}, {transform_indices = @transform_1, window_bounds = array<i64: 128, 128>}, {transform_indices = @transform_2, window_bounds = array<i64: 1, 128>}, {transform_indices = @transform_3, window_bounds = array<i64: 32, 128>}]} {
    %c0_i32 = arith.constant 0 : i32
    %0 = arith.cmpi eq, %arg2, %c0_i32 : i32
    %1 = arith.extui %0 : i1 to i32
    %c0_i32_0 = arith.constant 0 : i32
    %2 = arith.cmpi ne, %1, %c0_i32_0 : i32
    scf.if %2 {
      %cst_10 = arith.constant 0.000000e+00 : f32
      %12 = vector.broadcast %cst_10 : f32 to vector<32x128xf32>
      %c0_11 = arith.constant 0 : index
      %c0_12 = arith.constant 0 : index
      %13 = vector.load %arg7[%c0_11, %c0_12] : memref<32x128xf32, #tpu.memory_space<vmem>>, vector<32x128xf32>
      tpu.vector_store %arg7[%c0_11, %c0_12], %12 {strides = array<i32>} : memref<32x128xf32, #tpu.memory_space<vmem>>, vector<32x128xf32>,
    } else {
    }
    %c0 = arith.constant 0 : index
    %c0_1 = arith.constant 0 : index
    %3 = vector.load %arg7[%c0, %c0_1] : memref<32x128xf32, #tpu.memory_space<vmem>>, vector<32x128xf32>
    %c0_2 = arith.constant 0 : index
    %c0_3 = arith.constant 0 : index
    %4 = vector.load %arg3[%c0_2, %c0_3] : memref<32x128xbf16, #tpu.memory_space<vmem>>, vector<32x128xbf16>
    %c0_4 = arith.constant 0 : index
    %c0_5 = arith.constant 0 : index
    %5 = vector.load %arg4[%c0_4, %c0_5] : memref<128x128xbf16, #tpu.memory_space<vmem>>, vector<128x128xbf16>
    %cst = arith.constant dense<0.000000e+00> : vector<32x128xf32>
    %6 = tpu.matmul %4, %5, %cst {dimension_numbers = #tpu.dot_dimension_numbers<[1], [1], [0], [0], [0, 0, 1, 0], [], []>} : vector<32x128xbf16>, vector<128x128xbf16>, vector<32x128xf32> -> vector<32x128xf32>
    %7 = arith.addf %3, %6 : vector<32x128xf32>
    %c0_6 = arith.constant 0 : index
    %c0_7 = arith.constant 0 : index
    %8 = vector.load %arg7[%c0_6, %c0_7] : memref<32x128xf32, #tpu.memory_space<vmem>>, vector<32x128xf32>
    tpu.vector_store %arg7[%c0_6, %c0_7], %7 {strides = array<i32>} : memref<32x128xf32, #tpu.memory_space<vmem>>, vector<32x128xf32>,
    %c0_i32_8 = arith.constant 0 : i32
    %9 = arith.cmpi eq, %arg2, %c0_i32_8 : i32
    %10 = arith.extui %9 : i1 to i32
    %c0_i32_9 = arith.constant 0 : i32
    %11 = arith.cmpi ne, %10, %c0_i32_9 : i32
    scf.if %11 {
      %c0_10 = arith.constant 0 : index
      %c0_11 = arith.constant 0 : index
      %12 = vector.load %arg7[%c0_10, %c0_11] : memref<32x128xf32, #tpu.memory_space<vmem>>, vector<32x128xf32>
      %c0_12 = arith.constant 0 : index
      %c0_13 = arith.constant 0 : index
      %13 = vector.load %arg5[%c0_12, %c0_13] : memref<1x128xf32, #tpu.memory_space<vmem>>, vector<1x128xf32>
      %14 = vector.broadcast %13 : vector<1x128xf32> to vector<32x128xf32>
      %15 = arith.addf %12, %14 : vector<32x128xf32>
      %16 = arith.truncf %15 : vector<32x128xf32> to vector<32x128xbf16>
      %c0_14 = arith.constant 0 : index
      %c0_15 = arith.constant 0 : index
      %17 = vector.load %arg6[%c0_14, %c0_15] : memref<32x128xbf16, #tpu.memory_space<vmem>>, vector<32x128xbf16>
      tpu.vector_store %arg6[%c0_14, %c0_15], %16 {strides = array<i32>} : memref<32x128xbf16, #tpu.memory_space<vmem>>, vector<32x128xbf16>,
    } else {
    }
    return
  }
  func.func @transform_0(%arg0: i32, %arg1: i32, %arg2: i32) -> (i32, i32) {
    %c0_i32 = arith.constant 0 : i32
    return %arg0, %arg2 : i32, i32
  }
  func.func @transform_1(%arg0: i32, %arg1: i32, %arg2: i32) -> (i32, i32) {
    %c0_i32 = arith.constant 0 : i32
    return %arg1, %arg2 : i32, i32
  }
  func.func @transform_2(%arg0: i32, %arg1: i32, %arg2: i32) -> (i32, i32) {
    %c0_i32 = arith.constant 0 : i32
    %c0_i32_0 = arith.constant 0 : i32
    return %c0_i32, %arg1 : i32, i32
  }
  func.func @transform_3(%arg0: i32, %arg1: i32, %arg2: i32) -> (i32, i32) {
    %c0_i32 = arith.constant 0 : i32
    return %arg0, %arg1 : i32, i32
  }
}

module attributes {stable_mosaic.version = 11 : i64} {
  func.func @_layernorm_kernel(%arg0: i32, %arg1: memref<32x128xf32, #tpu.memory_space<vmem>>, %arg2: memref<1x128xf32, #tpu.memory_space<vmem>>, %arg3: memref<1x128xf32, #tpu.memory_space<vmem>>, %arg4: memref<32x128xf32, #tpu.memory_space<vmem>>) attributes {dimension_semantics = [#tpu.dimension_semantics<parallel>], iteration_bounds = array<i64: 1>, scalar_prefetch = 0 : i64, scratch_operands = 0 : i64, tpu.core_type = #tpu.core_type<tc>, window_params = [{transform_indices = @transform_0, window_bounds = array<i64: 32, 128>}, {pipeline_mode = #tpu.pipeline_mode<synchronous>, transform_indices = @transform_1, window_bounds = array<i64: 1, 128>}, {pipeline_mode = #tpu.pipeline_mode<synchronous>, transform_indices = @transform_2, window_bounds = array<i64: 1, 128>}, {transform_indices = @transform_3, window_bounds = array<i64: 32, 128>}]} {
    %c0 = arith.constant 0 : index
    %c0_0 = arith.constant 0 : index
    %0 = vector.load %arg1[%c0, %c0_0] : memref<32x128xf32, #tpu.memory_space<vmem>>, vector<32x128xf32>
    %c0_1 = arith.constant 0 : index
    %c0_2 = arith.constant 0 : index
    %1 = vector.load %arg2[%c0_1, %c0_2] : memref<1x128xf32, #tpu.memory_space<vmem>>, vector<1x128xf32>
    %c0_3 = arith.constant 0 : index
    %c0_4 = arith.constant 0 : index
    %2 = vector.load %arg3[%c0_3, %c0_4] : memref<1x128xf32, #tpu.memory_space<vmem>>, vector<1x128xf32>
    %cst = arith.constant dense<0.000000e+00> : vector<32xf32>
    %3 = vector.multi_reduction <add>, %0, %cst [1] : vector<32x128xf32> to vector<32xf32>
    %4 = vector.shape_cast %3 : vector<32xf32> to vector<32x1xf32>
    %cst_5 = arith.constant 1.280000e+02 : f32
    %5 = vector.broadcast %cst_5 : f32 to vector<32x1xf32>
    %6 = arith.divf %4, %5 : vector<32x1xf32>
    %7 = vector.broadcast %6 : vector<32x1xf32> to vector<32x128xf32>
    %8 = arith.subf %0, %7 : vector<32x128xf32>
    %9 = arith.mulf %8, %8 : vector<32x128xf32>
    %cst_6 = arith.constant dense<0.000000e+00> : vector<32xf32>
    %10 = vector.multi_reduction <add>, %9, %cst_6 [1] : vector<32x128xf32> to vector<32xf32>
    %11 = vector.shape_cast %10 : vector<32xf32> to vector<32x1xf32>
    %cst_7 = arith.constant 1.280000e+02 : f32
    %12 = vector.broadcast %cst_7 : f32 to vector<32x1xf32>
    %13 = arith.divf %11, %12 : vector<32x1xf32>
    %cst_8 = arith.constant 9.99999974E-6 : f32
    %14 = vector.broadcast %cst_8 : f32 to vector<32x1xf32>
    %15 = arith.addf %13, %14 : vector<32x1xf32>
    %16 = math.rsqrt %15 : vector<32x1xf32>
    %17 = vector.broadcast %6 : vector<32x1xf32> to vector<32x128xf32>
    %18 = arith.subf %0, %17 : vector<32x128xf32>
    %19 = vector.broadcast %16 : vector<32x1xf32> to vector<32x128xf32>
    %20 = arith.mulf %18, %19 : vector<32x128xf32>
    %21 = vector.broadcast %1 : vector<1x128xf32> to vector<32x128xf32>
    %22 = arith.mulf %20, %21 : vector<32x128xf32>
    %23 = vector.broadcast %2 : vector<1x128xf32> to vector<32x128xf32>
    %24 = arith.addf %22, %23 : vector<32x128xf32>
    %c0_9 = arith.constant 0 : index
    %c0_10 = arith.constant 0 : index
    %25 = vector.load %arg4[%c0_9, %c0_10] : memref<32x128xf32, #tpu.memory_space<vmem>>, vector<32x128xf32>
    tpu.vector_store %arg4[%c0_9, %c0_10], %24 {strides = array<i32>} : memref<32x128xf32, #tpu.memory_space<vmem>>, vector<32x128xf32>,
    return
  }
  func.func @transform_0(%arg0: i32) -> (i32, i32) {
    %c0_i32 = arith.constant 0 : i32
    %c0_i32_0 = arith.constant 0 : i32
    return %arg0, %c0_i32 : i32, i32
  }
  func.func @transform_1(%arg0: i32) -> (i32, i32) {
    %c0_i32 = arith.constant 0 : i32
    %c0_i32_0 = arith.constant 0 : i32
    %c0_i32_1 = arith.constant 0 : i32
    return %c0_i32, %c0_i32_0 : i32, i32
  }
  func.func @transform_2(%arg0: i32) -> (i32, i32) {
    %c0_i32 = arith.constant 0 : i32
    %c0_i32_0 = arith.constant 0 : i32
    %c0_i32_1 = arith.constant 0 : i32
    return %c0_i32, %c0_i32_0 : i32, i32
  }
  func.func @transform_3(%arg0: i32) -> (i32, i32) {
    %c0_i32 = arith.constant 0 : i32
    %c0_i32_0 = arith.constant 0 : i32
    return %arg0, %c0_i32 : i32, i32
  }
}

module attributes {stable_mosaic.version = 11 : i64} {
  func.func @_ffn_add_ln_kernel(%arg0: i32, %arg1: memref<32x128xf32, #tpu.memory_space<vmem>>, %arg2: memref<256x128xbf16, #tpu.memory_space<vmem>>, %arg3: memref<1x256xf32, #tpu.memory_space<vmem>>, %arg4: memref<128x256xbf16, #tpu.memory_space<vmem>>, %arg5: memref<1x128xf32, #tpu.memory_space<vmem>>, %arg6: memref<1x128xf32, #tpu.memory_space<vmem>>, %arg7: memref<1x128xf32, #tpu.memory_space<vmem>>, %arg8: memref<32x128xf32, #tpu.memory_space<vmem>>) attributes {dimension_semantics = [#tpu.dimension_semantics<parallel>], iteration_bounds = array<i64: 1>, scalar_prefetch = 0 : i64, scratch_operands = 0 : i64, tpu.core_type = #tpu.core_type<tc>, window_params = [{transform_indices = @transform_0, window_bounds = array<i64: 32, 128>}, {pipeline_mode = #tpu.pipeline_mode<synchronous>, transform_indices = @transform_1, window_bounds = array<i64: 256, 128>}, {pipeline_mode = #tpu.pipeline_mode<synchronous>, transform_indices = @transform_2, window_bounds = array<i64: 1, 256>}, {pipeline_mode = #tpu.pipeline_mode<synchronous>, transform_indices = @transform_3, window_bounds = array<i64: 128, 256>}, {pipeline_mode = #tpu.pipeline_mode<synchronous>, transform_indices = @transform_4, window_bounds = array<i64: 1, 128>}, {pipeline_mode = #tpu.pipeline_mode<synchronous>, transform_indices = @transform_5, window_bounds = array<i64: 1, 128>}, {pipeline_mode = #tpu.pipeline_mode<synchronous>, transform_indices = @transform_6, window_bounds = array<i64: 1, 128>}, {transform_indices = @transform_7, window_bounds = array<i64: 32, 128>}]} {
    %c0 = arith.constant 0 : index
    %c0_0 = arith.constant 0 : index
    %0 = vector.load %arg1[%c0, %c0_0] : memref<32x128xf32, #tpu.memory_space<vmem>>, vector<32x128xf32>
    %1 = arith.truncf %0 : vector<32x128xf32> to vector<32x128xbf16>
    %c0_1 = arith.constant 0 : index
    %c0_2 = arith.constant 0 : index
    %2 = vector.load %arg2[%c0_1, %c0_2] : memref<256x128xbf16, #tpu.memory_space<vmem>>, vector<256x128xbf16>
    %cst = arith.constant dense<0.000000e+00> : vector<32x256xf32>
    %3 = tpu.matmul %1, %2, %cst {dimension_numbers = #tpu.dot_dimension_numbers<[1], [1], [0], [0], [0, 0, 1, 0], [], []>} : vector<32x128xbf16>, vector<256x128xbf16>, vector<32x256xf32> -> vector<32x256xf32>
    %c0_3 = arith.constant 0 : index
    %c0_4 = arith.constant 0 : index
    %4 = vector.load %arg3[%c0_3, %c0_4] : memref<1x256xf32, #tpu.memory_space<vmem>>, vector<1x256xf32>
    %5 = vector.broadcast %4 : vector<1x256xf32> to vector<32x256xf32>
    %6 = arith.addf %3, %5 : vector<32x256xf32>
    %cst_5 = arith.constant 0.000000e+00 : f32
    %7 = vector.broadcast %cst_5 : f32 to vector<32x256xf32>
    %8 = arith.maximumf %6, %7 : vector<32x256xf32>
    %9 = arith.truncf %8 : vector<32x256xf32> to vector<32x256xbf16>
    %c0_6 = arith.constant 0 : index
    %c0_7 = arith.constant 0 : index
    %10 = vector.load %arg4[%c0_6, %c0_7] : memref<128x256xbf16, #tpu.memory_space<vmem>>, vector<128x256xbf16>
    %cst_8 = arith.constant dense<0.000000e+00> : vector<32x128xf32>
    %11 = tpu.matmul %9, %10, %cst_8 {dimension_numbers = #tpu.dot_dimension_numbers<[1], [1], [0], [0], [0, 0, 1, 0], [], []>} : vector<32x256xbf16>, vector<128x256xbf16>, vector<32x128xf32> -> vector<32x128xf32>
    %c0_9 = arith.constant 0 : index
    %c0_10 = arith.constant 0 : index
    %12 = vector.load %arg5[%c0_9, %c0_10] : memref<1x128xf32, #tpu.memory_space<vmem>>, vector<1x128xf32>
    %13 = vector.broadcast %12 : vector<1x128xf32> to vector<32x128xf32>
    %14 = arith.addf %11, %13 : vector<32x128xf32>
    %15 = arith.addf %0, %14 : vector<32x128xf32>
    %c0_11 = arith.constant 0 : index
    %c0_12 = arith.constant 0 : index
    %16 = vector.load %arg6[%c0_11, %c0_12] : memref<1x128xf32, #tpu.memory_space<vmem>>, vector<1x128xf32>
    %c0_13 = arith.constant 0 : index
    %c0_14 = arith.constant 0 : index
    %17 = vector.load %arg7[%c0_13, %c0_14] : memref<1x128xf32, #tpu.memory_space<vmem>>, vector<1x128xf32>
    %cst_15 = arith.constant dense<0.000000e+00> : vector<32xf32>
    %18 = vector.multi_reduction <add>, %15, %cst_15 [1] : vector<32x128xf32> to vector<32xf32>
    %19 = vector.shape_cast %18 : vector<32xf32> to vector<32x1xf32>
    %cst_16 = arith.constant 1.280000e+02 : f32
    %20 = vector.broadcast %cst_16 : f32 to vector<32x1xf32>
    %21 = arith.divf %19, %20 : vector<32x1xf32>
    %22 = vector.broadcast %21 : vector<32x1xf32> to vector<32x128xf32>
    %23 = arith.subf %15, %22 : vector<32x128xf32>
    %24 = arith.mulf %23, %23 : vector<32x128xf32>
    %cst_17 = arith.constant dense<0.000000e+00> : vector<32xf32>
    %25 = vector.multi_reduction <add>, %24, %cst_17 [1] : vector<32x128xf32> to vector<32xf32>
    %26 = vector.shape_cast %25 : vector<32xf32> to vector<32x1xf32>
    %cst_18 = arith.constant 1.280000e+02 : f32
    %27 = vector.broadcast %cst_18 : f32 to vector<32x1xf32>
    %28 = arith.divf %26, %27 : vector<32x1xf32>
    %cst_19 = arith.constant 9.99999974E-6 : f32
    %29 = vector.broadcast %cst_19 : f32 to vector<32x1xf32>
    %30 = arith.addf %28, %29 : vector<32x1xf32>
    %31 = math.rsqrt %30 : vector<32x1xf32>
    %32 = vector.broadcast %21 : vector<32x1xf32> to vector<32x128xf32>
    %33 = arith.subf %15, %32 : vector<32x128xf32>
    %34 = vector.broadcast %31 : vector<32x1xf32> to vector<32x128xf32>
    %35 = arith.mulf %33, %34 : vector<32x128xf32>
    %36 = vector.broadcast %16 : vector<1x128xf32> to vector<32x128xf32>
    %37 = arith.mulf %35, %36 : vector<32x128xf32>
    %38 = vector.broadcast %17 : vector<1x128xf32> to vector<32x128xf32>
    %39 = arith.addf %37, %38 : vector<32x128xf32>
    %c0_20 = arith.constant 0 : index
    %c0_21 = arith.constant 0 : index
    %40 = vector.load %arg8[%c0_20, %c0_21] : memref<32x128xf32, #tpu.memory_space<vmem>>, vector<32x128xf32>
    tpu.vector_store %arg8[%c0_20, %c0_21], %39 {strides = array<i32>} : memref<32x128xf32, #tpu.memory_space<vmem>>, vector<32x128xf32>,
    return
  }
  func.func @transform_0(%arg0: i32) -> (i32, i32) {
    %c0_i32 = arith.constant 0 : i32
    %c0_i32_0 = arith.constant 0 : i32
    return %arg0, %c0_i32 : i32, i32
  }
  func.func @transform_1(%arg0: i32) -> (i32, i32) {
    %c0_i32 = arith.constant 0 : i32
    %c0_i32_0 = arith.constant 0 : i32
    %c0_i32_1 = arith.constant 0 : i32
    return %c0_i32, %c0_i32_0 : i32, i32
  }
  func.func @transform_2(%arg0: i32) -> (i32, i32) {
    %c0_i32 = arith.constant 0 : i32
    %c0_i32_0 = arith.constant 0 : i32
    %c0_i32_1 = arith.constant 0 : i32
    return %c0_i32, %c0_i32_0 : i32, i32
  }
  func.func @transform_3(%arg0: i32) -> (i32, i32) {
    %c0_i32 = arith.constant 0 : i32
    %c0_i32_0 = arith.constant 0 : i32
    %c0_i32_1 = arith.constant 0 : i32
    return %c0_i32, %c0_i32_0 : i32, i32
  }
  func.func @transform_4(%arg0: i32) -> (i32, i32) {
    %c0_i32 = arith.constant 0 : i32
    %c0_i32_0 = arith.constant 0 : i32
    %c0_i32_1 = arith.constant 0 : i32
    return %c0_i32, %c0_i32_0 : i32, i32
  }
  func.func @transform_5(%arg0: i32) -> (i32, i32) {
    %c0_i32 = arith.constant 0 : i32
    %c0_i32_0 = arith.constant 0 : i32
    %c0_i32_1 = arith.constant 0 : i32
    return %c0_i32, %c0_i32_0 : i32, i32
  }
  func.func @transform_6(%arg0: i32) -> (i32, i32) {
    %c0_i32 = arith.constant 0 : i32
    %c0_i32_0 = arith.constant 0 : i32
    %c0_i32_1 = arith.constant 0 : i32
    return %c0_i32, %c0_i32_0 : i32, i32
  }
  func.func @transform_7(%arg0: i32) -> (i32, i32) {
    %c0_i32 = arith.constant 0 : i32
    %c0_i32_0 = arith.constant 0 : i32
    return %arg0, %c0_i32 : i32, i32
  }
}

module attributes {stable_mosaic.version = 11 : i64} {
  func.func @_linear_kernel(%arg0: i32, %arg1: i32, %arg2: i32, %arg3: memref<32x128xbf16, #tpu.memory_space<vmem>>, %arg4: memref<256x128xbf16, #tpu.memory_space<vmem>>, %arg5: memref<1x256xf32, #tpu.memory_space<vmem>>, %arg6: memref<32x256xbf16, #tpu.memory_space<vmem>>, %arg7: memref<32x256xf32, #tpu.memory_space<vmem>>) attributes {dimension_semantics = [#tpu.dimension_semantics<parallel>, #tpu.dimension_semantics<parallel>, #tpu.dimension_semantics<arbitrary>], iteration_bounds = array<i64: 1, 1, 1>, scalar_prefetch = 0 : i64, scratch_operands = 1 : i64, tpu.core_type = #tpu.core_type<tc>, window_params = [{transform_indices = @transform_0, window_bounds = array<i64: 32, 128>}, {transform_indices = @transform_1, window_bounds = array<i64: 256, 128>}, {transform_indices = @transform_2, window_bounds = array<i64: 1, 256>}, {transform_indices = @transform_3, window_bounds = array<i64: 32, 256>}]} {
    %c0_i32 = arith.constant 0 : i32
    %0 = arith.cmpi eq, %arg2, %c0_i32 : i32
    %1 = arith.extui %0 : i1 to i32
    %c0_i32_0 = arith.constant 0 : i32
    %2 = arith.cmpi ne, %1, %c0_i32_0 : i32
    scf.if %2 {
      %cst_10 = arith.constant 0.000000e+00 : f32
      %12 = vector.broadcast %cst_10 : f32 to vector<32x256xf32>
      %c0_11 = arith.constant 0 : index
      %c0_12 = arith.constant 0 : index
      %13 = vector.load %arg7[%c0_11, %c0_12] : memref<32x256xf32, #tpu.memory_space<vmem>>, vector<32x256xf32>
      tpu.vector_store %arg7[%c0_11, %c0_12], %12 {strides = array<i32>} : memref<32x256xf32, #tpu.memory_space<vmem>>, vector<32x256xf32>,
    } else {
    }
    %c0 = arith.constant 0 : index
    %c0_1 = arith.constant 0 : index
    %3 = vector.load %arg7[%c0, %c0_1] : memref<32x256xf32, #tpu.memory_space<vmem>>, vector<32x256xf32>
    %c0_2 = arith.constant 0 : index
    %c0_3 = arith.constant 0 : index
    %4 = vector.load %arg3[%c0_2, %c0_3] : memref<32x128xbf16, #tpu.memory_space<vmem>>, vector<32x128xbf16>
    %c0_4 = arith.constant 0 : index
    %c0_5 = arith.constant 0 : index
    %5 = vector.load %arg4[%c0_4, %c0_5] : memref<256x128xbf16, #tpu.memory_space<vmem>>, vector<256x128xbf16>
    %cst = arith.constant dense<0.000000e+00> : vector<32x256xf32>
    %6 = tpu.matmul %4, %5, %cst {dimension_numbers = #tpu.dot_dimension_numbers<[1], [1], [0], [0], [0, 0, 1, 0], [], []>} : vector<32x128xbf16>, vector<256x128xbf16>, vector<32x256xf32> -> vector<32x256xf32>
    %7 = arith.addf %3, %6 : vector<32x256xf32>
    %c0_6 = arith.constant 0 : index
    %c0_7 = arith.constant 0 : index
    %8 = vector.load %arg7[%c0_6, %c0_7] : memref<32x256xf32, #tpu.memory_space<vmem>>, vector<32x256xf32>
    tpu.vector_store %arg7[%c0_6, %c0_7], %7 {strides = array<i32>} : memref<32x256xf32, #tpu.memory_space<vmem>>, vector<32x256xf32>,
    %c0_i32_8 = arith.constant 0 : i32
    %9 = arith.cmpi eq, %arg2, %c0_i32_8 : i32
    %10 = arith.extui %9 : i1 to i32
    %c0_i32_9 = arith.constant 0 : i32
    %11 = arith.cmpi ne, %10, %c0_i32_9 : i32
    scf.if %11 {
      %c0_10 = arith.constant 0 : index
      %c0_11 = arith.constant 0 : index
      %12 = vector.load %arg7[%c0_10, %c0_11] : memref<32x256xf32, #tpu.memory_space<vmem>>, vector<32x256xf32>
      %c0_12 = arith.constant 0 : index
      %c0_13 = arith.constant 0 : index
      %13 = vector.load %arg5[%c0_12, %c0_13] : memref<1x256xf32, #tpu.memory_space<vmem>>, vector<1x256xf32>
      %14 = vector.broadcast %13 : vector<1x256xf32> to vector<32x256xf32>
      %15 = arith.addf %12, %14 : vector<32x256xf32>
      %16 = arith.truncf %15 : vector<32x256xf32> to vector<32x256xbf16>
      %c0_14 = arith.constant 0 : index
      %c0_15 = arith.constant 0 : index
      %17 = vector.load %arg6[%c0_14, %c0_15] : memref<32x256xbf16, #tpu.memory_space<vmem>>, vector<32x256xbf16>
      tpu.vector_store %arg6[%c0_14, %c0_15], %16 {strides = array<i32>} : memref<32x256xbf16, #tpu.memory_space<vmem>>, vector<32x256xbf16>,
    } else {
    }
    return
  }
  func.func @transform_0(%arg0: i32, %arg1: i32, %arg2: i32) -> (i32, i32) {
    %c0_i32 = arith.constant 0 : i32
    return %arg0, %arg2 : i32, i32
  }
  func.func @transform_1(%arg0: i32, %arg1: i32, %arg2: i32) -> (i32, i32) {
    %c0_i32 = arith.constant 0 : i32
    return %arg1, %arg2 : i32, i32
  }
  func.func @transform_2(%arg0: i32, %arg1: i32, %arg2: i32) -> (i32, i32) {
    %c0_i32 = arith.constant 0 : i32
    %c0_i32_0 = arith.constant 0 : i32
    return %c0_i32, %arg1 : i32, i32
  }
  func.func @transform_3(%arg0: i32, %arg1: i32, %arg2: i32) -> (i32, i32) {
    %c0_i32 = arith.constant 0 : i32
    return %arg0, %arg1 : i32, i32
  }
}

module attributes {stable_mosaic.version = 11 : i64} {
  func.func @_linear_kernel(%arg0: i32, %arg1: i32, %arg2: i32, %arg3: memref<32x128xbf16, #tpu.memory_space<vmem>>, %arg4: memref<256x128xbf16, #tpu.memory_space<vmem>>, %arg5: memref<1x256xf32, #tpu.memory_space<vmem>>, %arg6: memref<32x256xf32, #tpu.memory_space<vmem>>, %arg7: memref<32x256xf32, #tpu.memory_space<vmem>>) attributes {dimension_semantics = [#tpu.dimension_semantics<parallel>, #tpu.dimension_semantics<parallel>, #tpu.dimension_semantics<arbitrary>], iteration_bounds = array<i64: 1, 1, 1>, scalar_prefetch = 0 : i64, scratch_operands = 1 : i64, tpu.core_type = #tpu.core_type<tc>, window_params = [{transform_indices = @transform_0, window_bounds = array<i64: 32, 128>}, {transform_indices = @transform_1, window_bounds = array<i64: 256, 128>}, {transform_indices = @transform_2, window_bounds = array<i64: 1, 256>}, {transform_indices = @transform_3, window_bounds = array<i64: 32, 256>}]} {
    %c0_i32 = arith.constant 0 : i32
    %0 = arith.cmpi eq, %arg2, %c0_i32 : i32
    %1 = arith.extui %0 : i1 to i32
    %c0_i32_0 = arith.constant 0 : i32
    %2 = arith.cmpi ne, %1, %c0_i32_0 : i32
    scf.if %2 {
      %cst_10 = arith.constant 0.000000e+00 : f32
      %12 = vector.broadcast %cst_10 : f32 to vector<32x256xf32>
      %c0_11 = arith.constant 0 : index
      %c0_12 = arith.constant 0 : index
      %13 = vector.load %arg7[%c0_11, %c0_12] : memref<32x256xf32, #tpu.memory_space<vmem>>, vector<32x256xf32>
      tpu.vector_store %arg7[%c0_11, %c0_12], %12 {strides = array<i32>} : memref<32x256xf32, #tpu.memory_space<vmem>>, vector<32x256xf32>,
    } else {
    }
    %c0 = arith.constant 0 : index
    %c0_1 = arith.constant 0 : index
    %3 = vector.load %arg7[%c0, %c0_1] : memref<32x256xf32, #tpu.memory_space<vmem>>, vector<32x256xf32>
    %c0_2 = arith.constant 0 : index
    %c0_3 = arith.constant 0 : index
    %4 = vector.load %arg3[%c0_2, %c0_3] : memref<32x128xbf16, #tpu.memory_space<vmem>>, vector<32x128xbf16>
    %c0_4 = arith.constant 0 : index
    %c0_5 = arith.constant 0 : index
    %5 = vector.load %arg4[%c0_4, %c0_5] : memref<256x128xbf16, #tpu.memory_space<vmem>>, vector<256x128xbf16>
    %cst = arith.constant dense<0.000000e+00> : vector<32x256xf32>
    %6 = tpu.matmul %4, %5, %cst {dimension_numbers = #tpu.dot_dimension_numbers<[1], [1], [0], [0], [0, 0, 1, 0], [], []>} : vector<32x128xbf16>, vector<256x128xbf16>, vector<32x256xf32> -> vector<32x256xf32>
    %7 = arith.addf %3, %6 : vector<32x256xf32>
    %c0_6 = arith.constant 0 : index
    %c0_7 = arith.constant 0 : index
    %8 = vector.load %arg7[%c0_6, %c0_7] : memref<32x256xf32, #tpu.memory_space<vmem>>, vector<32x256xf32>
    tpu.vector_store %arg7[%c0_6, %c0_7], %7 {strides = array<i32>} : memref<32x256xf32, #tpu.memory_space<vmem>>, vector<32x256xf32>,
    %c0_i32_8 = arith.constant 0 : i32
    %9 = arith.cmpi eq, %arg2, %c0_i32_8 : i32
    %10 = arith.extui %9 : i1 to i32
    %c0_i32_9 = arith.constant 0 : i32
    %11 = arith.cmpi ne, %10, %c0_i32_9 : i32
    scf.if %11 {
      %c0_10 = arith.constant 0 : index
      %c0_11 = arith.constant 0 : index
      %12 = vector.load %arg7[%c0_10, %c0_11] : memref<32x256xf32, #tpu.memory_space<vmem>>, vector<32x256xf32>
      %c0_12 = arith.constant 0 : index
      %c0_13 = arith.constant 0 : index
      %13 = vector.load %arg5[%c0_12, %c0_13] : memref<1x256xf32, #tpu.memory_space<vmem>>, vector<1x256xf32>
      %14 = vector.broadcast %13 : vector<1x256xf32> to vector<32x256xf32>
      %15 = arith.addf %12, %14 : vector<32x256xf32>
      %c0_14 = arith.constant 0 : index
      %c0_15 = arith.constant 0 : index
      %16 = vector.load %arg6[%c0_14, %c0_15] : memref<32x256xf32, #tpu.memory_space<vmem>>, vector<32x256xf32>
      tpu.vector_store %arg6[%c0_14, %c0_15], %15 {strides = array<i32>} : memref<32x256xf32, #tpu.memory_space<vmem>>, vector<32x256xf32>,
    } else {
    }
    return
  }
  func.func @transform_0(%arg0: i32, %arg1: i32, %arg2: i32) -> (i32, i32) {
    %c0_i32 = arith.constant 0 : i32
    return %arg0, %arg2 : i32, i32
  }
  func.func @transform_1(%arg0: i32, %arg1: i32, %arg2: i32) -> (i32, i32) {
    %c0_i32 = arith.constant 0 : i32
    return %arg1, %arg2 : i32, i32
  }
  func.func @transform_2(%arg0: i32, %arg1: i32, %arg2: i32) -> (i32, i32) {
    %c0_i32 = arith.constant 0 : i32
    %c0_i32_0 = arith.constant 0 : i32
    return %c0_i32, %arg1 : i32, i32
  }
  func.func @transform_3(%arg0: i32, %arg1: i32, %arg2: i32) -> (i32, i32) {
    %c0_i32 = arith.constant 0 : i32
    return %arg0, %arg1 : i32, i32
  }
}

</mosaic_0001>

<llo_original>
// kernel: llama_model2_forward.27
$region0: #{llama_model2_forward.27}
  #allocation0 [shape = 'u32[]', space=smem, size = 0x4, offset = 0x4, fixed_abs, tag = 'smem constant byte address 0x4 - core index']
  #allocation1 [shape = 'u32[144,128]{1,0:T(1,128)}', space=vmem, size = 0x12000, scoped, tag = 'internal scratch']
  #allocation2 [shape = 'f32[32,128]{1,0:T(8,128)}', space=vmem, size = 0x4000, scoped, tag = 'scratch operand']
  %s0 = inlined_call_operand.vmem [shape: bf16[32,128], index: 0, kind: input, shape index: {}]
  %s1 = inlined_call_operand.vmem [shape: bf16[384,128], index: 1, kind: input, shape index: {}]
  %s2 = inlined_call_operand.vmem [shape: f32[1,384], index: 2, kind: input, shape index: {}]
  %s3 = inlined_call_operand.vmem [shape: bf16[32,384], index: 3, kind: output, shape index: {}]
  %s4 = sld [smem:[#allocation0]]
  $region90: #{llama_model2_forward.27} parent=0
    _
  %s6 = ssub.s32 1, %s4
  %s7 = scalar_select 0, %s6, %s4
  $region1: #{llama_model2_forward.27} parent=0
    #allocation3 [shape = 'u8[16384]{0}', space=vmem, size = 0x4000, scoped, tag = 'output window, operand 0']
    loop: start=0, step=1, limit=5
    $region2: #{llama_model2_forward.27} parent=1 // loop_pre_header
      _
    $region3: #{llama_model2_forward.27} parent=1 // loop_header
      %s9 = sphi 0, %s13
      %p10 = scmp.ge.s32.totalorder %s9, 5
      %s16 = sphi 0, %s35
      %s17 = sphi 0, %s31
      %s18 = sphi 0, %s27
      %s19 = sphi 0, %s16
      %s20 = sphi 0, %s17
      %s21 = sphi 0, %s18
      %s22 = sphi 0, %s19
      %s23 = sphi 0, %s20
      %s24 = sphi 0, %s21
      %s40 = sphi 0, %s42
      %s43 = sphi 0, %s40
      %s44 = sphi 0, %s43
      %s60 = sphi 0, %s44
      %s68 = sphi 0, %s70
      %s71 = sphi 0, %s68
      %s72 = sphi 0, %s71
      %s88 = sphi 0, %s72
      %s94 = sphi 0, %s96
      %s97 = sphi 0, %s94
      %s98 = sphi 0, %s97
      %s114 = sphi 0, %s98
      %s122 = sphi 0, %s124
      %s125 = sphi 0, %s122
      %s126 = sphi 0, %s125
      %s142 = sphi 0, %s126
    $region4: #{llama_model2_forward.27} parent=1 // loop_header_branch
      %12 = sbr.rel (%p10) target = $region8
    $region5: #{llama_model2_forward.27} parent=1 // loop_body
      %s14 = ssub.s32 %s9, 1
      %s15 = ssub.s32 %s9, 2
      %s25 = sadd.s32 1, %s18
      %p26 = scmp.ge.s32.totalorder %s25, 1
      %s27 = scalar_select %p26, 0, %s25
      %s28 = sadd.s32 1, %s17
      %s29 = scalar_select %p26, %s28, %s17
      %p30 = scmp.ge.s32.totalorder %s29, 3
      %s31 = scalar_select %p30, 0, %s29
      %s32 = sadd.s32 1, %s16
      %s33 = scalar_select %p30, %s32, %s16
      %p34 = scmp.ge.s32.totalorder %s33, 1
      %s35 = scalar_select %p34, 0, %s33
      %s36 = ssub.s32 %s16, %s35
      %s37 = ssub.s32 %s18, %s27
      %s38 = sor.u32 %s36, %s37
      %p39 = scmp.eq.s32.totalorder %s38, 0
      %s41 = sadd.s32 %s40, 1
      %s42 = scalar_select %p39, %s40, %s41
      %p45 = pneg %p39
      %p46 = scmp.eq.s32.totalorder %s9, 2
      %p47 = por %p45, %p46
      %p48 = scmp.ne.s32.totalorder %s40, %s43
      %p49 = scmp.eq.s32.totalorder %s9, 0
      %p50 = por %p48, %p49
      %p51 = scmp.ne.s32.totalorder %s40, %s43
      %p52 = scmp.eq.s32.totalorder %s14, 2
      %p53 = por %p51, %p52
      %p54 = scmp.ne.s32.totalorder %s43, %s44
      %p55 = scmp.eq.s32.totalorder %s14, 0
      %p56 = por %p54, %p55
      %p57 = scmp.ne.s32.totalorder %s43, %s44
      %p58 = scmp.eq.s32.totalorder %s15, 2
      %p59 = por %p57, %p58
      %p61 = scmp.ne.s32.totalorder %s44, %s60
      %p62 = scmp.eq.s32.totalorder %s15, 0
      %p63 = por %p61, %p62
      %s64 = ssub.s32 %s17, %s31
      %s65 = ssub.s32 %s18, %s27
      %s66 = sor.u32 %s64, %s65
      %p67 = scmp.eq.s32.totalorder %s66, 0
      %s69 = sadd.s32 %s68, 1
      %s70 = scalar_select %p67, %s68, %s69
      %p73 = pneg %p67
      %p74 = scmp.eq.s32.totalorder %s9, 2
      %p75 = por %p73, %p74
      %p76 = scmp.ne.s32.totalorder %s68, %s71
      %p77 = scmp.eq.s32.totalorder %s9, 0
      %p78 = por %p76, %p77
      %p79 = scmp.ne.s32.totalorder %s68, %s71
      %p80 = scmp.eq.s32.totalorder %s14, 2
      %p81 = por %p79, %p80
      %p82 = scmp.ne.s32.totalorder %s71, %s72
      %p83 = scmp.eq.s32.totalorder %s14, 0
      %p84 = por %p82, %p83
      %p85 = scmp.ne.s32.totalorder %s71, %s72
      %p86 = scmp.eq.s32.totalorder %s15, 2
      %p87 = por %p85, %p86
      %p89 = scmp.ne.s32.totalorder %s72, %s88
      %p90 = scmp.eq.s32.totalorder %s15, 0
      %p91 = por %p89, %p90
      %s92 = ssub.s32 %s17, %s31
      %p93 = scmp.eq.s32.totalorder %s92, 0
      %s95 = sadd.s32 %s94, 1
      %s96 = scalar_select %p93, %s94, %s95
      %p99 = pneg %p93
      %p100 = scmp.eq.s32.totalorder %s9, 2
      %p101 = por %p99, %p100
      %p102 = scmp.ne.s32.totalorder %s94, %s97
      %p103 = scmp.eq.s32.totalorder %s9, 0
      %p104 = por %p102, %p103
      %p105 = scmp.ne.s32.totalorder %s94, %s97
      %p106 = scmp.eq.s32.totalorder %s14, 2
      %p107 = por %p105, %p106
      %p108 = scmp.ne.s32.totalorder %s97, %s98
      %p109 = scmp.eq.s32.totalorder %s14, 0
      %p110 = por %p108, %p109
      %p111 = scmp.ne.s32.totalorder %s97, %s98
      %p112 = scmp.eq.s32.totalorder %s15, 2
      %p113 = por %p111, %p112
      %p115 = scmp.ne.s32.totalorder %s98, %s114
      %p116 = scmp.eq.s32.totalorder %s15, 0
      %p117 = por %p115, %p116
      %s118 = ssub.s32 %s16, %s35
      %s119 = ssub.s32 %s17, %s31
      %s120 = sor.u32 %s118, %s119
      %p121 = scmp.eq.s32.totalorder %s120, 0
      %s123 = sadd.s32 %s122, 1
      %s124 = scalar_select %p121, %s122, %s123
      %p127 = pneg %p121
      %p128 = scmp.eq.s32.totalorder %s9, 2
      %p129 = por %p127, %p128
      %p130 = scmp.ne.s32.totalorder %s122, %s125
      %p131 = scmp.eq.s32.totalorder %s9, 0
      %p132 = por %p130, %p131
      %p133 = scmp.ne.s32.totalorder %s122, %s125
      %p134 = scmp.eq.s32.totalorder %s14, 2
      %p135 = por %p133, %p134
      %p136 = scmp.ne.s32.totalorder %s125, %s126
      %p137 = scmp.eq.s32.totalorder %s14, 0
      %p138 = por %p136, %p137
      %p139 = scmp.ne.s32.totalorder %s125, %s126
      %p140 = scmp.eq.s32.totalorder %s15, 2
      %p141 = por %p139, %p140
      %p143 = scmp.ne.s32.totalorder %s126, %s142
      %p144 = scmp.eq.s32.totalorder %s15, 0
      %p145 = por %p143, %p144
      %p146 = scmp.le.s32.totalorder 1, %s9
      %p147 = scmp.lt.s32.totalorder %s9, 4
      %p148 = pnand %p146, %p147
      %p149 = pneg %p148
      // Predicated region
      $region9: #{llama_model2_forward.27} parent=5 // pred_check
        _
      $region10: #{llama_model2_forward.27} parent=5 // pred_check_branch
        %151 = sbr.rel (%p148) target = $region12
      $region11: #{llama_model2_forward.27} parent=5 // pred_region
        %s152 = ssub.s32 %s9, 1
        // Predicated region
        $region13: #{llama_model2_forward.27} parent=11 // pred_check
          %p153 = pneg %p56
        $region14: #{llama_model2_forward.27} parent=11 // pred_check_branch
          %155 = sbr.rel (%p153) target = $region16
        $region15: #{llama_model2_forward.27} parent=11 // pred_region
          %s156 = smul.u32 4, %s19
          %p157 = scmp.lt.s32.totalorder %s156, 3
          %s158 = scalar_select %p157, %s156, 3
          %p159 = scmp.lt.s32.totalorder %s21, 0
          %s160 = scalar_select %p159, %s21, 0
          %s161 = sadd.s32 %s160, %s158
          %s162 = smul.addr %s161, 4
          %s163 = scalar_lea.vmem %s0, %s162
          %s164 = smul.u32 4, %s19
        $region16: #{llama_model2_forward.27} parent=11 // pred_fallthru
          _
      $region12: #{llama_model2_forward.27} parent=5 // pred_fallthru
        _
      %p165 = scmp.lt.s32.totalorder %s9, 3
      // Predicated region
      $region17: #{llama_model2_forward.27} parent=5 // pred_check
        %p166 = pneg %p165
      $region18: #{llama_model2_forward.27} parent=5 // pred_check_branch
        %168 = sbr.rel (%p166) target = $region20
      $region19: #{llama_model2_forward.27} parent=5 // pred_region
        // Predicated region
        $region21: #{llama_model2_forward.27} parent=19 // pred_check
          %p169 = pneg %p78
        $region22: #{llama_model2_forward.27} parent=19 // pred_check_branch
          %171 = sbr.rel (%p169) target = $region24
        $region23: #{llama_model2_forward.27} parent=19 // pred_region
          %s172 = smul.u32 16, %s17
          %p173 = scmp.lt.s32.totalorder %s172, 47
          %s174 = scalar_select %p173, %s172, 47
          %p175 = scmp.lt.s32.totalorder %s18, 0
          %s176 = scalar_select %p175, %s18, 0
          %s177 = sadd.s32 %s176, %s174
          %s178 = smul.addr %s177, 4
          %s179 = scalar_lea.vmem %s1, %s178
          %s180 = smul.u32 16, %s17
        $region24: #{llama_model2_forward.27} parent=19 // pred_fallthru
          _
        // Predicated region
        $region25: #{llama_model2_forward.27} parent=19 // pred_check
          %p181 = pneg %p104
        $region26: #{llama_model2_forward.27} parent=19 // pred_check_branch
          %183 = sbr.rel (%p181) target = $region28
        $region27: #{llama_model2_forward.27} parent=19 // pred_region
          %p184 = scmp.lt.s32.totalorder %s17, 2
          %s185 = scalar_select %p184, %s17, 2
          %s186 = scalar_lea.vmem %s2, %s185
        $region28: #{llama_model2_forward.27} parent=19 // pred_fallthru
          _
      $region20: #{llama_model2_forward.27} parent=5 // pred_fallthru
        _
      %p187 = scmp.le.s32.totalorder 1, %s9
      %p188 = scmp.lt.s32.totalorder %s9, 4
      %p189 = pnand %p187, %p188
      %p190 = pneg %p189
      // Predicated region
      $region29: #{llama_model2_forward.27} parent=5 // pred_check
        _
      $region30: #{llama_model2_forward.27} parent=5 // pred_check_branch
        %192 = sbr.rel (%p189) target = $region32
      $region31: #{llama_model2_forward.27} parent=5 // pred_region
        %s193 = ssub.s32 %s9, 1
        %s194 = smul.u32 4, %s19
        %p195 = scmp.lt.s32.totalorder %s194, 3
        %s196 = scalar_select %p195, %s194, 3
        %p197 = scmp.lt.s32.totalorder %s21, 0
        %s198 = scalar_select %p197, %s21, 0
        %s199 = sadd.s32 %s198, %s196
        %s200 = smul.addr %s199, 4
        %s201 = scalar_lea.vmem %s0, %s200
        %p202 = pneg %p56
        %p203 = pneg %p53
        %s204 = smul.u32 16, %s20
        %p205 = scmp.lt.s32.totalorder %s204, 47
        %s206 = scalar_select %p205, %s204, 47
        %p207 = scmp.lt.s32.totalorder %s21, 0
        %s208 = scalar_select %p207, %s21, 0
        %s209 = sadd.s32 %s208, %s206
        %s210 = smul.addr %s209, 4
        %s211 = scalar_lea.vmem %s1, %s210
        %p212 = pneg %p84
        %p213 = pneg %p81
        %p214 = scmp.lt.s32.totalorder %s20, 2
        %s215 = scalar_select %p214, %s20, 2
        %s216 = scalar_lea.vmem %s2, %s215
        %p217 = pneg %p110
        %p218 = pneg %p107
        %p219 = pneg %p138
        %p220 = pneg %p135
        %s221 = sand.u32 %s125, 1
        %s222 = sand.u32 %s125, 1
        %s223 = smul.addr %s222, 16
        %s224 = scalar_lea.vmem [#allocation3], %s223
        %s225 = smul.u32 4, %s19
        %p226 = scmp.lt.s32.totalorder %s225, 3
        %s227 = scalar_select %p226, %s225, 3
        %p228 = scmp.lt.s32.totalorder %s21, 0
        %s229 = scalar_select %p228, %s21, 0
        %s230 = sadd.s32 %s229, %s227
        %s231 = smul.addr %s230, 4
        %s232 = scalar_lea.vmem %s0, %s231
        %s233 = smul.u32 4, %s19
        %s234 = smul.u32 16, %s20
        %p235 = scmp.lt.s32.totalorder %s234, 47
        %s236 = scalar_select %p235, %s234, 47
        %p237 = scmp.lt.s32.totalorder %s21, 0
        %s238 = scalar_select %p237, %s21, 0
        %s239 = sadd.s32 %s238, %s236
        %s240 = smul.addr %s239, 4
        %s241 = scalar_lea.vmem %s1, %s240
        %s242 = smul.u32 16, %s20
        %p243 = scmp.lt.s32.totalorder %s20, 2
        %s244 = scalar_select %p243, %s20, 2
        %s245 = scalar_lea.vmem %s2, %s244
        %s246 = smul.u32 4, %s19
        %p248 = scmp.eq.s32.totalorder %s21, 0
        // Predicated region
        $region33: #{llama_model2_forward.27} parent=31 // pred_check
          %p249 = pneg %p248
        $region34: #{llama_model2_forward.27} parent=31 // pred_check_branch
          %251 = sbr.rel (%p249) target = $region36
        $region35: #{llama_model2_forward.27} parent=31 // pred_region
          %252 = vst [vmem:[#allocation2] sm:$0xff] 0.0
          %253 = vst [vmem:[#allocation2 + $0x8] sm:$0xff] 0.0
          %254 = vst [vmem:[#allocation2 + $0x10] sm:$0xff] 0.0
          %255 = vst [vmem:[#allocation2 + $0x18] sm:$0xff] 0.0
        $region36: #{llama_model2_forward.27} parent=31 // pred_fallthru
          _
        %v256 = vld [vmem:[#allocation2] sm:$0xff]
        %v257 = vld [vmem:[#allocation2 + $0x8] sm:$0xff]
        %v258 = vld [vmem:[#allocation2 + $0x10] sm:$0xff]
        %v259 = vld [vmem:[#allocation2 + $0x18] sm:$0xff]
        %v260 = vld [vmem:[%s232] sm:$0xf]
        %v261 = vld [vmem:[%s232 + $0x4] sm:$0xf]
        %v262 = vld [vmem:[%s232 + $0x8] sm:$0xf]
        %v263 = vld [vmem:[%s232 + $0xc] sm:$0xf]
        %v264 = vld [vmem:[%s241] sm:$0xf]
        %v265 = vld [vmem:[%s241 + $0x4] sm:$0xf]
        %v266 = vld [vmem:[%s241 + $0x8] sm:$0xf]
        %v267 = vld [vmem:[%s241 + $0xc] sm:$0xf]
        %v268 = vld [vmem:[%s241 + $0x10] sm:$0xf]
        %v269 = vld [vmem:[%s241 + $0x14] sm:$0xf]
        %v270 = vld [vmem:[%s241 + $0x18] sm:$0xf]
        %v271 = vld [vmem:[%s241 + $0x1c] sm:$0xf]
        %v272 = vld [vmem:[%s241 + $0x20] sm:$0xf]
        %v273 = vld [vmem:[%s241 + $0x24] sm:$0xf]
        %v274 = vld [vmem:[%s241 + $0x28] sm:$0xf]
        %v275 = vld [vmem:[%s241 + $0x2c] sm:$0xf]
        %v276 = vld [vmem:[%s241 + $0x30] sm:$0xf]
        %v277 = vld [vmem:[%s241 + $0x34] sm:$0xf]
        %v278 = vld [vmem:[%s241 + $0x38] sm:$0xf]
        %v279 = vld [vmem:[%s241 + $0x3c] sm:$0xf]
        %v284 = vunpack.c.l.b16 %v260
        %v285 = vunpack.c.l.b16 %v261
        %v286 = vunpack.c.l.b16 %v262
        %v287 = vunpack.c.l.b16 %v263
        %v288 = vpack.c.b16 %v285, %v284
        %v289 = vpack.c.b16 %v287, %v286
        %v308 = vunpack.c.l.b16 %v264
        %v309 = vunpack.c.l.b16 %v265
        %v310 = vunpack.c.l.b16 %v266
        %v311 = vunpack.c.l.b16 %v267
        %v312 = vunpack.c.l.b16 %v268
        %v313 = vunpack.c.l.b16 %v269
        %v314 = vunpack.c.l.b16 %v270
        %v315 = vunpack.c.l.b16 %v271
        %v316 = vunpack.c.l.b16 %v272
        %v317 = vunpack.c.l.b16 %v273
        %v318 = vunpack.c.l.b16 %v274
        %v319 = vunpack.c.l.b16 %v275
        %v320 = vunpack.c.l.b16 %v276
        %v321 = vunpack.c.l.b16 %v277
        %v322 = vunpack.c.l.b16 %v278
        %v323 = vunpack.c.l.b16 %v279
        %v324 = vpack.c.b16 %v309, %v308
        %v325 = vpack.c.b16 %v311, %v310
        %v326 = vpack.c.b16 %v313, %v312
        %v327 = vpack.c.b16 %v315, %v314
        %v328 = vpack.c.b16 %v317, %v316
        %v329 = vpack.c.b16 %v319, %v318
        %v330 = vpack.c.b16 %v321, %v320
        %v331 = vpack.c.b16 %v323, %v322
        %340 = vmatprep.subr.bf16.mxu0 0
        %341 = vmatpush1.bf16.xpose.msra.mxu0 %v324
        %342 = vmatprep.subr.bf16.mxu0 0
        %343 = vmatpush1.bf16.xpose.msra.mxu0 %v325
        %344 = vmatprep.subr.bf16.mxu0 0
        %345 = vmatpush1.bf16.xpose.msra.mxu0 %v326
        %346 = vmatprep.subr.bf16.mxu0 0
        %347 = vmatpush1.bf16.xpose.msra.mxu0 %v327
        %348 = vmatprep.subr.bf16.mxu0 0
        %349 = vmatpush1.bf16.xpose.msra.mxu0 %v328
        %350 = vmatprep.subr.bf16.mxu0 0
        %351 = vmatpush1.bf16.xpose.msra.mxu0 %v329
        %352 = vmatprep.subr.bf16.mxu0 0
        %353 = vmatpush1.bf16.xpose.msra.mxu0 %v330
        %354 = vmatprep.subr.bf16.mxu0 0
        %355 = vmatpush1.bf16.xpose.msra.mxu0 %v331
        %356 = vmatprep.subr.bf16.mxu0 0
        %357 = vmatpush1.bf16.xpose.msra.mxu0 0
        %358 = vmatprep.subr.bf16.mxu0 0
        %359 = vmatpush1.bf16.xpose.msra.mxu0 0
        %360 = vmatprep.subr.bf16.mxu0 0
        %361 = vmatpush1.bf16.xpose.msra.mxu0 0
        %362 = vmatprep.subr.bf16.mxu0 0
        %363 = vmatpush1.bf16.xpose.msra.mxu0 0
        %364 = vmatprep.subr.bf16.mxu0 0
        %365 = vmatpush1.bf16.xpose.msra.mxu0 0
        %366 = vmatprep.subr.bf16.mxu0 0
        %367 = vmatpush1.bf16.xpose.msra.mxu0 0
        %368 = vmatprep.subr.bf16.mxu0 0
        %369 = vmatpush1.bf16.xpose.msra.mxu0 0
        %370 = vmatprep.subr.bf16.mxu0 0
        %371 = vmatpush1.bf16.xpose.msra.mxu0 0
        %372 = vmatprep.mubr.bf16.mxu0 0
        %373 = vmatmul.mubr.bf16.gmra.mrb[0].mxu0 %v288
        %v374 = vpop.f32.mrb[0].mxu0
        %v375 = vadd.f32 0.0, %v374
        %v376 = vpop.f32.mrb[0].mxu0
        %v377 = vpop.f32.mrb[0].mxu0
        %v378 = vadd.f32 0.0, %v377
        %v379 = vpop.f32.mrb[0].mxu0
        %380 = vmatprep.mubr.bf16.mxu0 0
        %381 = vmatmul.mubr.bf16.gmra.mrb[0].mxu0 %v289
        %v382 = vpop.f32.mrb[0].mxu0
        %v383 = vadd.f32 0.0, %v382
        %v384 = vpop.f32.mrb[0].mxu0
        %v385 = vpop.f32.mrb[0].mxu0
        %v386 = vadd.f32 0.0, %v385
        %v387 = vpop.f32.mrb[0].mxu0
        %388 = vdwg.mxu0
        %v389 = vadd.f32 %v256, %v375
        %v390 = vadd.f32 %v257, %v378
        %v391 = vadd.f32 %v258, %v383
        %v392 = vadd.f32 %v259, %v386
        %393 = vst [vmem:[#allocation2] sm:$0xff] %v389
        %394 = vst [vmem:[#allocation2 + $0x8] sm:$0xff] %v390
        %395 = vst [vmem:[#allocation2 + $0x10] sm:$0xff] %v391
        %396 = vst [vmem:[#allocation2 + $0x18] sm:$0xff] %v392
        // Predicated region
        $region37: #{llama_model2_forward.27} parent=31 // pred_check
          %p397 = pneg %p248
        $region38: #{llama_model2_forward.27} parent=31 // pred_check_branch
          %399 = sbr.rel (%p397) target = $region40
        $region39: #{llama_model2_forward.27} parent=31 // pred_region
          %v400 = vld [vmem:[#allocation2] sm:$0xff]
          %v401 = vld [vmem:[#allocation2 + $0x8] sm:$0xff]
          %v402 = vld [vmem:[#allocation2 + $0x10] sm:$0xff]
          %v403 = vld [vmem:[#allocation2 + $0x18] sm:$0xff]
          %v404 = vld [vmem:[%s245] sm:$0x1]
          %v406 = vlaneseq
          %v407 = vshrl.u32 %v406, 7
          %v408 = vsub.s32 0, %v407
          %v409 = vrot.slane %v404, %v408
          %v411 = vadd.f32 %v400, %v409
          %v412 = vadd.f32 %v401, %v409
          %v413 = vadd.f32 %v402, %v409
          %v414 = vadd.f32 %v403, %v409
          %v415 = vpack.c.bf16 %v412, %v411
          %v416 = vpack.c.bf16 %v414, %v413
          %v419 = vunpack.c.l.b16 %v415
          %v420 = vunpack.c.h.b16 %v415
          %v421 = vunpack.c.l.b16 %v416
          %v422 = vunpack.c.h.b16 %v416
          %v423 = vpack.c.b16 %v419, %v419
          %v424 = vpack.c.b16 %v420, %v420
          %v425 = vpack.c.b16 %v421, %v421
          %v426 = vpack.c.b16 %v422, %v422
          %431 = vst [vmem:[%s224] sm:$0xf] %v423
          %432 = vst [vmem:[%s224 + $0x4] sm:$0xf] %v424
          %433 = vst [vmem:[%s224 + $0x8] sm:$0xf] %v425
          %434 = vst [vmem:[%s224 + $0xc] sm:$0xf] %v426
        $region40: #{llama_model2_forward.27} parent=31 // pred_fallthru
          _
        %s435 = sand.u32 %s125, 1
        %s436 = sand.u32 %s125, 1
        %s437 = smul.addr %s436, 16
        %s438 = scalar_lea.vmem [#allocation3], %s437
        // Predicated region
        $region41: #{llama_model2_forward.27} parent=31 // pred_check
          %p439 = pneg %p135
        $region42: #{llama_model2_forward.27} parent=31 // pred_check_branch
          %441 = sbr.rel (%p439) target = $region44
        $region43: #{llama_model2_forward.27} parent=31 // pred_region
          %s442 = smul.u32 4, %s19
          %s443 = smul.addr %s442, 3
          %s444 = sadd.s32 %s20, %s443
          %s445 = smul.addr %s444, 4
          %s446 = scalar_lea.vmem %s3, %s445
          // Predicated region
          $region45: #{llama_model2_forward.27} parent=43 // pred_check
            _
          $region46: #{llama_model2_forward.27} parent=43 // pred_check_branch
            %448 = sbr.rel (0) target = $region48
          $region47: #{llama_model2_forward.27} parent=43 // pred_region
            // Predicated region
            $region49: #{llama_model2_forward.27} parent=47 // pred_check
              _
            $region50: #{llama_model2_forward.27} parent=47 // pred_check_branch
              %450 = sbr.rel target = $region52
            $region51: #{llama_model2_forward.27} parent=47 // pred_region
              // Predicated region
              $region64: #{llama_model2_forward.27} parent=51 // pred_check
                _
              $region65: #{llama_model2_forward.27} parent=51 // pred_check_branch
                %471 = sbr.rel (0) target = $region67
              $region66: #{llama_model2_forward.27} parent=51 // pred_region
                loop: start=0, step=1, limit=1
                $region68: #{llama_model2_forward.27} parent=66 // loop_pre_header
                  _
                $region69: #{llama_model2_forward.27} parent=66 // loop_header
                  %s473 = sphi 0, %s477
                  %p474 = scmp.ge.s32.totalorder %s473, 1
                  %s478 = sphi %s438, %s438
                  %s479 = sphi %s446, %s446
                $region70: #{llama_model2_forward.27} parent=66 // loop_header_branch
                  %476 = sbr.rel (%p474) target = $region74
                $region71: #{llama_model2_forward.27} parent=66 // loop_body
                  _
                $region72: #{llama_model2_forward.27} parent=66 // loop_footer
                  %s477 = sadd.s32 1, %s473
                $region73: #{llama_model2_forward.27} parent=66 // loop_footer_branch
                  %472 = sbr.rel target = $region69
                $region74: #{llama_model2_forward.27} parent=66 // loop_exit
                  _
                loop: start=0, step=1, limit=1
                $region75: #{llama_model2_forward.27} parent=66 // loop_pre_header
                  _
                $region76: #{llama_model2_forward.27} parent=66 // loop_header
                  %s482 = sphi 0, %s486
                  %p483 = scmp.ge.s32.totalorder %s482, 1
                  %s487 = sphi %s438, %s438
                  %s488 = sphi %s446, %s446
                $region77: #{llama_model2_forward.27} parent=66 // loop_header_branch
                  %485 = sbr.rel (%p483) target = $region81
                $region78: #{llama_model2_forward.27} parent=66 // loop_body
                  %v489 = vld [vmem:[%s487] sm:$0xf]
                  %490 = vst [vmem:[%s488] sm:$0xf] %v489
                  %v491 = vld [vmem:[%s487 + $0x4] sm:$0xf]
                  %492 = vst [vmem:[%s488 + $0xc] sm:$0xf] %v491
                  %v493 = vld [vmem:[%s487 + $0x8] sm:$0xf]
                  %494 = vst [vmem:[%s488 + $0x18] sm:$0xf] %v493
                  %v495 = vld [vmem:[%s487 + $0xc] sm:$0xf]
                  %496 = vst [vmem:[%s488 + $0x24] sm:$0xf] %v495
                $region79: #{llama_model2_forward.27} parent=66 // loop_footer
                  %s486 = sadd.s32 1, %s482
                $region80: #{llama_model2_forward.27} parent=66 // loop_footer_branch
                  %481 = sbr.rel target = $region76
                $region81: #{llama_model2_forward.27} parent=66 // loop_exit
                  _
              $region67: #{llama_model2_forward.27} parent=51 // pred_fallthru
                _
            $region52: #{llama_model2_forward.27} parent=47 // pred_fallthru
              _
            // Predicated region
            $region53: #{llama_model2_forward.27} parent=47 // pred_check
              _
            $region54: #{llama_model2_forward.27} parent=47 // pred_check_branch
              %452 = sbr.rel (0) target = $region56
            $region55: #{llama_model2_forward.27} parent=47 // pred_region
              loop: start=0, step=1, limit=1
              $region57: #{llama_model2_forward.27} parent=55 // loop_pre_header
                _
              $region58: #{llama_model2_forward.27} parent=55 // loop_header
                %s455 = sphi 0, %s459
                %p456 = scmp.ge.s32.totalorder %s455, 1
                %s460 = sphi %s438, %s438
                %s461 = sphi %s446, %s446
              $region59: #{llama_model2_forward.27} parent=55 // loop_header_branch
                %458 = sbr.rel (%p456) target = $region63
              $region60: #{llama_model2_forward.27} parent=55 // loop_body
                %v462 = vld [vmem:[%s460] sm:$0xf]
                %463 = vst [vmem:[%s461] sm:$0xf] %v462
                %v464 = vld [vmem:[%s460 + $0x4] sm:$0xf]
                %465 = vst [vmem:[%s461 + $0xc] sm:$0xf] %v464
                %v466 = vld [vmem:[%s460 + $0x8] sm:$0xf]
                %467 = vst [vmem:[%s461 + $0x18] sm:$0xf] %v466
                %v468 = vld [vmem:[%s460 + $0xc] sm:$0xf]
                %469 = vst [vmem:[%s461 + $0x24] sm:$0xf] %v468
              $region61: #{llama_model2_forward.27} parent=55 // loop_footer
                %s459 = sadd.s32 1, %s455
              $region62: #{llama_model2_forward.27} parent=55 // loop_footer_branch
                %454 = sbr.rel target = $region58
              $region63: #{llama_model2_forward.27} parent=55 // loop_exit
                _
            $region56: #{llama_model2_forward.27} parent=47 // pred_fallthru
              _
          $region48: #{llama_model2_forward.27} parent=43 // pred_fallthru
            _
          %497 = vnop
        $region44: #{llama_model2_forward.27} parent=31 // pred_fallthru
          _
      $region32: #{llama_model2_forward.27} parent=5 // pred_fallthru
        _
      %p498 = scmp.le.s32.totalorder 2, %s9
      // Predicated region
      $region82: #{llama_model2_forward.27} parent=5 // pred_check
        %p499 = pneg %p498
      $region83: #{llama_model2_forward.27} parent=5 // pred_check_branch
        %501 = sbr.rel (%p499) target = $region85
      $region84: #{llama_model2_forward.27} parent=5 // pred_region
        %s502 = ssub.s32 %s9, 2
        // Predicated region
        $region86: #{llama_model2_forward.27} parent=84 // pred_check
          %p503 = pneg %p141
        $region87: #{llama_model2_forward.27} parent=84 // pred_check_branch
          %505 = sbr.rel (%p503) target = $region89
        $region88: #{llama_model2_forward.27} parent=84 // pred_region
          %s506 = sand.u32 %s126, 1
          %s507 = sand.u32 %s126, 1
          %s508 = smul.addr %s507, 16
          %s509 = scalar_lea.vmem [#allocation3], %s508
        $region89: #{llama_model2_forward.27} parent=84 // pred_fallthru
          _
      $region85: #{llama_model2_forward.27} parent=5 // pred_fallthru
        _
    $region6: #{llama_model2_forward.27} parent=1 // loop_footer
      %s13 = sadd.s32 1, %s9
    $region7: #{llama_model2_forward.27} parent=1 // loop_footer_branch
      %8 = sbr.rel target = $region3
    $region8: #{llama_model2_forward.27} parent=1 // loop_exit
      _

// kernel: llama_model2_forward.37
$region0: #{llama_model2_forward.37}
  #allocation0 [shape = 'u32[]', space=smem, size = 0x4, offset = 0x4, fixed_abs, tag = 'smem constant byte address 0x4 - core index']
  #allocation1 [shape = 'u32[144,128]{1,0:T(1,128)}', space=vmem, size = 0x12000, scoped, tag = 'internal scratch']
  %s0 = inlined_call_operand.vmem [shape: bf16[8,16,32], index: 0, kind: input, shape index: {}]
  %s1 = inlined_call_operand.vmem [shape: bf16[8,16,32], index: 1, kind: input, shape index: {}]
  %s2 = inlined_call_operand.vmem [shape: bf16[8,16,32], index: 2, kind: input, shape index: {}]
  %s3 = inlined_call_operand.vmem [shape: bf16[8,16,32], index: 3, kind: output, shape index: {}]
  %s4 = sld [smem:[#allocation0]]
  $region45: #{llama_model2_forward.37} parent=0
    _
  %s6 = ssub.s32 1, %s4
  %s7 = scalar_select 0, %s6, %s4
  loop: start=0, step=1, limit=10
  $region2: #{llama_model2_forward.37} parent=0 // loop_pre_header
    _
  $region3: #{llama_model2_forward.37} parent=0 // loop_header
    %s9 = sphi 0, %s13
    %p10 = scmp.ge.s32.totalorder %s9, 10
    %s19 = sphi 0, %s21
    %s22 = sphi 0, %s19
    %s23 = sphi 0, %s22
    %s39 = sphi 0, %s23
    %s45 = sphi 0, %s47
    %s48 = sphi 0, %s45
    %s49 = sphi 0, %s48
    %s65 = sphi 0, %s49
    %s71 = sphi 0, %s73
    %s74 = sphi 0, %s71
    %s75 = sphi 0, %s74
    %s91 = sphi 0, %s75
    %s97 = sphi 0, %s99
    %s100 = sphi 0, %s97
    %s101 = sphi 0, %s100
    %s117 = sphi 0, %s101
  $region4: #{llama_model2_forward.37} parent=0 // loop_header_branch
    %12 = sbr.rel (%p10) target = $region8
  $region5: #{llama_model2_forward.37} parent=0 // loop_body
    %s14 = ssub.s32 %s9, 1
    %s15 = ssub.s32 %s9, 2
    %s16 = sadd.s32 %s9, 1
    %s17 = ssub.s32 %s9, %s16
    %p18 = scmp.eq.s32.totalorder %s17, 0
    %s20 = sadd.s32 %s19, 1
    %s21 = scalar_select %p18, %s19, %s20
    %p24 = pneg %p18
    %p25 = scmp.eq.s32.totalorder %s9, 7
    %p26 = por %p24, %p25
    %p27 = scmp.ne.s32.totalorder %s19, %s22
    %p28 = scmp.eq.s32.totalorder %s9, 0
    %p29 = por %p27, %p28
    %p30 = scmp.ne.s32.totalorder %s19, %s22
    %p31 = scmp.eq.s32.totalorder %s14, 7
    %p32 = por %p30, %p31
    %p33 = scmp.ne.s32.totalorder %s22, %s23
    %p34 = scmp.eq.s32.totalorder %s14, 0
    %p35 = por %p33, %p34
    %p36 = scmp.ne.s32.totalorder %s22, %s23
    %p37 = scmp.eq.s32.totalorder %s15, 7
    %p38 = por %p36, %p37
    %p40 = scmp.ne.s32.totalorder %s23, %s39
    %p41 = scmp.eq.s32.totalorder %s15, 0
    %p42 = por %p40, %p41
    %s43 = ssub.s32 %s9, %s16
    %p44 = scmp.eq.s32.totalorder %s43, 0
    %s46 = sadd.s32 %s45, 1
    %s47 = scalar_select %p44, %s45, %s46
    %p50 = pneg %p44
    %p51 = scmp.eq.s32.totalorder %s9, 7
    %p52 = por %p50, %p51
    %p53 = scmp.ne.s32.totalorder %s45, %s48
    %p54 = scmp.eq.s32.totalorder %s9, 0
    %p55 = por %p53, %p54
    %p56 = scmp.ne.s32.totalorder %s45, %s48
    %p57 = scmp.eq.s32.totalorder %s14, 7
    %p58 = por %p56, %p57
    %p59 = scmp.ne.s32.totalorder %s48, %s49
    %p60 = scmp.eq.s32.totalorder %s14, 0
    %p61 = por %p59, %p60
    %p62 = scmp.ne.s32.totalorder %s48, %s49
    %p63 = scmp.eq.s32.totalorder %s15, 7
    %p64 = por %p62, %p63
    %p66 = scmp.ne.s32.totalorder %s49, %s65
    %p67 = scmp.eq.s32.totalorder %s15, 0
    %p68 = por %p66, %p67
    %s69 = ssub.s32 %s9, %s16
    %p70 = scmp.eq.s32.totalorder %s69, 0
    %s72 = sadd.s32 %s71, 1
    %s73 = scalar_select %p70, %s71, %s72
    %p76 = pneg %p70
    %p77 = scmp.eq.s32.totalorder %s9, 7
    %p78 = por %p76, %p77
    %p79 = scmp.ne.s32.totalorder %s71, %s74
    %p80 = scmp.eq.s32.totalorder %s9, 0
    %p81 = por %p79, %p80
    %p82 = scmp.ne.s32.totalorder %s71, %s74
    %p83 = scmp.eq.s32.totalorder %s14, 7
    %p84 = por %p82, %p83
    %p85 = scmp.ne.s32.totalorder %s74, %s75
    %p86 = scmp.eq.s32.totalorder %s14, 0
    %p87 = por %p85, %p86
    %p88 = scmp.ne.s32.totalorder %s74, %s75
    %p89 = scmp.eq.s32.totalorder %s15, 7
    %p90 = por %p88, %p89
    %p92 = scmp.ne.s32.totalorder %s75, %s91
    %p93 = scmp.eq.s32.totalorder %s15, 0
    %p94 = por %p92, %p93
    %s95 = ssub.s32 %s9, %s16
    %p96 = scmp.eq.s32.totalorder %s95, 0
    %s98 = sadd.s32 %s97, 1
    %s99 = scalar_select %p96, %s97, %s98
    %p102 = pneg %p96
    %p103 = scmp.eq.s32.totalorder %s9, 7
    %p104 = por %p102, %p103
    %p105 = scmp.ne.s32.totalorder %s97, %s100
    %p106 = scmp.eq.s32.totalorder %s9, 0
    %p107 = por %p105, %p106
    %p108 = scmp.ne.s32.totalorder %s97, %s100
    %p109 = scmp.eq.s32.totalorder %s14, 7
    %p110 = por %p108, %p109
    %p111 = scmp.ne.s32.totalorder %s100, %s101
    %p112 = scmp.eq.s32.totalorder %s14, 0
    %p113 = por %p111, %p112
    %p114 = scmp.ne.s32.totalorder %s100, %s101
    %p115 = scmp.eq.s32.totalorder %s15, 7
    %p116 = por %p114, %p115
    %p118 = scmp.ne.s32.totalorder %s101, %s117
    %p119 = scmp.eq.s32.totalorder %s15, 0
    %p120 = por %p118, %p119
    %p121 = scmp.le.s32.totalorder 1, %s9
    %p122 = scmp.lt.s32.totalorder %s9, 9
    %p123 = pnand %p121, %p122
    %p124 = pneg %p123
    // Predicated region
    $region9: #{llama_model2_forward.37} parent=5 // pred_check
      _
    $region10: #{llama_model2_forward.37} parent=5 // pred_check_branch
      %126 = sbr.rel (%p123) target = $region12
    $region11: #{llama_model2_forward.37} parent=5 // pred_region
      %s127 = ssub.s32 %s9, 1
    $region12: #{llama_model2_forward.37} parent=5 // pred_fallthru
      _
    %p128 = scmp.lt.s32.totalorder %s9, 8
    // Predicated region
    $region13: #{llama_model2_forward.37} parent=5 // pred_check
      %p129 = pneg %p128
    $region14: #{llama_model2_forward.37} parent=5 // pred_check_branch
      %131 = sbr.rel (%p129) target = $region16
    $region15: #{llama_model2_forward.37} parent=5 // pred_region
      // Predicated region
      $region17: #{llama_model2_forward.37} parent=15 // pred_check
        %p132 = pneg %p29
      $region18: #{llama_model2_forward.37} parent=15 // pred_check_branch
        %134 = sbr.rel (%p132) target = $region20
      $region19: #{llama_model2_forward.37} parent=15 // pred_region
        %p135 = scmp.lt.s32.totalorder %s9, 7
        %s136 = scalar_select %p135, %s9, 7
        %s137 = smul.addr %s136, 2
        %s138 = smul.addr %s137, 4
        %s139 = scalar_lea.vmem %s0, %s138
      $region20: #{llama_model2_forward.37} parent=15 // pred_fallthru
        _
      // Predicated region
      $region21: #{llama_model2_forward.37} parent=15 // pred_check
        %p140 = pneg %p55
      $region22: #{llama_model2_forward.37} parent=15 // pred_check_branch
        %142 = sbr.rel (%p140) target = $region24
      $region23: #{llama_model2_forward.37} parent=15 // pred_region
        %p143 = scmp.lt.s32.totalorder %s9, 7
        %s144 = scalar_select %p143, %s9, 7
        %s145 = smul.addr %s144, 2
        %s146 = smul.addr %s145, 4
        %s147 = scalar_lea.vmem %s1, %s146
      $region24: #{llama_model2_forward.37} parent=15 // pred_fallthru
        _
      // Predicated region
      $region25: #{llama_model2_forward.37} parent=15 // pred_check
        %p148 = pneg %p81
      $region26: #{llama_model2_forward.37} parent=15 // pred_check_branch
        %150 = sbr.rel (%p148) target = $region28
      $region27: #{llama_model2_forward.37} parent=15 // pred_region
        %p151 = scmp.lt.s32.totalorder %s9, 7
        %s152 = scalar_select %p151, %s9, 7
        %s153 = smul.addr %s152, 2
        %s154 = smul.addr %s153, 4
        %s155 = scalar_lea.vmem %s2, %s154
      $region28: #{llama_model2_forward.37} parent=15 // pred_fallthru
        _
    $region16: #{llama_model2_forward.37} parent=5 // pred_fallthru
      _
    %p156 = scmp.le.s32.totalorder 1, %s9
    %p157 = scmp.lt.s32.totalorder %s9, 9
    %p158 = pnand %p156, %p157
    %p159 = pneg %p158
    // Predicated region
    $region29: #{llama_model2_forward.37} parent=5 // pred_check
      _
    $region30: #{llama_model2_forward.37} parent=5 // pred_check_branch
      %161 = sbr.rel (%p158) target = $region32
    $region31: #{llama_model2_forward.37} parent=5 // pred_region
      %s162 = ssub.s32 %s9, 1
      %p163 = scmp.lt.s32.totalorder %s14, 7
      %s164 = scalar_select %p163, %s14, 7
      %s165 = smul.addr %s164, 2
      %s166 = smul.addr %s165, 4
      %s167 = scalar_lea.vmem %s0, %s166
      %p168 = pneg %p35
      %p169 = pneg %p32
      %p170 = scmp.lt.s32.totalorder %s14, 7
      %s171 = scalar_select %p170, %s14, 7
      %s172 = smul.addr %s171, 2
      %s173 = smul.addr %s172, 4
      %s174 = scalar_lea.vmem %s1, %s173
      %p175 = pneg %p61
      %p176 = pneg %p58
      %p177 = scmp.lt.s32.totalorder %s14, 7
      %s178 = scalar_select %p177, %s14, 7
      %s179 = smul.addr %s178, 2
      %s180 = smul.addr %s179, 4
      %s181 = scalar_lea.vmem %s2, %s180
      %p182 = pneg %p87
      %p183 = pneg %p84
      %p184 = pneg %p113
      %p185 = pneg %p110
      %p186 = scmp.lt.s32.totalorder %s14, 7
      %s187 = scalar_select %p186, %s14, 7
      %s188 = smul.addr %s187, 2
      %s189 = smul.addr %s188, 4
      %s190 = scalar_lea.vmem %s3, %s189
      %p191 = scmp.lt.s32.totalorder %s14, 7
      %s192 = scalar_select %p191, %s14, 7
      %s193 = smul.addr %s192, 2
      %s194 = smul.addr %s193, 4
      %s195 = scalar_lea.vmem %s0, %s194
      %p196 = scmp.lt.s32.totalorder %s14, 7
      %s197 = scalar_select %p196, %s14, 7
      %s198 = smul.addr %s197, 2
      %s199 = smul.addr %s198, 4
      %s200 = scalar_lea.vmem %s1, %s199
      %p201 = scmp.lt.s32.totalorder %s14, 7
      %s202 = scalar_select %p201, %s14, 7
      %s203 = smul.addr %s202, 2
      %s204 = smul.addr %s203, 4
      %s205 = scalar_lea.vmem %s2, %s204
      %p206 = scmp.lt.s32.totalorder %s14, 7
      %s207 = scalar_select %p206, %s14, 7
      %s208 = smul.addr %s207, 2
      %s209 = smul.addr %s208, 4
      %s210 = scalar_lea.vmem %s3, %s209
      %v212 = vld [vmem:[%s195] sm:$0xf]
      %v213 = vld [vmem:[%s195 + $0x4] sm:$0xf]
      %v214 = vld [vmem:[%s200] sm:$0xf]
      %v215 = vld [vmem:[%s200 + $0x4] sm:$0xf]
      %v216 = vld [vmem:[%s205] sm:$0xf]
      %v217 = vld [vmem:[%s205 + $0x4] sm:$0xf]
      %v220 = vunpack.c.l.b16 %v212
      %v221 = vunpack.c.l.b16 %v213
      %v222 = vpack.c.b16 %v221, %v220
      %v225 = vunpack.c.l.b16 %v214
      %v226 = vunpack.c.l.b16 %v215
      %v227 = vpack.c.b16 %v226, %v225
      %vm228 = vcmask 261120
      %v230 = vsel %vm228, %v222, 0
      %v233 = vsel %vm228, %v227, 0
      %235 = vmatprep.subr.bf16.mxu0 0
      %236 = vmatpush1.bf16.xpose.msra.mxu0 %v233
      %237 = vmatprep.subr.bf16.mxu0 0
      %238 = vmatpush1.bf16.xpose.msra.mxu0 0
      %239 = vmatprep.subr.bf16.mxu0 0
      %240 = vmatpush1.bf16.xpose.msra.mxu0 0
      %241 = vmatprep.subr.bf16.mxu0 0
      %242 = vmatpush1.bf16.xpose.msra.mxu0 0
      %243 = vmatprep.subr.bf16.mxu0 0
      %244 = vmatpush1.bf16.xpose.msra.mxu0 0
      %245 = vmatprep.subr.bf16.mxu0 0
      %246 = vmatpush1.bf16.xpose.msra.mxu0 0
      %247 = vmatprep.subr.bf16.mxu0 0
      %248 = vmatpush1.bf16.xpose.msra.mxu0 0
      %249 = vmatprep.subr.bf16.mxu0 0
      %250 = vmatpush1.bf16.xpose.msra.mxu0 0
      %251 = vmatprep.subr.bf16.mxu0 0
      %252 = vmatpush1.bf16.xpose.msra.mxu0 0
      %253 = vmatprep.subr.bf16.mxu0 0
      %254 = vmatpush1.bf16.xpose.msra.mxu0 0
      %255 = vmatprep.subr.bf16.mxu0 0
      %256 = vmatpush1.bf16.xpose.msra.mxu0 0
      %257 = vmatprep.subr.bf16.mxu0 0
      %258 = vmatpush1.bf16.xpose.msra.mxu0 0
      %259 = vmatprep.subr.bf16.mxu0 0
      %260 = vmatpush1.bf16.xpose.msra.mxu0 0
      %261 = vmatprep.subr.bf16.mxu0 0
      %262 = vmatpush1.bf16.xpose.msra.mxu0 0
      %263 = vmatprep.subr.bf16.mxu0 0
      %264 = vmatpush1.bf16.xpose.msra.mxu0 0
      %265 = vmatprep.subr.bf16.mxu0 0
      %266 = vmatpush1.bf16.xpose.msra.mxu0 0
      %267 = vmatprep.mubr.bf16.mxu0 0
      %268 = vmatmul.mubr.bf16.gmra.mrb[0].mxu0 %v230
      %v269 = vpop.f32.mrb[0].mxu0
      %v270 = vadd.f32 0.0, %v269
      %v271 = vpop.f32.mrb[0].mxu0
      %v272 = vpop.f32.mrb[0].mxu0
      %v273 = vadd.f32 0.0, %v272
      %v274 = vpop.f32.mrb[0].mxu0
      %275 = vdwg.mxu0
      %v276 = vmul.f32 %v270, 0.17677669
      %v277 = vmul.f32 %v273, 0.17677669
      %vm278 = vcmask 130048
      %v279 = vsel %vm278, %v276, -inf
      %280 = vmax.xlane.f32.xlu0 %v279
      %v281 = vpop.xlane.xlu0 %280
      %v282 = vsel %vm278, %v277, -inf
      %283 = vmax.xlane.f32.xlu0 %v282
      %v284 = vpop.xlane.xlu0 %283
      %v285 = vsub.f32 %v276, %v281
      %v286 = vsub.f32 %v277, %v284
      %v287 = vmul.f32 %v285, 1.442695
      %v288 = vpow.pop %v287
      %v289 = vmul.f32 %v286, 1.442695
      %v290 = vpow.pop %v289
      %v291 = vsel %vm278, %v288, 0.0
      %292 = vadd.xlane.f32.xlu0 %v291
      %v293 = vpop.xlane.xlu0 %292
      %v294 = vsel %vm278, %v290, 0.0
      %295 = vadd.xlane.f32.xlu0 %v294
      %v296 = vpop.xlane.xlu0 %295
      %v297 = vrcp.pop %v293
      %v298 = vrcp.pop %v296
      %v299 = vmul.f32 %v288, %v297
      %v300 = vmul.f32 %v290, %v298
      %v301 = vpack.c.bf16 %v300, %v299
      %v304 = vunpack.c.l.b16 %v216
      %v305 = vunpack.c.l.b16 %v217
      %v306 = vpack.c.b16 %v305, %v304
      %v309 = vsel %vm278, %v301, 0
      %311 = vmatprep.subr.bf16.mxu0 0
      %312 = vmatpush1.bf16.msra.mxu0 %v306
      %313 = vmatprep.subr.bf16.mxu0 0
      %314 = vmatpush1.bf16.msra.mxu0 0
      %315 = vmatprep.subr.bf16.mxu0 0
      %316 = vmatpush1.bf16.msra.mxu0 0
      %317 = vmatprep.subr.bf16.mxu0 0
      %318 = vmatpush1.bf16.msra.mxu0 0
      %319 = vmatprep.subr.bf16.mxu0 0
      %320 = vmatpush1.bf16.msra.mxu0 0
      %321 = vmatprep.subr.bf16.mxu0 0
      %322 = vmatpush1.bf16.msra.mxu0 0
      %323 = vmatprep.subr.bf16.mxu0 0
      %324 = vmatpush1.bf16.msra.mxu0 0
      %325 = vmatprep.subr.bf16.mxu0 0
      %326 = vmatpush1.bf16.msra.mxu0 0
      %327 = vmatprep.subr.bf16.mxu0 0
      %328 = vmatpush1.bf16.msra.mxu0 0
      %329 = vmatprep.subr.bf16.mxu0 0
      %330 = vmatpush1.bf16.msra.mxu0 0
      %331 = vmatprep.subr.bf16.mxu0 0
      %332 = vmatpush1.bf16.msra.mxu0 0
      %333 = vmatprep.subr.bf16.mxu0 0
      %334 = vmatpush1.bf16.msra.mxu0 0
      %335 = vmatprep.subr.bf16.mxu0 0
      %336 = vmatpush1.bf16.msra.mxu0 0
      %337 = vmatprep.subr.bf16.mxu0 0
      %338 = vmatpush1.bf16.msra.mxu0 0
      %339 = vmatprep.subr.bf16.mxu0 0
      %340 = vmatpush1.bf16.msra.mxu0 0
      %341 = vmatprep.subr.bf16.mxu0 0
      %342 = vmatpush1.bf16.msra.mxu0 0
      %343 = vmatprep.mubr.bf16.mxu0 0
      %344 = vmatmul.mubr.bf16.gmra.mrb[0].mxu0 %v309
      %v345 = vpop.f32.mrb[0].mxu0
      %v346 = vadd.f32 0.0, %v345
      %v347 = vpop.f32.mrb[0].mxu0
      %v348 = vpop.f32.mrb[0].mxu0
      %v349 = vadd.f32 0.0, %v348
      %v350 = vpop.f32.mrb[0].mxu0
      %351 = vdwg.mxu0
      %v352 = vpack.c.bf16 %v349, %v346
      %v354 = vunpack.c.l.b16 %v352
      %v355 = vunpack.c.h.b16 %v352
      %v356 = vpack.c.b16 %v354, %v354
      %v357 = vpack.c.b16 %v355, %v355
      %vm360 = vcmask 257024
      %361 = vst.msk [vmem:[%s210] sm:$0xf] %vm360, %v356
      %362 = vst.msk [vmem:[%s210 + $0x4] sm:$0xf] %vm360, %v357
      %p363 = scmp.lt.s32.totalorder %s14, 7
      %s364 = scalar_select %p363, %s14, 7
      %s365 = smul.addr %s364, 2
      %s366 = smul.addr %s365, 4
      %s367 = scalar_lea.vmem %s3, %s366
      // Predicated region
      $region33: #{llama_model2_forward.37} parent=31 // pred_check
        %p368 = pneg %p110
      $region34: #{llama_model2_forward.37} parent=31 // pred_check_branch
        %370 = sbr.rel (%p368) target = $region36
      $region35: #{llama_model2_forward.37} parent=31 // pred_region
        _
      $region36: #{llama_model2_forward.37} parent=31 // pred_fallthru
        _
    $region32: #{llama_model2_forward.37} parent=5 // pred_fallthru
      _
    %p371 = scmp.le.s32.totalorder 2, %s9
    // Predicated region
    $region37: #{llama_model2_forward.37} parent=5 // pred_check
      %p372 = pneg %p371
    $region38: #{llama_model2_forward.37} parent=5 // pred_check_branch
      %374 = sbr.rel (%p372) target = $region40
    $region39: #{llama_model2_forward.37} parent=5 // pred_region
      %s375 = ssub.s32 %s9, 2
      // Predicated region
      $region41: #{llama_model2_forward.37} parent=39 // pred_check
        %p376 = pneg %p116
      $region42: #{llama_model2_forward.37} parent=39 // pred_check_branch
        %378 = sbr.rel (%p376) target = $region44
      $region43: #{llama_model2_forward.37} parent=39 // pred_region
        %p379 = scmp.lt.s32.totalorder %s15, 7
        %s380 = scalar_select %p379, %s15, 7
        %s381 = smul.addr %s380, 2
        %s382 = smul.addr %s381, 4
        %s383 = scalar_lea.vmem %s3, %s382
      $region44: #{llama_model2_forward.37} parent=39 // pred_fallthru
        _
    $region40: #{llama_model2_forward.37} parent=5 // pred_fallthru
      _
  $region6: #{llama_model2_forward.37} parent=0 // loop_footer
    %s13 = sadd.s32 1, %s9
  $region7: #{llama_model2_forward.37} parent=0 // loop_footer_branch
    %8 = sbr.rel target = $region3
  $region8: #{llama_model2_forward.37} parent=0 // loop_exit
    _

// kernel: llama_model2_forward.38
$region0: #{llama_model2_forward.38}
  #allocation0 [shape = 'u32[]', space=smem, size = 0x4, offset = 0x4, fixed_abs, tag = 'smem constant byte address 0x4 - core index']
  #allocation1 [shape = 'u32[144,128]{1,0:T(1,128)}', space=vmem, size = 0x12000, scoped, tag = 'internal scratch']
  #allocation2 [shape = 'f32[32,128]{1,0:T(8,128)}', space=vmem, size = 0x4000, scoped, tag = 'scratch operand']
  %s0 = inlined_call_operand.vmem [shape: bf16[32,128], index: 0, kind: input, shape index: {}]
  %s1 = inlined_call_operand.vmem [shape: bf16[128,128], index: 1, kind: input, shape index: {}]
  %s2 = inlined_call_operand.vmem [shape: f32[1,128], index: 2, kind: input, shape index: {}]
  %s3 = inlined_call_operand.vmem [shape: f32[32,128], index: 3, kind: input, shape index: {}]
  %s4 = inlined_call_operand.vmem [shape: f32[1,128], index: 4, kind: input, shape index: {}]
  %s5 = inlined_call_operand.vmem [shape: f32[1,128], index: 5, kind: input, shape index: {}]
  %s6 = inlined_call_operand.vmem [shape: f32[32,128], index: 6, kind: output, shape index: {}]
  %s7 = sld [smem:[#allocation0]]
  $region42: #{llama_model2_forward.38} parent=0
    _
  %s9 = ssub.s32 1, %s7
  %s10 = scalar_select 0, %s9, %s7
  // Predicated region
  $region2: #{llama_model2_forward.38} parent=0 // pred_check
    _
  $region3: #{llama_model2_forward.38} parent=0 // pred_check_branch
    %12 = sbr.rel (0) target = $region5
  $region4: #{llama_model2_forward.38} parent=0 // pred_region
    _
  $region5: #{llama_model2_forward.38} parent=0 // pred_fallthru
    _
  // Predicated region
  $region6: #{llama_model2_forward.38} parent=0 // pred_check
    _
  $region7: #{llama_model2_forward.38} parent=0 // pred_check_branch
    %14 = sbr.rel (0) target = $region9
  $region8: #{llama_model2_forward.38} parent=0 // pred_region
    _
  $region9: #{llama_model2_forward.38} parent=0 // pred_fallthru
    _
  // Predicated region
  $region10: #{llama_model2_forward.38} parent=0 // pred_check
    _
  $region11: #{llama_model2_forward.38} parent=0 // pred_check_branch
    %16 = sbr.rel (0) target = $region13
  $region12: #{llama_model2_forward.38} parent=0 // pred_region
    _
  $region13: #{llama_model2_forward.38} parent=0 // pred_fallthru
    _
  // Predicated region
  $region14: #{llama_model2_forward.38} parent=0 // pred_check
    _
  $region15: #{llama_model2_forward.38} parent=0 // pred_check_branch
    %18 = sbr.rel (0) target = $region17
  $region16: #{llama_model2_forward.38} parent=0 // pred_region
    _
  $region17: #{llama_model2_forward.38} parent=0 // pred_fallthru
    _
  // Predicated region
  $region18: #{llama_model2_forward.38} parent=0 // pred_check
    _
  $region19: #{llama_model2_forward.38} parent=0 // pred_check_branch
    %20 = sbr.rel (0) target = $region21
  $region20: #{llama_model2_forward.38} parent=0 // pred_region
    _
  $region21: #{llama_model2_forward.38} parent=0 // pred_fallthru
    _
  // Predicated region
  $region22: #{llama_model2_forward.38} parent=0 // pred_check
    _
  $region23: #{llama_model2_forward.38} parent=0 // pred_check_branch
    %22 = sbr.rel (0) target = $region25
  $region24: #{llama_model2_forward.38} parent=0 // pred_region
    _
  $region25: #{llama_model2_forward.38} parent=0 // pred_fallthru
    _
  %p24 = scmp.eq.s32.totalorder 0, 0
  // Predicated region
  $region26: #{llama_model2_forward.38} parent=0 // pred_check
    %p25 = pneg %p24
  $region27: #{llama_model2_forward.38} parent=0 // pred_check_branch
    %27 = sbr.rel (%p25) target = $region29
  $region28: #{llama_model2_forward.38} parent=0 // pred_region
    %28 = vst [vmem:[#allocation2] sm:$0xff] 0.0
    %29 = vst [vmem:[#allocation2 + $0x8] sm:$0xff] 0.0
    %30 = vst [vmem:[#allocation2 + $0x10] sm:$0xff] 0.0
    %31 = vst [vmem:[#allocation2 + $0x18] sm:$0xff] 0.0
  $region29: #{llama_model2_forward.38} parent=0 // pred_fallthru
    _
  %v32 = vld [vmem:[#allocation2] sm:$0xff]
  %v33 = vld [vmem:[#allocation2 + $0x8] sm:$0xff]
  %v34 = vld [vmem:[#allocation2 + $0x10] sm:$0xff]
  %v35 = vld [vmem:[#allocation2 + $0x18] sm:$0xff]
  %v36 = vld [vmem:[%s0] sm:$0xf]
  %v37 = vld [vmem:[%s0 + $0x4] sm:$0xf]
  %v38 = vld [vmem:[%s0 + $0x8] sm:$0xf]
  %v39 = vld [vmem:[%s0 + $0xc] sm:$0xf]
  %v40 = vld [vmem:[%s1] sm:$0xf]
  %v41 = vld [vmem:[%s1 + $0x4] sm:$0xf]
  %v42 = vld [vmem:[%s1 + $0x8] sm:$0xf]
  %v43 = vld [vmem:[%s1 + $0xc] sm:$0xf]
  %v44 = vld [vmem:[%s1 + $0x10] sm:$0xf]
  %v45 = vld [vmem:[%s1 + $0x14] sm:$0xf]
  %v46 = vld [vmem:[%s1 + $0x18] sm:$0xf]
  %v47 = vld [vmem:[%s1 + $0x1c] sm:$0xf]
  %v48 = vld [vmem:[%s1 + $0x20] sm:$0xf]
  %v49 = vld [vmem:[%s1 + $0x24] sm:$0xf]
  %v50 = vld [vmem:[%s1 + $0x28] sm:$0xf]
  %v51 = vld [vmem:[%s1 + $0x2c] sm:$0xf]
  %v52 = vld [vmem:[%s1 + $0x30] sm:$0xf]
  %v53 = vld [vmem:[%s1 + $0x34] sm:$0xf]
  %v54 = vld [vmem:[%s1 + $0x38] sm:$0xf]
  %v55 = vld [vmem:[%s1 + $0x3c] sm:$0xf]
  %v60 = vunpack.c.l.b16 %v36
  %v61 = vunpack.c.l.b16 %v37
  %v62 = vunpack.c.l.b16 %v38
  %v63 = vunpack.c.l.b16 %v39
  %v64 = vpack.c.b16 %v61, %v60
  %v65 = vpack.c.b16 %v63, %v62
  %v84 = vunpack.c.l.b16 %v40
  %v85 = vunpack.c.l.b16 %v41
  %v86 = vunpack.c.l.b16 %v42
  %v87 = vunpack.c.l.b16 %v43
  %v88 = vunpack.c.l.b16 %v44
  %v89 = vunpack.c.l.b16 %v45
  %v90 = vunpack.c.l.b16 %v46
  %v91 = vunpack.c.l.b16 %v47
  %v92 = vunpack.c.l.b16 %v48
  %v93 = vunpack.c.l.b16 %v49
  %v94 = vunpack.c.l.b16 %v50
  %v95 = vunpack.c.l.b16 %v51
  %v96 = vunpack.c.l.b16 %v52
  %v97 = vunpack.c.l.b16 %v53
  %v98 = vunpack.c.l.b16 %v54
  %v99 = vunpack.c.l.b16 %v55
  %v100 = vpack.c.b16 %v85, %v84
  %v101 = vpack.c.b16 %v87, %v86
  %v102 = vpack.c.b16 %v89, %v88
  %v103 = vpack.c.b16 %v91, %v90
  %v104 = vpack.c.b16 %v93, %v92
  %v105 = vpack.c.b16 %v95, %v94
  %v106 = vpack.c.b16 %v97, %v96
  %v107 = vpack.c.b16 %v99, %v98
  %116 = vmatprep.subr.bf16.mxu0 0
  %117 = vmatpush1.bf16.xpose.msra.mxu0 %v100
  %118 = vmatprep.subr.bf16.mxu0 0
  %119 = vmatpush1.bf16.xpose.msra.mxu0 %v101
  %120 = vmatprep.subr.bf16.mxu0 0
  %121 = vmatpush1.bf16.xpose.msra.mxu0 %v102
  %122 = vmatprep.subr.bf16.mxu0 0
  %123 = vmatpush1.bf16.xpose.msra.mxu0 %v103
  %124 = vmatprep.subr.bf16.mxu0 0
  %125 = vmatpush1.bf16.xpose.msra.mxu0 %v104
  %126 = vmatprep.subr.bf16.mxu0 0
  %127 = vmatpush1.bf16.xpose.msra.mxu0 %v105
  %128 = vmatprep.subr.bf16.mxu0 0
  %129 = vmatpush1.bf16.xpose.msra.mxu0 %v106
  %130 = vmatprep.subr.bf16.mxu0 0
  %131 = vmatpush1.bf16.xpose.msra.mxu0 %v107
  %132 = vmatprep.subr.bf16.mxu0 0
  %133 = vmatpush1.bf16.xpose.msra.mxu0 0
  %134 = vmatprep.subr.bf16.mxu0 0
  %135 = vmatpush1.bf16.xpose.msra.mxu0 0
  %136 = vmatprep.subr.bf16.mxu0 0
  %137 = vmatpush1.bf16.xpose.msra.mxu0 0
  %138 = vmatprep.subr.bf16.mxu0 0
  %139 = vmatpush1.bf16.xpose.msra.mxu0 0
  %140 = vmatprep.subr.bf16.mxu0 0
  %141 = vmatpush1.bf16.xpose.msra.mxu0 0
  %142 = vmatprep.subr.bf16.mxu0 0
  %143 = vmatpush1.bf16.xpose.msra.mxu0 0
  %144 = vmatprep.subr.bf16.mxu0 0
  %145 = vmatpush1.bf16.xpose.msra.mxu0 0
  %146 = vmatprep.subr.bf16.mxu0 0
  %147 = vmatpush1.bf16.xpose.msra.mxu0 0
  %148 = vmatprep.mubr.bf16.mxu0 0
  %149 = vmatmul.mubr.bf16.gmra.mrb[0].mxu0 %v64
  %v150 = vpop.f32.mrb[0].mxu0
  %v151 = vadd.f32 0.0, %v150
  %v152 = vpop.f32.mrb[0].mxu0
  %v153 = vpop.f32.mrb[0].mxu0
  %v154 = vadd.f32 0.0, %v153
  %v155 = vpop.f32.mrb[0].mxu0
  %156 = vmatprep.mubr.bf16.mxu0 0
  %157 = vmatmul.mubr.bf16.gmra.mrb[0].mxu0 %v65
  %v158 = vpop.f32.mrb[0].mxu0
  %v159 = vadd.f32 0.0, %v158
  %v160 = vpop.f32.mrb[0].mxu0
  %v161 = vpop.f32.mrb[0].mxu0
  %v162 = vadd.f32 0.0, %v161
  %v163 = vpop.f32.mrb[0].mxu0
  %164 = vdwg.mxu0
  %v165 = vadd.f32 %v32, %v151
  %v166 = vadd.f32 %v33, %v154
  %v167 = vadd.f32 %v34, %v159
  %v168 = vadd.f32 %v35, %v162
  %169 = vst [vmem:[#allocation2] sm:$0xff] %v165
  %170 = vst [vmem:[#allocation2 + $0x8] sm:$0xff] %v166
  %171 = vst [vmem:[#allocation2 + $0x10] sm:$0xff] %v167
  %172 = vst [vmem:[#allocation2 + $0x18] sm:$0xff] %v168
  // Predicated region
  $region30: #{llama_model2_forward.38} parent=0 // pred_check
    %p173 = pneg %p24
  $region31: #{llama_model2_forward.38} parent=0 // pred_check_branch
    %175 = sbr.rel (%p173) target = $region33
  $region32: #{llama_model2_forward.38} parent=0 // pred_region
    %v176 = vld [vmem:[#allocation2] sm:$0xff]
    %v177 = vld [vmem:[#allocation2 + $0x8] sm:$0xff]
    %v178 = vld [vmem:[#allocation2 + $0x10] sm:$0xff]
    %v179 = vld [vmem:[#allocation2 + $0x18] sm:$0xff]
    %v180 = vld [vmem:[%s2] sm:$0x1]
    %v182 = vlaneseq
    %v183 = vshrl.u32 %v182, 7
    %v184 = vsub.s32 0, %v183
    %v185 = vrot.slane %v180, %v184
    %v187 = vadd.f32 %v176, %v185
    %v188 = vadd.f32 %v177, %v185
    %v189 = vadd.f32 %v178, %v185
    %v190 = vadd.f32 %v179, %v185
    %v191 = vld [vmem:[%s3] sm:$0xff]
    %v192 = vld [vmem:[%s3 + $0x8] sm:$0xff]
    %v193 = vld [vmem:[%s3 + $0x10] sm:$0xff]
    %v194 = vld [vmem:[%s3 + $0x18] sm:$0xff]
    %v195 = vadd.f32 %v187, %v191
    %v196 = vadd.f32 %v188, %v192
    %v197 = vadd.f32 %v189, %v193
    %v198 = vadd.f32 %v190, %v194
    %v199 = vld [vmem:[%s4] sm:$0x1]
    %v200 = vld [vmem:[%s5] sm:$0x1]
    %201 = vadd.xlane.f32.xlu0 %v195
    %v202 = vpop.xlane.xlu0 %201
    %203 = vadd.xlane.f32.xlu0 %v196
    %v204 = vpop.xlane.xlu0 %203
    %205 = vadd.xlane.f32.xlu0 %v197
    %v206 = vpop.xlane.xlu0 %205
    %207 = vadd.xlane.f32.xlu0 %v198
    %v208 = vpop.xlane.xlu0 %207
    %v209 = vrcp.pop 128.0
    %v210 = vmul.f32 %v202, %v209
    %v211 = vmul.f32 %v204, %v209
    %v212 = vmul.f32 %v206, %v209
    %v213 = vmul.f32 %v208, %v209
    %v214 = vsub.f32 %v195, %v210
    %v215 = vsub.f32 %v196, %v211
    %v216 = vsub.f32 %v197, %v212
    %v217 = vsub.f32 %v198, %v213
    %v218 = vmul.f32 %v214, %v214
    %v219 = vmul.f32 %v215, %v215
    %v220 = vmul.f32 %v216, %v216
    %v221 = vmul.f32 %v217, %v217
    %222 = vadd.xlane.f32.xlu0 %v218
    %v223 = vpop.xlane.xlu0 %222
    %224 = vadd.xlane.f32.xlu0 %v219
    %v225 = vpop.xlane.xlu0 %224
    %226 = vadd.xlane.f32.xlu0 %v220
    %v227 = vpop.xlane.xlu0 %226
    %228 = vadd.xlane.f32.xlu0 %v221
    %v229 = vpop.xlane.xlu0 %228
    %v230 = vmul.f32 %v223, %v209
    %v231 = vmul.f32 %v225, %v209
    %v232 = vmul.f32 %v227, %v209
    %v233 = vmul.f32 %v229, %v209
    %v234 = vadd.f32 %v230, 1e-05
    %v235 = vadd.f32 %v231, 1e-05
    %v236 = vadd.f32 %v232, 1e-05
    %v237 = vadd.f32 %v233, 1e-05
    %v238 = vrsqrt.pop %v234
    %v239 = vrsqrt.pop %v235
    %v240 = vrsqrt.pop %v236
    %v241 = vrsqrt.pop %v237
    %v242 = vmul.f32 %v214, %v238
    %v243 = vmul.f32 %v215, %v239
    %v244 = vmul.f32 %v216, %v240
    %v245 = vmul.f32 %v217, %v241
    %v247 = vlaneseq
    %v248 = vshrl.u32 %v247, 7
    %v249 = vsub.s32 0, %v248
    %v250 = vrot.slane %v199, %v249
    %v252 = vmul.f32 %v242, %v250
    %v253 = vmul.f32 %v243, %v250
    %v254 = vmul.f32 %v244, %v250
    %v255 = vmul.f32 %v245, %v250
    %v257 = vlaneseq
    %v258 = vshrl.u32 %v257, 7
    %v259 = vsub.s32 0, %v258
    %v260 = vrot.slane %v200, %v259
    %v262 = vadd.f32 %v252, %v260
    %v263 = vadd.f32 %v253, %v260
    %v264 = vadd.f32 %v254, %v260
    %v265 = vadd.f32 %v255, %v260
    %266 = vst [vmem:[%s6] sm:$0xff] %v262
    %267 = vst [vmem:[%s6 + $0x8] sm:$0xff] %v263
    %268 = vst [vmem:[%s6 + $0x10] sm:$0xff] %v264
    %269 = vst [vmem:[%s6 + $0x18] sm:$0xff] %v265
  $region33: #{llama_model2_forward.38} parent=0 // pred_fallthru
    _
  // Predicated region
  $region34: #{llama_model2_forward.38} parent=0 // pred_check
    _
  $region35: #{llama_model2_forward.38} parent=0 // pred_check_branch
    %271 = sbr.rel (0) target = $region37
  $region36: #{llama_model2_forward.38} parent=0 // pred_region
    _
  $region37: #{llama_model2_forward.38} parent=0 // pred_fallthru
    _
  // Predicated region
  $region38: #{llama_model2_forward.38} parent=0 // pred_check
    _
  $region39: #{llama_model2_forward.38} parent=0 // pred_check_branch
    %273 = sbr.rel (0) target = $region41
  $region40: #{llama_model2_forward.38} parent=0 // pred_region
    _
  $region41: #{llama_model2_forward.38} parent=0 // pred_fallthru
    _

// kernel: llama_model2_forward.39
$region0: #{llama_model2_forward.39}
  #allocation0 [shape = 'u32[]', space=smem, size = 0x4, offset = 0x4, fixed_abs, tag = 'smem constant byte address 0x4 - core index']
  #allocation1 [shape = 'u32[144,128]{1,0:T(1,128)}', space=vmem, size = 0x12000, scoped, tag = 'internal scratch']
  #allocation2 [shape = 'f32[32,128]{1,0:T(8,128)}', space=vmem, size = 0x4000, scoped, tag = 'scratch operand']
  %s0 = inlined_call_operand.vmem [shape: bf16[32,128], index: 0, kind: input, shape index: {}]
  %s1 = inlined_call_operand.vmem [shape: bf16[128,128], index: 1, kind: input, shape index: {}]
  %s2 = inlined_call_operand.vmem [shape: f32[1,128], index: 2, kind: input, shape index: {}]
  %s3 = inlined_call_operand.vmem [shape: bf16[32,128], index: 3, kind: output, shape index: {}]
  %s4 = sld [smem:[#allocation0]]
  $region30: #{llama_model2_forward.39} parent=0
    _
  %s6 = ssub.s32 1, %s4
  %s7 = scalar_select 0, %s6, %s4
  // Predicated region
  $region2: #{llama_model2_forward.39} parent=0 // pred_check
    _
  $region3: #{llama_model2_forward.39} parent=0 // pred_check_branch
    %9 = sbr.rel (0) target = $region5
  $region4: #{llama_model2_forward.39} parent=0 // pred_region
    _
  $region5: #{llama_model2_forward.39} parent=0 // pred_fallthru
    _
  // Predicated region
  $region6: #{llama_model2_forward.39} parent=0 // pred_check
    _
  $region7: #{llama_model2_forward.39} parent=0 // pred_check_branch
    %11 = sbr.rel (0) target = $region9
  $region8: #{llama_model2_forward.39} parent=0 // pred_region
    _
  $region9: #{llama_model2_forward.39} parent=0 // pred_fallthru
    _
  // Predicated region
  $region10: #{llama_model2_forward.39} parent=0 // pred_check
    _
  $region11: #{llama_model2_forward.39} parent=0 // pred_check_branch
    %13 = sbr.rel (0) target = $region13
  $region12: #{llama_model2_forward.39} parent=0 // pred_region
    _
  $region13: #{llama_model2_forward.39} parent=0 // pred_fallthru
    _
  %p15 = scmp.eq.s32.totalorder 0, 0
  // Predicated region
  $region14: #{llama_model2_forward.39} parent=0 // pred_check
    %p16 = pneg %p15
  $region15: #{llama_model2_forward.39} parent=0 // pred_check_branch
    %18 = sbr.rel (%p16) target = $region17
  $region16: #{llama_model2_forward.39} parent=0 // pred_region
    %19 = vst [vmem:[#allocation2] sm:$0xff] 0.0
    %20 = vst [vmem:[#allocation2 + $0x8] sm:$0xff] 0.0
    %21 = vst [vmem:[#allocation2 + $0x10] sm:$0xff] 0.0
    %22 = vst [vmem:[#allocation2 + $0x18] sm:$0xff] 0.0
  $region17: #{llama_model2_forward.39} parent=0 // pred_fallthru
    _
  %v23 = vld [vmem:[#allocation2] sm:$0xff]
  %v24 = vld [vmem:[#allocation2 + $0x8] sm:$0xff]
  %v25 = vld [vmem:[#allocation2 + $0x10] sm:$0xff]
  %v26 = vld [vmem:[#allocation2 + $0x18] sm:$0xff]
  %v27 = vld [vmem:[%s0] sm:$0xf]
  %v28 = vld [vmem:[%s0 + $0x4] sm:$0xf]
  %v29 = vld [vmem:[%s0 + $0x8] sm:$0xf]
  %v30 = vld [vmem:[%s0 + $0xc] sm:$0xf]
  %v31 = vld [vmem:[%s1] sm:$0xf]
  %v32 = vld [vmem:[%s1 + $0x4] sm:$0xf]
  %v33 = vld [vmem:[%s1 + $0x8] sm:$0xf]
  %v34 = vld [vmem:[%s1 + $0xc] sm:$0xf]
  %v35 = vld [vmem:[%s1 + $0x10] sm:$0xf]
  %v36 = vld [vmem:[%s1 + $0x14] sm:$0xf]
  %v37 = vld [vmem:[%s1 + $0x18] sm:$0xf]
  %v38 = vld [vmem:[%s1 + $0x1c] sm:$0xf]
  %v39 = vld [vmem:[%s1 + $0x20] sm:$0xf]
  %v40 = vld [vmem:[%s1 + $0x24] sm:$0xf]
  %v41 = vld [vmem:[%s1 + $0x28] sm:$0xf]
  %v42 = vld [vmem:[%s1 + $0x2c] sm:$0xf]
  %v43 = vld [vmem:[%s1 + $0x30] sm:$0xf]
  %v44 = vld [vmem:[%s1 + $0x34] sm:$0xf]
  %v45 = vld [vmem:[%s1 + $0x38] sm:$0xf]
  %v46 = vld [vmem:[%s1 + $0x3c] sm:$0xf]
  %v51 = vunpack.c.l.b16 %v27
  %v52 = vunpack.c.l.b16 %v28
  %v53 = vunpack.c.l.b16 %v29
  %v54 = vunpack.c.l.b16 %v30
  %v55 = vpack.c.b16 %v52, %v51
  %v56 = vpack.c.b16 %v54, %v53
  %v75 = vunpack.c.l.b16 %v31
  %v76 = vunpack.c.l.b16 %v32
  %v77 = vunpack.c.l.b16 %v33
  %v78 = vunpack.c.l.b16 %v34
  %v79 = vunpack.c.l.b16 %v35
  %v80 = vunpack.c.l.b16 %v36
  %v81 = vunpack.c.l.b16 %v37
  %v82 = vunpack.c.l.b16 %v38
  %v83 = vunpack.c.l.b16 %v39
  %v84 = vunpack.c.l.b16 %v40
  %v85 = vunpack.c.l.b16 %v41
  %v86 = vunpack.c.l.b16 %v42
  %v87 = vunpack.c.l.b16 %v43
  %v88 = vunpack.c.l.b16 %v44
  %v89 = vunpack.c.l.b16 %v45
  %v90 = vunpack.c.l.b16 %v46
  %v91 = vpack.c.b16 %v76, %v75
  %v92 = vpack.c.b16 %v78, %v77
  %v93 = vpack.c.b16 %v80, %v79
  %v94 = vpack.c.b16 %v82, %v81
  %v95 = vpack.c.b16 %v84, %v83
  %v96 = vpack.c.b16 %v86, %v85
  %v97 = vpack.c.b16 %v88, %v87
  %v98 = vpack.c.b16 %v90, %v89
  %107 = vmatprep.subr.bf16.mxu0 0
  %108 = vmatpush1.bf16.xpose.msra.mxu0 %v91
  %109 = vmatprep.subr.bf16.mxu0 0
  %110 = vmatpush1.bf16.xpose.msra.mxu0 %v92
  %111 = vmatprep.subr.bf16.mxu0 0
  %112 = vmatpush1.bf16.xpose.msra.mxu0 %v93
  %113 = vmatprep.subr.bf16.mxu0 0
  %114 = vmatpush1.bf16.xpose.msra.mxu0 %v94
  %115 = vmatprep.subr.bf16.mxu0 0
  %116 = vmatpush1.bf16.xpose.msra.mxu0 %v95
  %117 = vmatprep.subr.bf16.mxu0 0
  %118 = vmatpush1.bf16.xpose.msra.mxu0 %v96
  %119 = vmatprep.subr.bf16.mxu0 0
  %120 = vmatpush1.bf16.xpose.msra.mxu0 %v97
  %121 = vmatprep.subr.bf16.mxu0 0
  %122 = vmatpush1.bf16.xpose.msra.mxu0 %v98
  %123 = vmatprep.subr.bf16.mxu0 0
  %124 = vmatpush1.bf16.xpose.msra.mxu0 0
  %125 = vmatprep.subr.bf16.mxu0 0
  %126 = vmatpush1.bf16.xpose.msra.mxu0 0
  %127 = vmatprep.subr.bf16.mxu0 0
  %128 = vmatpush1.bf16.xpose.msra.mxu0 0
  %129 = vmatprep.subr.bf16.mxu0 0
  %130 = vmatpush1.bf16.xpose.msra.mxu0 0
  %131 = vmatprep.subr.bf16.mxu0 0
  %132 = vmatpush1.bf16.xpose.msra.mxu0 0
  %133 = vmatprep.subr.bf16.mxu0 0
  %134 = vmatpush1.bf16.xpose.msra.mxu0 0
  %135 = vmatprep.subr.bf16.mxu0 0
  %136 = vmatpush1.bf16.xpose.msra.mxu0 0
  %137 = vmatprep.subr.bf16.mxu0 0
  %138 = vmatpush1.bf16.xpose.msra.mxu0 0
  %139 = vmatprep.mubr.bf16.mxu0 0
  %140 = vmatmul.mubr.bf16.gmra.mrb[0].mxu0 %v55
  %v141 = vpop.f32.mrb[0].mxu0
  %v142 = vadd.f32 0.0, %v141
  %v143 = vpop.f32.mrb[0].mxu0
  %v144 = vpop.f32.mrb[0].mxu0
  %v145 = vadd.f32 0.0, %v144
  %v146 = vpop.f32.mrb[0].mxu0
  %147 = vmatprep.mubr.bf16.mxu0 0
  %148 = vmatmul.mubr.bf16.gmra.mrb[0].mxu0 %v56
  %v149 = vpop.f32.mrb[0].mxu0
  %v150 = vadd.f32 0.0, %v149
  %v151 = vpop.f32.mrb[0].mxu0
  %v152 = vpop.f32.mrb[0].mxu0
  %v153 = vadd.f32 0.0, %v152
  %v154 = vpop.f32.mrb[0].mxu0
  %155 = vdwg.mxu0
  %v156 = vadd.f32 %v23, %v142
  %v157 = vadd.f32 %v24, %v145
  %v158 = vadd.f32 %v25, %v150
  %v159 = vadd.f32 %v26, %v153
  %160 = vst [vmem:[#allocation2] sm:$0xff] %v156
  %161 = vst [vmem:[#allocation2 + $0x8] sm:$0xff] %v157
  %162 = vst [vmem:[#allocation2 + $0x10] sm:$0xff] %v158
  %163 = vst [vmem:[#allocation2 + $0x18] sm:$0xff] %v159
  // Predicated region
  $region18: #{llama_model2_forward.39} parent=0 // pred_check
    %p164 = pneg %p15
  $region19: #{llama_model2_forward.39} parent=0 // pred_check_branch
    %166 = sbr.rel (%p164) target = $region21
  $region20: #{llama_model2_forward.39} parent=0 // pred_region
    %v167 = vld [vmem:[#allocation2] sm:$0xff]
    %v168 = vld [vmem:[#allocation2 + $0x8] sm:$0xff]
    %v169 = vld [vmem:[#allocation2 + $0x10] sm:$0xff]
    %v170 = vld [vmem:[#allocation2 + $0x18] sm:$0xff]
    %v171 = vld [vmem:[%s2] sm:$0x1]
    %v173 = vlaneseq
    %v174 = vshrl.u32 %v173, 7
    %v175 = vsub.s32 0, %v174
    %v176 = vrot.slane %v171, %v175
    %v178 = vadd.f32 %v167, %v176
    %v179 = vadd.f32 %v168, %v176
    %v180 = vadd.f32 %v169, %v176
    %v181 = vadd.f32 %v170, %v176
    %v182 = vpack.c.bf16 %v179, %v178
    %v183 = vpack.c.bf16 %v181, %v180
    %v186 = vunpack.c.l.b16 %v182
    %v187 = vunpack.c.h.b16 %v182
    %v188 = vunpack.c.l.b16 %v183
    %v189 = vunpack.c.h.b16 %v183
    %v190 = vpack.c.b16 %v186, %v186
    %v191 = vpack.c.b16 %v187, %v187
    %v192 = vpack.c.b16 %v188, %v188
    %v193 = vpack.c.b16 %v189, %v189
    %198 = vst [vmem:[%s3] sm:$0xf] %v190
    %199 = vst [vmem:[%s3 + $0x4] sm:$0xf] %v191
    %200 = vst [vmem:[%s3 + $0x8] sm:$0xf] %v192
    %201 = vst [vmem:[%s3 + $0xc] sm:$0xf] %v193
  $region21: #{llama_model2_forward.39} parent=0 // pred_fallthru
    _
  // Predicated region
  $region22: #{llama_model2_forward.39} parent=0 // pred_check
    _
  $region23: #{llama_model2_forward.39} parent=0 // pred_check_branch
    %203 = sbr.rel (0) target = $region25
  $region24: #{llama_model2_forward.39} parent=0 // pred_region
    _
  $region25: #{llama_model2_forward.39} parent=0 // pred_fallthru
    _
  // Predicated region
  $region26: #{llama_model2_forward.39} parent=0 // pred_check
    _
  $region27: #{llama_model2_forward.39} parent=0 // pred_check_branch
    %205 = sbr.rel (0) target = $region29
  $region28: #{llama_model2_forward.39} parent=0 // pred_region
    _
  $region29: #{llama_model2_forward.39} parent=0 // pred_fallthru
    _

// kernel: llama_model2_forward.35
$region0: #{llama_model2_forward.35}
  #allocation0 [shape = 'u32[]', space=smem, size = 0x4, offset = 0x4, fixed_abs, tag = 'smem constant byte address 0x4 - core index']
  #allocation1 [shape = 'u32[144,128]{1,0:T(1,128)}', space=vmem, size = 0x12000, scoped, tag = 'internal scratch']
  %s0 = inlined_call_operand.vmem [shape: f32[32,128], index: 0, kind: input, shape index: {}]
  %s1 = inlined_call_operand.vmem [shape: f32[1,128], index: 1, kind: input, shape index: {}]
  %s2 = inlined_call_operand.vmem [shape: f32[1,128], index: 2, kind: input, shape index: {}]
  %s3 = inlined_call_operand.vmem [shape: f32[32,128], index: 3, kind: output, shape index: {}]
  %s4 = sld [smem:[#allocation0]]
  $region22: #{llama_model2_forward.35} parent=0
    _
  %s6 = ssub.s32 1, %s4
  %s7 = scalar_select 0, %s6, %s4
  // Predicated region
  $region2: #{llama_model2_forward.35} parent=0 // pred_check
    _
  $region3: #{llama_model2_forward.35} parent=0 // pred_check_branch
    %9 = sbr.rel (0) target = $region5
  $region4: #{llama_model2_forward.35} parent=0 // pred_region
    _
  $region5: #{llama_model2_forward.35} parent=0 // pred_fallthru
    _
  // Predicated region
  $region6: #{llama_model2_forward.35} parent=0 // pred_check
    _
  $region7: #{llama_model2_forward.35} parent=0 // pred_check_branch
    %11 = sbr.rel (0) target = $region9
  $region8: #{llama_model2_forward.35} parent=0 // pred_region
    _
  $region9: #{llama_model2_forward.35} parent=0 // pred_fallthru
    _
  // Predicated region
  $region10: #{llama_model2_forward.35} parent=0 // pred_check
    _
  $region11: #{llama_model2_forward.35} parent=0 // pred_check_branch
    %13 = sbr.rel (0) target = $region13
  $region12: #{llama_model2_forward.35} parent=0 // pred_region
    _
  $region13: #{llama_model2_forward.35} parent=0 // pred_fallthru
    _
  %v14 = vld [vmem:[%s0] sm:$0xff]
  %v15 = vld [vmem:[%s0 + $0x8] sm:$0xff]
  %v16 = vld [vmem:[%s0 + $0x10] sm:$0xff]
  %v17 = vld [vmem:[%s0 + $0x18] sm:$0xff]
  %v18 = vld [vmem:[%s1] sm:$0x1]
  %v19 = vld [vmem:[%s2] sm:$0x1]
  %20 = vadd.xlane.f32.xlu0 %v14
  %v21 = vpop.xlane.xlu0 %20
  %22 = vadd.xlane.f32.xlu0 %v15
  %v23 = vpop.xlane.xlu0 %22
  %24 = vadd.xlane.f32.xlu0 %v16
  %v25 = vpop.xlane.xlu0 %24
  %26 = vadd.xlane.f32.xlu0 %v17
  %v27 = vpop.xlane.xlu0 %26
  %v28 = vrcp.pop 128.0
  %v29 = vmul.f32 %v21, %v28
  %v30 = vmul.f32 %v23, %v28
  %v31 = vmul.f32 %v25, %v28
  %v32 = vmul.f32 %v27, %v28
  %v33 = vsub.f32 %v14, %v29
  %v34 = vsub.f32 %v15, %v30
  %v35 = vsub.f32 %v16, %v31
  %v36 = vsub.f32 %v17, %v32
  %v37 = vmul.f32 %v33, %v33
  %v38 = vmul.f32 %v34, %v34
  %v39 = vmul.f32 %v35, %v35
  %v40 = vmul.f32 %v36, %v36
  %41 = vadd.xlane.f32.xlu0 %v37
  %v42 = vpop.xlane.xlu0 %41
  %43 = vadd.xlane.f32.xlu0 %v38
  %v44 = vpop.xlane.xlu0 %43
  %45 = vadd.xlane.f32.xlu0 %v39
  %v46 = vpop.xlane.xlu0 %45
  %47 = vadd.xlane.f32.xlu0 %v40
  %v48 = vpop.xlane.xlu0 %47
  %v49 = vmul.f32 %v42, %v28
  %v50 = vmul.f32 %v44, %v28
  %v51 = vmul.f32 %v46, %v28
  %v52 = vmul.f32 %v48, %v28
  %v53 = vadd.f32 %v49, 1e-05
  %v54 = vadd.f32 %v50, 1e-05
  %v55 = vadd.f32 %v51, 1e-05
  %v56 = vadd.f32 %v52, 1e-05
  %v57 = vrsqrt.pop %v53
  %v58 = vrsqrt.pop %v54
  %v59 = vrsqrt.pop %v55
  %v60 = vrsqrt.pop %v56
  %v61 = vmul.f32 %v33, %v57
  %v62 = vmul.f32 %v34, %v58
  %v63 = vmul.f32 %v35, %v59
  %v64 = vmul.f32 %v36, %v60
  %v66 = vlaneseq
  %v67 = vshrl.u32 %v66, 7
  %v68 = vsub.s32 0, %v67
  %v69 = vrot.slane %v18, %v68
  %v71 = vmul.f32 %v61, %v69
  %v72 = vmul.f32 %v62, %v69
  %v73 = vmul.f32 %v63, %v69
  %v74 = vmul.f32 %v64, %v69
  %v76 = vlaneseq
  %v77 = vshrl.u32 %v76, 7
  %v78 = vsub.s32 0, %v77
  %v79 = vrot.slane %v19, %v78
  %v81 = vadd.f32 %v71, %v79
  %v82 = vadd.f32 %v72, %v79
  %v83 = vadd.f32 %v73, %v79
  %v84 = vadd.f32 %v74, %v79
  %85 = vst [vmem:[%s3] sm:$0xff] %v81
  %86 = vst [vmem:[%s3 + $0x8] sm:$0xff] %v82
  %87 = vst [vmem:[%s3 + $0x10] sm:$0xff] %v83
  %88 = vst [vmem:[%s3 + $0x18] sm:$0xff] %v84
  // Predicated region
  $region14: #{llama_model2_forward.35} parent=0 // pred_check
    _
  $region15: #{llama_model2_forward.35} parent=0 // pred_check_branch
    %90 = sbr.rel (0) target = $region17
  $region16: #{llama_model2_forward.35} parent=0 // pred_region
    _
  $region17: #{llama_model2_forward.35} parent=0 // pred_fallthru
    _
  // Predicated region
  $region18: #{llama_model2_forward.35} parent=0 // pred_check
    _
  $region19: #{llama_model2_forward.35} parent=0 // pred_check_branch
    %92 = sbr.rel (0) target = $region21
  $region20: #{llama_model2_forward.35} parent=0 // pred_region
    _
  $region21: #{llama_model2_forward.35} parent=0 // pred_fallthru
    _

// kernel: llama_model2_forward.30
$region0: #{llama_model2_forward.30}
  #allocation0 [shape = 'u32[]', space=smem, size = 0x4, offset = 0x4, fixed_abs, tag = 'smem constant byte address 0x4 - core index']
  #allocation1 [shape = 'u32[144,128]{1,0:T(1,128)}', space=vmem, size = 0x12000, scoped, tag = 'internal scratch']
  %s0 = inlined_call_operand.vmem [shape: f32[32,128], index: 0, kind: input, shape index: {}]
  %s1 = inlined_call_operand.vmem [shape: bf16[256,128], index: 1, kind: input, shape index: {}]
  %s2 = inlined_call_operand.vmem [shape: f32[1,256], index: 2, kind: input, shape index: {}]
  %s3 = inlined_call_operand.vmem [shape: bf16[128,256], index: 3, kind: input, shape index: {}]
  %s4 = inlined_call_operand.vmem [shape: f32[1,128], index: 4, kind: input, shape index: {}]
  %s5 = inlined_call_operand.vmem [shape: f32[1,128], index: 5, kind: input, shape index: {}]
  %s6 = inlined_call_operand.vmem [shape: f32[1,128], index: 6, kind: input, shape index: {}]
  %s7 = inlined_call_operand.vmem [shape: f32[32,128], index: 7, kind: output, shape index: {}]
  %s8 = sld [smem:[#allocation0]]
  $region38: #{llama_model2_forward.30} parent=0
    _
  %s10 = ssub.s32 1, %s8
  %s11 = scalar_select 0, %s10, %s8
  // Predicated region
  $region2: #{llama_model2_forward.30} parent=0 // pred_check
    _
  $region3: #{llama_model2_forward.30} parent=0 // pred_check_branch
    %13 = sbr.rel (0) target = $region5
  $region4: #{llama_model2_forward.30} parent=0 // pred_region
    _
  $region5: #{llama_model2_forward.30} parent=0 // pred_fallthru
    _
  // Predicated region
  $region6: #{llama_model2_forward.30} parent=0 // pred_check
    _
  $region7: #{llama_model2_forward.30} parent=0 // pred_check_branch
    %15 = sbr.rel (0) target = $region9
  $region8: #{llama_model2_forward.30} parent=0 // pred_region
    _
  $region9: #{llama_model2_forward.30} parent=0 // pred_fallthru
    _
  // Predicated region
  $region10: #{llama_model2_forward.30} parent=0 // pred_check
    _
  $region11: #{llama_model2_forward.30} parent=0 // pred_check_branch
    %17 = sbr.rel (0) target = $region13
  $region12: #{llama_model2_forward.30} parent=0 // pred_region
    _
  $region13: #{llama_model2_forward.30} parent=0 // pred_fallthru
    _
  // Predicated region
  $region14: #{llama_model2_forward.30} parent=0 // pred_check
    _
  $region15: #{llama_model2_forward.30} parent=0 // pred_check_branch
    %19 = sbr.rel (0) target = $region17
  $region16: #{llama_model2_forward.30} parent=0 // pred_region
    _
  $region17: #{llama_model2_forward.30} parent=0 // pred_fallthru
    _
  // Predicated region
  $region18: #{llama_model2_forward.30} parent=0 // pred_check
    _
  $region19: #{llama_model2_forward.30} parent=0 // pred_check_branch
    %21 = sbr.rel (0) target = $region21
  $region20: #{llama_model2_forward.30} parent=0 // pred_region
    _
  $region21: #{llama_model2_forward.30} parent=0 // pred_fallthru
    _
  // Predicated region
  $region22: #{llama_model2_forward.30} parent=0 // pred_check
    _
  $region23: #{llama_model2_forward.30} parent=0 // pred_check_branch
    %23 = sbr.rel (0) target = $region25
  $region24: #{llama_model2_forward.30} parent=0 // pred_region
    _
  $region25: #{llama_model2_forward.30} parent=0 // pred_fallthru
    _
  // Predicated region
  $region26: #{llama_model2_forward.30} parent=0 // pred_check
    _
  $region27: #{llama_model2_forward.30} parent=0 // pred_check_branch
    %25 = sbr.rel (0) target = $region29
  $region28: #{llama_model2_forward.30} parent=0 // pred_region
    _
  $region29: #{llama_model2_forward.30} parent=0 // pred_fallthru
    _
  %v27 = vld [vmem:[%s0] sm:$0xff]
  %v28 = vld [vmem:[%s0 + $0x8] sm:$0xff]
  %v29 = vld [vmem:[%s0 + $0x10] sm:$0xff]
  %v30 = vld [vmem:[%s0 + $0x18] sm:$0xff]
  %v31 = vpack.c.bf16 %v28, %v27
  %v32 = vpack.c.bf16 %v30, %v29
  %v33 = vld [vmem:[%s1] sm:$0xf]
  %v34 = vld [vmem:[%s1 + $0x4] sm:$0xf]
  %v35 = vld [vmem:[%s1 + $0x8] sm:$0xf]
  %v36 = vld [vmem:[%s1 + $0xc] sm:$0xf]
  %v37 = vld [vmem:[%s1 + $0x10] sm:$0xf]
  %v38 = vld [vmem:[%s1 + $0x14] sm:$0xf]
  %v39 = vld [vmem:[%s1 + $0x18] sm:$0xf]
  %v40 = vld [vmem:[%s1 + $0x1c] sm:$0xf]
  %v41 = vld [vmem:[%s1 + $0x20] sm:$0xf]
  %v42 = vld [vmem:[%s1 + $0x24] sm:$0xf]
  %v43 = vld [vmem:[%s1 + $0x28] sm:$0xf]
  %v44 = vld [vmem:[%s1 + $0x2c] sm:$0xf]
  %v45 = vld [vmem:[%s1 + $0x30] sm:$0xf]
  %v46 = vld [vmem:[%s1 + $0x34] sm:$0xf]
  %v47 = vld [vmem:[%s1 + $0x38] sm:$0xf]
  %v48 = vld [vmem:[%s1 + $0x3c] sm:$0xf]
  %v49 = vld [vmem:[%s1 + $0x40] sm:$0xf]
  %v50 = vld [vmem:[%s1 + $0x44] sm:$0xf]
  %v51 = vld [vmem:[%s1 + $0x48] sm:$0xf]
  %v52 = vld [vmem:[%s1 + $0x4c] sm:$0xf]
  %v53 = vld [vmem:[%s1 + $0x50] sm:$0xf]
  %v54 = vld [vmem:[%s1 + $0x54] sm:$0xf]
  %v55 = vld [vmem:[%s1 + $0x58] sm:$0xf]
  %v56 = vld [vmem:[%s1 + $0x5c] sm:$0xf]
  %v57 = vld [vmem:[%s1 + $0x60] sm:$0xf]
  %v58 = vld [vmem:[%s1 + $0x64] sm:$0xf]
  %v59 = vld [vmem:[%s1 + $0x68] sm:$0xf]
  %v60 = vld [vmem:[%s1 + $0x6c] sm:$0xf]
  %v61 = vld [vmem:[%s1 + $0x70] sm:$0xf]
  %v62 = vld [vmem:[%s1 + $0x74] sm:$0xf]
  %v63 = vld [vmem:[%s1 + $0x78] sm:$0xf]
  %v64 = vld [vmem:[%s1 + $0x7c] sm:$0xf]
  %v65 = vld [vmem:[%s2] sm:$0x3]
  %v67 = vlaneseq
  %v68 = vshrl.u32 %v67, 7
  %v69 = vsub.s32 0, %v68
  %v70 = vrot.slane %v65, %v69
  %v71 = vlaneseq
  %v72 = vshrl.u32 %v71, 7
  %v73 = vsub.s32 1, %v72
  %v74 = vrot.slane %v65, %v73
  %v109 = vunpack.c.l.b16 %v33
  %v110 = vunpack.c.l.b16 %v34
  %v111 = vunpack.c.l.b16 %v35
  %v112 = vunpack.c.l.b16 %v36
  %v113 = vunpack.c.l.b16 %v37
  %v114 = vunpack.c.l.b16 %v38
  %v115 = vunpack.c.l.b16 %v39
  %v116 = vunpack.c.l.b16 %v40
  %v117 = vunpack.c.l.b16 %v41
  %v118 = vunpack.c.l.b16 %v42
  %v119 = vunpack.c.l.b16 %v43
  %v120 = vunpack.c.l.b16 %v44
  %v121 = vunpack.c.l.b16 %v45
  %v122 = vunpack.c.l.b16 %v46
  %v123 = vunpack.c.l.b16 %v47
  %v124 = vunpack.c.l.b16 %v48
  %v125 = vunpack.c.l.b16 %v49
  %v126 = vunpack.c.l.b16 %v50
  %v127 = vunpack.c.l.b16 %v51
  %v128 = vunpack.c.l.b16 %v52
  %v129 = vunpack.c.l.b16 %v53
  %v130 = vunpack.c.l.b16 %v54
  %v131 = vunpack.c.l.b16 %v55
  %v132 = vunpack.c.l.b16 %v56
  %v133 = vunpack.c.l.b16 %v57
  %v134 = vunpack.c.l.b16 %v58
  %v135 = vunpack.c.l.b16 %v59
  %v136 = vunpack.c.l.b16 %v60
  %v137 = vunpack.c.l.b16 %v61
  %v138 = vunpack.c.l.b16 %v62
  %v139 = vunpack.c.l.b16 %v63
  %v140 = vunpack.c.l.b16 %v64
  %v141 = vpack.c.b16 %v110, %v109
  %v142 = vpack.c.b16 %v112, %v111
  %v143 = vpack.c.b16 %v114, %v113
  %v144 = vpack.c.b16 %v116, %v115
  %v145 = vpack.c.b16 %v118, %v117
  %v146 = vpack.c.b16 %v120, %v119
  %v147 = vpack.c.b16 %v122, %v121
  %v148 = vpack.c.b16 %v124, %v123
  %v149 = vpack.c.b16 %v126, %v125
  %v150 = vpack.c.b16 %v128, %v127
  %v151 = vpack.c.b16 %v130, %v129
  %v152 = vpack.c.b16 %v132, %v131
  %v153 = vpack.c.b16 %v134, %v133
  %v154 = vpack.c.b16 %v136, %v135
  %v155 = vpack.c.b16 %v138, %v137
  %v156 = vpack.c.b16 %v140, %v139
  %173 = vmatprep.subr.bf16.mxu0 0
  %174 = vmatpush1.bf16.xpose.msra.mxu0 %v141
  %175 = vmatprep.subr.bf16.mxu0 0
  %176 = vmatpush1.bf16.xpose.msra.mxu0 %v142
  %177 = vmatprep.subr.bf16.mxu0 0
  %178 = vmatpush1.bf16.xpose.msra.mxu0 %v143
  %179 = vmatprep.subr.bf16.mxu0 0
  %180 = vmatpush1.bf16.xpose.msra.mxu0 %v144
  %181 = vmatprep.subr.bf16.mxu0 0
  %182 = vmatpush1.bf16.xpose.msra.mxu0 %v145
  %183 = vmatprep.subr.bf16.mxu0 0
  %184 = vmatpush1.bf16.xpose.msra.mxu0 %v146
  %185 = vmatprep.subr.bf16.mxu0 0
  %186 = vmatpush1.bf16.xpose.msra.mxu0 %v147
  %187 = vmatprep.subr.bf16.mxu0 0
  %188 = vmatpush1.bf16.xpose.msra.mxu0 %v148
  %189 = vmatprep.subr.bf16.mxu0 0
  %190 = vmatpush1.bf16.xpose.msra.mxu0 %v149
  %191 = vmatprep.subr.bf16.mxu0 0
  %192 = vmatpush1.bf16.xpose.msra.mxu0 %v150
  %193 = vmatprep.subr.bf16.mxu0 0
  %194 = vmatpush1.bf16.xpose.msra.mxu0 %v151
  %195 = vmatprep.subr.bf16.mxu0 0
  %196 = vmatpush1.bf16.xpose.msra.mxu0 %v152
  %197 = vmatprep.subr.bf16.mxu0 0
  %198 = vmatpush1.bf16.xpose.msra.mxu0 %v153
  %199 = vmatprep.subr.bf16.mxu0 0
  %200 = vmatpush1.bf16.xpose.msra.mxu0 %v154
  %201 = vmatprep.subr.bf16.mxu0 0
  %202 = vmatpush1.bf16.xpose.msra.mxu0 %v155
  %203 = vmatprep.subr.bf16.mxu0 0
  %204 = vmatpush1.bf16.xpose.msra.mxu0 %v156
  %205 = vmatprep.mubr.bf16.mxu0 0
  %206 = vmatmul.mubr.bf16.gmra.mrb[0].mxu0 %v31
  %v207 = vpop.f32.mrb[0].mxu0
  %v208 = vadd.f32 %v70, %v207
  %v209 = vpop.f32.mrb[0].mxu0
  %v210 = vadd.f32 %v74, %v209
  %v211 = vpop.f32.mrb[0].mxu0
  %v212 = vadd.f32 %v70, %v211
  %v213 = vpop.f32.mrb[0].mxu0
  %v214 = vadd.f32 %v74, %v213
  %215 = vmatprep.mubr.bf16.mxu0 0
  %216 = vmatmul.mubr.bf16.gmra.mrb[0].mxu0 %v32
  %v217 = vpop.f32.mrb[0].mxu0
  %v218 = vadd.f32 %v70, %v217
  %v219 = vpop.f32.mrb[0].mxu0
  %v220 = vadd.f32 %v74, %v219
  %v221 = vpop.f32.mrb[0].mxu0
  %v222 = vadd.f32 %v70, %v221
  %v223 = vpop.f32.mrb[0].mxu0
  %v224 = vadd.f32 %v74, %v223
  %225 = vdwg.mxu0
  %v226 = vmax.f32 %v208, 0.0
  %v227 = vmax.f32 %v210, 0.0
  %v228 = vmax.f32 %v212, 0.0
  %v229 = vmax.f32 %v214, 0.0
  %v230 = vmax.f32 %v218, 0.0
  %v231 = vmax.f32 %v220, 0.0
  %v232 = vmax.f32 %v222, 0.0
  %v233 = vmax.f32 %v224, 0.0
  %v234 = vpack.c.bf16 %v228, %v226
  %v235 = vpack.c.bf16 %v229, %v227
  %v236 = vpack.c.bf16 %v232, %v230
  %v237 = vpack.c.bf16 %v233, %v231
  %v238 = vld [vmem:[%s3] sm:$0xff]
  %v239 = vld [vmem:[%s3 + $0x8] sm:$0xff]
  %v240 = vld [vmem:[%s3 + $0x10] sm:$0xff]
  %v241 = vld [vmem:[%s3 + $0x18] sm:$0xff]
  %v242 = vld [vmem:[%s3 + $0x20] sm:$0xff]
  %v243 = vld [vmem:[%s3 + $0x28] sm:$0xff]
  %v244 = vld [vmem:[%s3 + $0x30] sm:$0xff]
  %v245 = vld [vmem:[%s3 + $0x38] sm:$0xff]
  %v246 = vld [vmem:[%s3 + $0x40] sm:$0xff]
  %v247 = vld [vmem:[%s3 + $0x48] sm:$0xff]
  %v248 = vld [vmem:[%s3 + $0x50] sm:$0xff]
  %v249 = vld [vmem:[%s3 + $0x58] sm:$0xff]
  %v250 = vld [vmem:[%s3 + $0x60] sm:$0xff]
  %v251 = vld [vmem:[%s3 + $0x68] sm:$0xff]
  %v252 = vld [vmem:[%s3 + $0x70] sm:$0xff]
  %v253 = vld [vmem:[%s3 + $0x78] sm:$0xff]
  %v254 = vld [vmem:[%s4] sm:$0x1]
  %v256 = vlaneseq
  %v257 = vshrl.u32 %v256, 7
  %v258 = vsub.s32 0, %v257
  %v259 = vrot.slane %v254, %v258
  %v277 = vunpack.c.l.b16 %v238
  %v278 = vunpack.c.h.b16 %v238
  %v279 = vunpack.c.l.b16 %v239
  %v280 = vunpack.c.h.b16 %v239
  %v281 = vunpack.c.l.b16 %v240
  %v282 = vunpack.c.h.b16 %v240
  %v283 = vunpack.c.l.b16 %v241
  %v284 = vunpack.c.h.b16 %v241
  %v285 = vunpack.c.l.b16 %v242
  %v286 = vunpack.c.h.b16 %v242
  %v287 = vunpack.c.l.b16 %v243
  %v288 = vunpack.c.h.b16 %v243
  %v289 = vunpack.c.l.b16 %v244
  %v290 = vunpack.c.h.b16 %v244
  %v291 = vunpack.c.l.b16 %v245
  %v292 = vunpack.c.h.b16 %v245
  %v293 = vunpack.c.l.b16 %v246
  %v294 = vunpack.c.h.b16 %v246
  %v295 = vunpack.c.l.b16 %v247
  %v296 = vunpack.c.h.b16 %v247
  %v297 = vunpack.c.l.b16 %v248
  %v298 = vunpack.c.h.b16 %v248
  %v299 = vunpack.c.l.b16 %v249
  %v300 = vunpack.c.h.b16 %v249
  %v301 = vunpack.c.l.b16 %v250
  %v302 = vunpack.c.h.b16 %v250
  %v303 = vunpack.c.l.b16 %v251
  %v304 = vunpack.c.h.b16 %v251
  %v305 = vunpack.c.l.b16 %v252
  %v306 = vunpack.c.h.b16 %v252
  %v307 = vunpack.c.l.b16 %v253
  %v308 = vunpack.c.h.b16 %v253
  %v309 = vpack.c.b16 %v279, %v277
  %v310 = vpack.c.b16 %v280, %v278
  %v311 = vpack.c.b16 %v283, %v281
  %v312 = vpack.c.b16 %v284, %v282
  %v313 = vpack.c.b16 %v287, %v285
  %v314 = vpack.c.b16 %v288, %v286
  %v315 = vpack.c.b16 %v291, %v289
  %v316 = vpack.c.b16 %v292, %v290
  %v317 = vpack.c.b16 %v295, %v293
  %v318 = vpack.c.b16 %v296, %v294
  %v319 = vpack.c.b16 %v299, %v297
  %v320 = vpack.c.b16 %v300, %v298
  %v321 = vpack.c.b16 %v303, %v301
  %v322 = vpack.c.b16 %v304, %v302
  %v323 = vpack.c.b16 %v307, %v305
  %v324 = vpack.c.b16 %v308, %v306
  %341 = vmatprep.subr.bf16.mxu0 %v310
  %342 = vmatpush1.bf16.xpose.msra.mxu0 %v309
  %343 = vmatprep.subr.bf16.mxu0 %v312
  %344 = vmatpush1.bf16.xpose.msra.mxu0 %v311
  %345 = vmatprep.subr.bf16.mxu0 %v314
  %346 = vmatpush1.bf16.xpose.msra.mxu0 %v313
  %347 = vmatprep.subr.bf16.mxu0 %v316
  %348 = vmatpush1.bf16.xpose.msra.mxu0 %v315
  %349 = vmatprep.subr.bf16.mxu0 %v318
  %350 = vmatpush1.bf16.xpose.msra.mxu0 %v317
  %351 = vmatprep.subr.bf16.mxu0 %v320
  %352 = vmatpush1.bf16.xpose.msra.mxu0 %v319
  %353 = vmatprep.subr.bf16.mxu0 %v322
  %354 = vmatpush1.bf16.xpose.msra.mxu0 %v321
  %355 = vmatprep.subr.bf16.mxu0 %v324
  %356 = vmatpush1.bf16.xpose.msra.mxu0 %v323
  %357 = vmatprep.subr.bf16.mxu0 0
  %358 = vmatpush1.bf16.xpose.msra.mxu0 0
  %359 = vmatprep.subr.bf16.mxu0 0
  %360 = vmatpush1.bf16.xpose.msra.mxu0 0
  %361 = vmatprep.subr.bf16.mxu0 0
  %362 = vmatpush1.bf16.xpose.msra.mxu0 0
  %363 = vmatprep.subr.bf16.mxu0 0
  %364 = vmatpush1.bf16.xpose.msra.mxu0 0
  %365 = vmatprep.subr.bf16.mxu0 0
  %366 = vmatpush1.bf16.xpose.msra.mxu0 0
  %367 = vmatprep.subr.bf16.mxu0 0
  %368 = vmatpush1.bf16.xpose.msra.mxu0 0
  %369 = vmatprep.subr.bf16.mxu0 0
  %370 = vmatpush1.bf16.xpose.msra.mxu0 0
  %371 = vmatprep.subr.bf16.mxu0 0
  %372 = vmatpush1.bf16.xpose.msra.mxu0 0
  %373 = vmatprep.mubr.bf16.mxu0 %v235
  %374 = vmatmul.mubr.bf16.gmra.mrb[0].mxu0 %v234
  %v375 = vpop.f32.mrb[0].mxu0
  %v376 = vadd.f32 %v259, %v375
  %v377 = vpop.f32.mrb[0].mxu0
  %v378 = vpop.f32.mrb[0].mxu0
  %v379 = vadd.f32 %v259, %v378
  %v380 = vpop.f32.mrb[0].mxu0
  %381 = vmatprep.mubr.bf16.mxu0 %v237
  %382 = vmatmul.mubr.bf16.gmra.mrb[0].mxu0 %v236
  %v383 = vpop.f32.mrb[0].mxu0
  %v384 = vadd.f32 %v259, %v383
  %v385 = vpop.f32.mrb[0].mxu0
  %v386 = vpop.f32.mrb[0].mxu0
  %v387 = vadd.f32 %v259, %v386
  %v388 = vpop.f32.mrb[0].mxu0
  %389 = vdwg.mxu0
  %v390 = vadd.f32 %v27, %v376
  %v391 = vadd.f32 %v28, %v379
  %v392 = vadd.f32 %v29, %v384
  %v393 = vadd.f32 %v30, %v387
  %v394 = vld [vmem:[%s5] sm:$0x1]
  %v395 = vld [vmem:[%s6] sm:$0x1]
  %396 = vadd.xlane.f32.xlu0 %v390
  %v397 = vpop.xlane.xlu0 %396
  %398 = vadd.xlane.f32.xlu0 %v391
  %v399 = vpop.xlane.xlu0 %398
  %400 = vadd.xlane.f32.xlu0 %v392
  %v401 = vpop.xlane.xlu0 %400
  %402 = vadd.xlane.f32.xlu0 %v393
  %v403 = vpop.xlane.xlu0 %402
  %v404 = vrcp.pop 128.0
  %v405 = vmul.f32 %v397, %v404
  %v406 = vmul.f32 %v399, %v404
  %v407 = vmul.f32 %v401, %v404
  %v408 = vmul.f32 %v403, %v404
  %v409 = vsub.f32 %v390, %v405
  %v410 = vsub.f32 %v391, %v406
  %v411 = vsub.f32 %v392, %v407
  %v412 = vsub.f32 %v393, %v408
  %v413 = vmul.f32 %v409, %v409
  %v414 = vmul.f32 %v410, %v410
  %v415 = vmul.f32 %v411, %v411
  %v416 = vmul.f32 %v412, %v412
  %417 = vadd.xlane.f32.xlu0 %v413
  %v418 = vpop.xlane.xlu0 %417
  %419 = vadd.xlane.f32.xlu0 %v414
  %v420 = vpop.xlane.xlu0 %419
  %421 = vadd.xlane.f32.xlu0 %v415
  %v422 = vpop.xlane.xlu0 %421
  %423 = vadd.xlane.f32.xlu0 %v416
  %v424 = vpop.xlane.xlu0 %423
  %v425 = vmul.f32 %v418, %v404
  %v426 = vmul.f32 %v420, %v404
  %v427 = vmul.f32 %v422, %v404
  %v428 = vmul.f32 %v424, %v404
  %v429 = vadd.f32 %v425, 1e-05
  %v430 = vadd.f32 %v426, 1e-05
  %v431 = vadd.f32 %v427, 1e-05
  %v432 = vadd.f32 %v428, 1e-05
  %v433 = vrsqrt.pop %v429
  %v434 = vrsqrt.pop %v430
  %v435 = vrsqrt.pop %v431
  %v436 = vrsqrt.pop %v432
  %v437 = vmul.f32 %v409, %v433
  %v438 = vmul.f32 %v410, %v434
  %v439 = vmul.f32 %v411, %v435
  %v440 = vmul.f32 %v412, %v436
  %v442 = vlaneseq
  %v443 = vshrl.u32 %v442, 7
  %v444 = vsub.s32 0, %v443
  %v445 = vrot.slane %v394, %v444
  %v447 = vmul.f32 %v437, %v445
  %v448 = vmul.f32 %v438, %v445
  %v449 = vmul.f32 %v439, %v445
  %v450 = vmul.f32 %v440, %v445
  %v452 = vlaneseq
  %v453 = vshrl.u32 %v452, 7
  %v454 = vsub.s32 0, %v453
  %v455 = vrot.slane %v395, %v454
  %v457 = vadd.f32 %v447, %v455
  %v458 = vadd.f32 %v448, %v455
  %v459 = vadd.f32 %v449, %v455
  %v460 = vadd.f32 %v450, %v455
  %461 = vst [vmem:[%s7] sm:$0xff] %v457
  %462 = vst [vmem:[%s7 + $0x8] sm:$0xff] %v458
  %463 = vst [vmem:[%s7 + $0x10] sm:$0xff] %v459
  %464 = vst [vmem:[%s7 + $0x18] sm:$0xff] %v460
  // Predicated region
  $region30: #{llama_model2_forward.30} parent=0 // pred_check
    _
  $region31: #{llama_model2_forward.30} parent=0 // pred_check_branch
    %466 = sbr.rel (0) target = $region33
  $region32: #{llama_model2_forward.30} parent=0 // pred_region
    _
  $region33: #{llama_model2_forward.30} parent=0 // pred_fallthru
    _
  // Predicated region
  $region34: #{llama_model2_forward.30} parent=0 // pred_check
    _
  $region35: #{llama_model2_forward.30} parent=0 // pred_check_branch
    %468 = sbr.rel (0) target = $region37
  $region36: #{llama_model2_forward.30} parent=0 // pred_region
    _
  $region37: #{llama_model2_forward.30} parent=0 // pred_fallthru
    _

// kernel: llama_model2_forward.53
$region0: #{llama_model2_forward.53}
  #allocation0 [shape = 'u32[]', space=smem, size = 0x4, offset = 0x4, fixed_abs, tag = 'smem constant byte address 0x4 - core index']
  #allocation1 [shape = 'u32[144,128]{1,0:T(1,128)}', space=vmem, size = 0x12000, scoped, tag = 'internal scratch']
  #allocation2 [shape = 'f32[32,256]{1,0:T(8,128)}', space=vmem, size = 0x8000, scoped, tag = 'scratch operand']
  %s0 = inlined_call_operand.vmem [shape: bf16[32,128], index: 0, kind: input, shape index: {}]
  %s1 = inlined_call_operand.vmem [shape: bf16[256,128], index: 1, kind: input, shape index: {}]
  %s2 = inlined_call_operand.vmem [shape: f32[1,256], index: 2, kind: input, shape index: {}]
  %s3 = inlined_call_operand.hbm [shape: f32[32,256], index: 3, kind: output, shape index: {}]
  %s4 = sld [smem:[#allocation0]]
  $region30: #{llama_model2_forward.53} parent=0
    _
  %s6 = ssub.s32 1, %s4
  %s7 = scalar_select 0, %s6, %s4
  $region1: #{llama_model2_forward.53} parent=0
    #allocation3 [shape = 'u8[32768]{0}', space=vmem, size = 0x8000, scoped, tag = 'output window, operand 0, single buffered']
    #allocation4 [shape = 's32[1]{0}', space=sflag, size = 0x4, scoped, tag = 'scoped memory for llama_model2_forward.53']
    %8 = vsyncpa [#allocation4], 0
    // Predicated region
    $region2: #{llama_model2_forward.53} parent=1 // pred_check
      _
    $region3: #{llama_model2_forward.53} parent=1 // pred_check_branch
      %10 = sbr.rel (0) target = $region5
    $region4: #{llama_model2_forward.53} parent=1 // pred_region
      _
    $region5: #{llama_model2_forward.53} parent=1 // pred_fallthru
      _
    // Predicated region
    $region6: #{llama_model2_forward.53} parent=1 // pred_check
      _
    $region7: #{llama_model2_forward.53} parent=1 // pred_check_branch
      %12 = sbr.rel (0) target = $region9
    $region8: #{llama_model2_forward.53} parent=1 // pred_region
      _
    $region9: #{llama_model2_forward.53} parent=1 // pred_fallthru
      _
    // Predicated region
    $region10: #{llama_model2_forward.53} parent=1 // pred_check
      _
    $region11: #{llama_model2_forward.53} parent=1 // pred_check_branch
      %14 = sbr.rel (0) target = $region13
    $region12: #{llama_model2_forward.53} parent=1 // pred_region
      _
    $region13: #{llama_model2_forward.53} parent=1 // pred_fallthru
      _
    %p16 = scmp.eq.s32.totalorder 0, 0
    // Predicated region
    $region14: #{llama_model2_forward.53} parent=1 // pred_check
      %p17 = pneg %p16
    $region15: #{llama_model2_forward.53} parent=1 // pred_check_branch
      %19 = sbr.rel (%p17) target = $region17
    $region16: #{llama_model2_forward.53} parent=1 // pred_region
      %20 = vst [vmem:[#allocation2] sm:$0xff] 0.0
      %21 = vst [vmem:[#allocation2 + $0x8] sm:$0xff] 0.0
      %22 = vst [vmem:[#allocation2 + $0x10] sm:$0xff] 0.0
      %23 = vst [vmem:[#allocation2 + $0x18] sm:$0xff] 0.0
      %24 = vst [vmem:[#allocation2 + $0x20] sm:$0xff] 0.0
      %25 = vst [vmem:[#allocation2 + $0x28] sm:$0xff] 0.0
      %26 = vst [vmem:[#allocation2 + $0x30] sm:$0xff] 0.0
      %27 = vst [vmem:[#allocation2 + $0x38] sm:$0xff] 0.0
    $region17: #{llama_model2_forward.53} parent=1 // pred_fallthru
      _
    %v28 = vld [vmem:[#allocation2] sm:$0xff]
    %v29 = vld [vmem:[#allocation2 + $0x8] sm:$0xff]
    %v30 = vld [vmem:[#allocation2 + $0x10] sm:$0xff]
    %v31 = vld [vmem:[#allocation2 + $0x18] sm:$0xff]
    %v32 = vld [vmem:[#allocation2 + $0x20] sm:$0xff]
    %v33 = vld [vmem:[#allocation2 + $0x28] sm:$0xff]
    %v34 = vld [vmem:[#allocation2 + $0x30] sm:$0xff]
    %v35 = vld [vmem:[#allocation2 + $0x38] sm:$0xff]
    %v36 = vld [vmem:[%s0] sm:$0xf]
    %v37 = vld [vmem:[%s0 + $0x4] sm:$0xf]
    %v38 = vld [vmem:[%s0 + $0x8] sm:$0xf]
    %v39 = vld [vmem:[%s0 + $0xc] sm:$0xf]
    %v40 = vld [vmem:[%s1] sm:$0xf]
    %v41 = vld [vmem:[%s1 + $0x4] sm:$0xf]
    %v42 = vld [vmem:[%s1 + $0x8] sm:$0xf]
    %v43 = vld [vmem:[%s1 + $0xc] sm:$0xf]
    %v44 = vld [vmem:[%s1 + $0x10] sm:$0xf]
    %v45 = vld [vmem:[%s1 + $0x14] sm:$0xf]
    %v46 = vld [vmem:[%s1 + $0x18] sm:$0xf]
    %v47 = vld [vmem:[%s1 + $0x1c] sm:$0xf]
    %v48 = vld [vmem:[%s1 + $0x20] sm:$0xf]
    %v49 = vld [vmem:[%s1 + $0x24] sm:$0xf]
    %v50 = vld [vmem:[%s1 + $0x28] sm:$0xf]
    %v51 = vld [vmem:[%s1 + $0x2c] sm:$0xf]
    %v52 = vld [vmem:[%s1 + $0x30] sm:$0xf]
    %v53 = vld [vmem:[%s1 + $0x34] sm:$0xf]
    %v54 = vld [vmem:[%s1 + $0x38] sm:$0xf]
    %v55 = vld [vmem:[%s1 + $0x3c] sm:$0xf]
    %v56 = vld [vmem:[%s1 + $0x40] sm:$0xf]
    %v57 = vld [vmem:[%s1 + $0x44] sm:$0xf]
    %v58 = vld [vmem:[%s1 + $0x48] sm:$0xf]
    %v59 = vld [vmem:[%s1 + $0x4c] sm:$0xf]
    %v60 = vld [vmem:[%s1 + $0x50] sm:$0xf]
    %v61 = vld [vmem:[%s1 + $0x54] sm:$0xf]
    %v62 = vld [vmem:[%s1 + $0x58] sm:$0xf]
    %v63 = vld [vmem:[%s1 + $0x5c] sm:$0xf]
    %v64 = vld [vmem:[%s1 + $0x60] sm:$0xf]
    %v65 = vld [vmem:[%s1 + $0x64] sm:$0xf]
    %v66 = vld [vmem:[%s1 + $0x68] sm:$0xf]
    %v67 = vld [vmem:[%s1 + $0x6c] sm:$0xf]
    %v68 = vld [vmem:[%s1 + $0x70] sm:$0xf]
    %v69 = vld [vmem:[%s1 + $0x74] sm:$0xf]
    %v70 = vld [vmem:[%s1 + $0x78] sm:$0xf]
    %v71 = vld [vmem:[%s1 + $0x7c] sm:$0xf]
    %v76 = vunpack.c.l.b16 %v36
    %v77 = vunpack.c.l.b16 %v37
    %v78 = vunpack.c.l.b16 %v38
    %v79 = vunpack.c.l.b16 %v39
    %v80 = vpack.c.b16 %v77, %v76
    %v81 = vpack.c.b16 %v79, %v78
    %v116 = vunpack.c.l.b16 %v40
    %v117 = vunpack.c.l.b16 %v41
    %v118 = vunpack.c.l.b16 %v42
    %v119 = vunpack.c.l.b16 %v43
    %v120 = vunpack.c.l.b16 %v44
    %v121 = vunpack.c.l.b16 %v45
    %v122 = vunpack.c.l.b16 %v46
    %v123 = vunpack.c.l.b16 %v47
    %v124 = vunpack.c.l.b16 %v48
    %v125 = vunpack.c.l.b16 %v49
    %v126 = vunpack.c.l.b16 %v50
    %v127 = vunpack.c.l.b16 %v51
    %v128 = vunpack.c.l.b16 %v52
    %v129 = vunpack.c.l.b16 %v53
    %v130 = vunpack.c.l.b16 %v54
    %v131 = vunpack.c.l.b16 %v55
    %v132 = vunpack.c.l.b16 %v56
    %v133 = vunpack.c.l.b16 %v57
    %v134 = vunpack.c.l.b16 %v58
    %v135 = vunpack.c.l.b16 %v59
    %v136 = vunpack.c.l.b16 %v60
    %v137 = vunpack.c.l.b16 %v61
    %v138 = vunpack.c.l.b16 %v62
    %v139 = vunpack.c.l.b16 %v63
    %v140 = vunpack.c.l.b16 %v64
    %v141 = vunpack.c.l.b16 %v65
    %v142 = vunpack.c.l.b16 %v66
    %v143 = vunpack.c.l.b16 %v67
    %v144 = vunpack.c.l.b16 %v68
    %v145 = vunpack.c.l.b16 %v69
    %v146 = vunpack.c.l.b16 %v70
    %v147 = vunpack.c.l.b16 %v71
    %v148 = vpack.c.b16 %v117, %v116
    %v149 = vpack.c.b16 %v119, %v118
    %v150 = vpack.c.b16 %v121, %v120
    %v151 = vpack.c.b16 %v123, %v122
    %v152 = vpack.c.b16 %v125, %v124
    %v153 = vpack.c.b16 %v127, %v126
    %v154 = vpack.c.b16 %v129, %v128
    %v155 = vpack.c.b16 %v131, %v130
    %v156 = vpack.c.b16 %v133, %v132
    %v157 = vpack.c.b16 %v135, %v134
    %v158 = vpack.c.b16 %v137, %v136
    %v159 = vpack.c.b16 %v139, %v138
    %v160 = vpack.c.b16 %v141, %v140
    %v161 = vpack.c.b16 %v143, %v142
    %v162 = vpack.c.b16 %v145, %v144
    %v163 = vpack.c.b16 %v147, %v146
    %180 = vmatprep.subr.bf16.mxu0 0
    %181 = vmatpush1.bf16.xpose.msra.mxu0 %v148
    %182 = vmatprep.subr.bf16.mxu0 0
    %183 = vmatpush1.bf16.xpose.msra.mxu0 %v149
    %184 = vmatprep.subr.bf16.mxu0 0
    %185 = vmatpush1.bf16.xpose.msra.mxu0 %v150
    %186 = vmatprep.subr.bf16.mxu0 0
    %187 = vmatpush1.bf16.xpose.msra.mxu0 %v151
    %188 = vmatprep.subr.bf16.mxu0 0
    %189 = vmatpush1.bf16.xpose.msra.mxu0 %v152
    %190 = vmatprep.subr.bf16.mxu0 0
    %191 = vmatpush1.bf16.xpose.msra.mxu0 %v153
    %192 = vmatprep.subr.bf16.mxu0 0
    %193 = vmatpush1.bf16.xpose.msra.mxu0 %v154
    %194 = vmatprep.subr.bf16.mxu0 0
    %195 = vmatpush1.bf16.xpose.msra.mxu0 %v155
    %196 = vmatprep.subr.bf16.mxu0 0
    %197 = vmatpush1.bf16.xpose.msra.mxu0 %v156
    %198 = vmatprep.subr.bf16.mxu0 0
    %199 = vmatpush1.bf16.xpose.msra.mxu0 %v157
    %200 = vmatprep.subr.bf16.mxu0 0
    %201 = vmatpush1.bf16.xpose.msra.mxu0 %v158
    %202 = vmatprep.subr.bf16.mxu0 0
    %203 = vmatpush1.bf16.xpose.msra.mxu0 %v159
    %204 = vmatprep.subr.bf16.mxu0 0
    %205 = vmatpush1.bf16.xpose.msra.mxu0 %v160
    %206 = vmatprep.subr.bf16.mxu0 0
    %207 = vmatpush1.bf16.xpose.msra.mxu0 %v161
    %208 = vmatprep.subr.bf16.mxu0 0
    %209 = vmatpush1.bf16.xpose.msra.mxu0 %v162
    %210 = vmatprep.subr.bf16.mxu0 0
    %211 = vmatpush1.bf16.xpose.msra.mxu0 %v163
    %212 = vmatprep.mubr.bf16.mxu0 0
    %213 = vmatmul.mubr.bf16.gmra.mrb[0].mxu0 %v80
    %v214 = vpop.f32.mrb[0].mxu0
    %v215 = vadd.f32 0.0, %v214
    %v216 = vpop.f32.mrb[0].mxu0
    %v217 = vadd.f32 0.0, %v216
    %v218 = vpop.f32.mrb[0].mxu0
    %v219 = vadd.f32 0.0, %v218
    %v220 = vpop.f32.mrb[0].mxu0
    %v221 = vadd.f32 0.0, %v220
    %222 = vmatprep.mubr.bf16.mxu0 0
    %223 = vmatmul.mubr.bf16.gmra.mrb[0].mxu0 %v81
    %v224 = vpop.f32.mrb[0].mxu0
    %v225 = vadd.f32 0.0, %v224
    %v226 = vpop.f32.mrb[0].mxu0
    %v227 = vadd.f32 0.0, %v226
    %v228 = vpop.f32.mrb[0].mxu0
    %v229 = vadd.f32 0.0, %v228
    %v230 = vpop.f32.mrb[0].mxu0
    %v231 = vadd.f32 0.0, %v230
    %232 = vdwg.mxu0
    %v233 = vadd.f32 %v28, %v215
    %v234 = vadd.f32 %v29, %v217
    %v235 = vadd.f32 %v30, %v219
    %v236 = vadd.f32 %v31, %v221
    %v237 = vadd.f32 %v32, %v225
    %v238 = vadd.f32 %v33, %v227
    %v239 = vadd.f32 %v34, %v229
    %v240 = vadd.f32 %v35, %v231
    %241 = vst [vmem:[#allocation2] sm:$0xff] %v233
    %242 = vst [vmem:[#allocation2 + $0x8] sm:$0xff] %v234
    %243 = vst [vmem:[#allocation2 + $0x10] sm:$0xff] %v235
    %244 = vst [vmem:[#allocation2 + $0x18] sm:$0xff] %v236
    %245 = vst [vmem:[#allocation2 + $0x20] sm:$0xff] %v237
    %246 = vst [vmem:[#allocation2 + $0x28] sm:$0xff] %v238
    %247 = vst [vmem:[#allocation2 + $0x30] sm:$0xff] %v239
    %248 = vst [vmem:[#allocation2 + $0x38] sm:$0xff] %v240
    // Predicated region
    $region18: #{llama_model2_forward.53} parent=1 // pred_check
      %p249 = pneg %p16
    $region19: #{llama_model2_forward.53} parent=1 // pred_check_branch
      %251 = sbr.rel (%p249) target = $region21
    $region20: #{llama_model2_forward.53} parent=1 // pred_region
      %v252 = vld [vmem:[#allocation2] sm:$0xff]
      %v253 = vld [vmem:[#allocation2 + $0x8] sm:$0xff]
      %v254 = vld [vmem:[#allocation2 + $0x10] sm:$0xff]
      %v255 = vld [vmem:[#allocation2 + $0x18] sm:$0xff]
      %v256 = vld [vmem:[#allocation2 + $0x20] sm:$0xff]
      %v257 = vld [vmem:[#allocation2 + $0x28] sm:$0xff]
      %v258 = vld [vmem:[#allocation2 + $0x30] sm:$0xff]
      %v259 = vld [vmem:[#allocation2 + $0x38] sm:$0xff]
      %v260 = vld [vmem:[%s2] sm:$0x3]
      %v262 = vlaneseq
      %v263 = vshrl.u32 %v262, 7
      %v264 = vsub.s32 0, %v263
      %v265 = vrot.slane %v260, %v264
      %v266 = vlaneseq
      %v267 = vshrl.u32 %v266, 7
      %v268 = vsub.s32 1, %v267
      %v269 = vrot.slane %v260, %v268
      %v272 = vadd.f32 %v252, %v265
      %v273 = vadd.f32 %v253, %v269
      %v274 = vadd.f32 %v254, %v265
      %v275 = vadd.f32 %v255, %v269
      %v276 = vadd.f32 %v256, %v265
      %v277 = vadd.f32 %v257, %v269
      %v278 = vadd.f32 %v258, %v265
      %v279 = vadd.f32 %v259, %v269
      %280 = vst [vmem:[#allocation3] sm:$0xff] %v272
      %281 = vst [vmem:[#allocation3 + $0x8] sm:$0xff] %v273
      %282 = vst [vmem:[#allocation3 + $0x10] sm:$0xff] %v274
      %283 = vst [vmem:[#allocation3 + $0x18] sm:$0xff] %v275
      %284 = vst [vmem:[#allocation3 + $0x20] sm:$0xff] %v276
      %285 = vst [vmem:[#allocation3 + $0x28] sm:$0xff] %v277
      %286 = vst [vmem:[#allocation3 + $0x30] sm:$0xff] %v278
      %287 = vst [vmem:[#allocation3 + $0x38] sm:$0xff] %v279
    $region21: #{llama_model2_forward.53} parent=1 // pred_fallthru
      _
    // Predicated region
    $region22: #{llama_model2_forward.53} parent=1 // pred_check
      _
    $region23: #{llama_model2_forward.53} parent=1 // pred_check_branch
      %289 = sbr.rel (0) target = $region25
    $region24: #{llama_model2_forward.53} parent=1 // pred_region
      %s291 = ssub.s32 1024, 1024
      %292 = vsyncadd [#allocation4], %s291
      %s293 = sshll.u32 [#allocation3], 4
      %s294 = int_to_ptr.vmem [resolvable:$true] %s293
      %299 = dma.vmem_to_hbm [thread:$0]  %s294, 1024, %s3, [#allocation4], 256, 256, 16
    $region25: #{llama_model2_forward.53} parent=1 // pred_fallthru
      _
    // Predicated region
    $region26: #{llama_model2_forward.53} parent=1 // pred_check
      _
    $region27: #{llama_model2_forward.53} parent=1 // pred_check_branch
      %301 = sbr.rel (0) target = $region29
    $region28: #{llama_model2_forward.53} parent=1 // pred_region
      %302 = dma.done [#allocation4], 1024
    $region29: #{llama_model2_forward.53} parent=1 // pred_fallthru
      _
    %303 = vsyncpa [#allocation4], 1

// kernel: llama_model2_forward.48
$region0: #{llama_model2_forward.48}
  #allocation0 [shape = 'u32[]', space=smem, size = 0x4, offset = 0x4, fixed_abs, tag = 'smem constant byte address 0x4 - core index']
  #allocation1 [shape = 'u32[144,128]{1,0:T(1,128)}', space=vmem, size = 0x12000, scoped, tag = 'internal scratch']
  #allocation2 [shape = 'f32[32,256]{1,0:T(8,128)}', space=vmem, size = 0x8000, scoped, tag = 'scratch operand']
  %s0 = inlined_call_operand.vmem [shape: bf16[32,128], index: 0, kind: input, shape index: {}]
  %s1 = inlined_call_operand.vmem [shape: bf16[256,128], index: 1, kind: input, shape index: {}]
  %s2 = inlined_call_operand.vmem [shape: f32[1,256], index: 2, kind: input, shape index: {}]
  %s3 = inlined_call_operand.vmem [shape: bf16[32,256], index: 3, kind: output, shape index: {}]
  %s4 = sld [smem:[#allocation0]]
  $region30: #{llama_model2_forward.48} parent=0
    _
  %s6 = ssub.s32 1, %s4
  %s7 = scalar_select 0, %s6, %s4
  // Predicated region
  $region2: #{llama_model2_forward.48} parent=0 // pred_check
    _
  $region3: #{llama_model2_forward.48} parent=0 // pred_check_branch
    %9 = sbr.rel (0) target = $region5
  $region4: #{llama_model2_forward.48} parent=0 // pred_region
    _
  $region5: #{llama_model2_forward.48} parent=0 // pred_fallthru
    _
  // Predicated region
  $region6: #{llama_model2_forward.48} parent=0 // pred_check
    _
  $region7: #{llama_model2_forward.48} parent=0 // pred_check_branch
    %11 = sbr.rel (0) target = $region9
  $region8: #{llama_model2_forward.48} parent=0 // pred_region
    _
  $region9: #{llama_model2_forward.48} parent=0 // pred_fallthru
    _
  // Predicated region
  $region10: #{llama_model2_forward.48} parent=0 // pred_check
    _
  $region11: #{llama_model2_forward.48} parent=0 // pred_check_branch
    %13 = sbr.rel (0) target = $region13
  $region12: #{llama_model2_forward.48} parent=0 // pred_region
    _
  $region13: #{llama_model2_forward.48} parent=0 // pred_fallthru
    _
  %p15 = scmp.eq.s32.totalorder 0, 0
  // Predicated region
  $region14: #{llama_model2_forward.48} parent=0 // pred_check
    %p16 = pneg %p15
  $region15: #{llama_model2_forward.48} parent=0 // pred_check_branch
    %18 = sbr.rel (%p16) target = $region17
  $region16: #{llama_model2_forward.48} parent=0 // pred_region
    %19 = vst [vmem:[#allocation2] sm:$0xff] 0.0
    %20 = vst [vmem:[#allocation2 + $0x8] sm:$0xff] 0.0
    %21 = vst [vmem:[#allocation2 + $0x10] sm:$0xff] 0.0
    %22 = vst [vmem:[#allocation2 + $0x18] sm:$0xff] 0.0
    %23 = vst [vmem:[#allocation2 + $0x20] sm:$0xff] 0.0
    %24 = vst [vmem:[#allocation2 + $0x28] sm:$0xff] 0.0
    %25 = vst [vmem:[#allocation2 + $0x30] sm:$0xff] 0.0
    %26 = vst [vmem:[#allocation2 + $0x38] sm:$0xff] 0.0
  $region17: #{llama_model2_forward.48} parent=0 // pred_fallthru
    _
  %v27 = vld [vmem:[#allocation2] sm:$0xff]
  %v28 = vld [vmem:[#allocation2 + $0x8] sm:$0xff]
  %v29 = vld [vmem:[#allocation2 + $0x10] sm:$0xff]
  %v30 = vld [vmem:[#allocation2 + $0x18] sm:$0xff]
  %v31 = vld [vmem:[#allocation2 + $0x20] sm:$0xff]
  %v32 = vld [vmem:[#allocation2 + $0x28] sm:$0xff]
  %v33 = vld [vmem:[#allocation2 + $0x30] sm:$0xff]
  %v34 = vld [vmem:[#allocation2 + $0x38] sm:$0xff]
  %v35 = vld [vmem:[%s0] sm:$0xf]
  %v36 = vld [vmem:[%s0 + $0x4] sm:$0xf]
  %v37 = vld [vmem:[%s0 + $0x8] sm:$0xf]
  %v38 = vld [vmem:[%s0 + $0xc] sm:$0xf]
  %v39 = vld [vmem:[%s1] sm:$0xf]
  %v40 = vld [vmem:[%s1 + $0x4] sm:$0xf]
  %v41 = vld [vmem:[%s1 + $0x8] sm:$0xf]
  %v42 = vld [vmem:[%s1 + $0xc] sm:$0xf]
  %v43 = vld [vmem:[%s1 + $0x10] sm:$0xf]
  %v44 = vld [vmem:[%s1 + $0x14] sm:$0xf]
  %v45 = vld [vmem:[%s1 + $0x18] sm:$0xf]
  %v46 = vld [vmem:[%s1 + $0x1c] sm:$0xf]
  %v47 = vld [vmem:[%s1 + $0x20] sm:$0xf]
  %v48 = vld [vmem:[%s1 + $0x24] sm:$0xf]
  %v49 = vld [vmem:[%s1 + $0x28] sm:$0xf]
  %v50 = vld [vmem:[%s1 + $0x2c] sm:$0xf]
  %v51 = vld [vmem:[%s1 + $0x30] sm:$0xf]
  %v52 = vld [vmem:[%s1 + $0x34] sm:$0xf]
  %v53 = vld [vmem:[%s1 + $0x38] sm:$0xf]
  %v54 = vld [vmem:[%s1 + $0x3c] sm:$0xf]
  %v55 = vld [vmem:[%s1 + $0x40] sm:$0xf]
  %v56 = vld [vmem:[%s1 + $0x44] sm:$0xf]
  %v57 = vld [vmem:[%s1 + $0x48] sm:$0xf]
  %v58 = vld [vmem:[%s1 + $0x4c] sm:$0xf]
  %v59 = vld [vmem:[%s1 + $0x50] sm:$0xf]
  %v60 = vld [vmem:[%s1 + $0x54] sm:$0xf]
  %v61 = vld [vmem:[%s1 + $0x58] sm:$0xf]
  %v62 = vld [vmem:[%s1 + $0x5c] sm:$0xf]
  %v63 = vld [vmem:[%s1 + $0x60] sm:$0xf]
  %v64 = vld [vmem:[%s1 + $0x64] sm:$0xf]
  %v65 = vld [vmem:[%s1 + $0x68] sm:$0xf]
  %v66 = vld [vmem:[%s1 + $0x6c] sm:$0xf]
  %v67 = vld [vmem:[%s1 + $0x70] sm:$0xf]
  %v68 = vld [vmem:[%s1 + $0x74] sm:$0xf]
  %v69 = vld [vmem:[%s1 + $0x78] sm:$0xf]
  %v70 = vld [vmem:[%s1 + $0x7c] sm:$0xf]
  %v75 = vunpack.c.l.b16 %v35
  %v76 = vunpack.c.l.b16 %v36
  %v77 = vunpack.c.l.b16 %v37
  %v78 = vunpack.c.l.b16 %v38
  %v79 = vpack.c.b16 %v76, %v75
  %v80 = vpack.c.b16 %v78, %v77
  %v115 = vunpack.c.l.b16 %v39
  %v116 = vunpack.c.l.b16 %v40
  %v117 = vunpack.c.l.b16 %v41
  %v118 = vunpack.c.l.b16 %v42
  %v119 = vunpack.c.l.b16 %v43
  %v120 = vunpack.c.l.b16 %v44
  %v121 = vunpack.c.l.b16 %v45
  %v122 = vunpack.c.l.b16 %v46
  %v123 = vunpack.c.l.b16 %v47
  %v124 = vunpack.c.l.b16 %v48
  %v125 = vunpack.c.l.b16 %v49
  %v126 = vunpack.c.l.b16 %v50
  %v127 = vunpack.c.l.b16 %v51
  %v128 = vunpack.c.l.b16 %v52
  %v129 = vunpack.c.l.b16 %v53
  %v130 = vunpack.c.l.b16 %v54
  %v131 = vunpack.c.l.b16 %v55
  %v132 = vunpack.c.l.b16 %v56
  %v133 = vunpack.c.l.b16 %v57
  %v134 = vunpack.c.l.b16 %v58
  %v135 = vunpack.c.l.b16 %v59
  %v136 = vunpack.c.l.b16 %v60
  %v137 = vunpack.c.l.b16 %v61
  %v138 = vunpack.c.l.b16 %v62
  %v139 = vunpack.c.l.b16 %v63
  %v140 = vunpack.c.l.b16 %v64
  %v141 = vunpack.c.l.b16 %v65
  %v142 = vunpack.c.l.b16 %v66
  %v143 = vunpack.c.l.b16 %v67
  %v144 = vunpack.c.l.b16 %v68
  %v145 = vunpack.c.l.b16 %v69
  %v146 = vunpack.c.l.b16 %v70
  %v147 = vpack.c.b16 %v116, %v115
  %v148 = vpack.c.b16 %v118, %v117
  %v149 = vpack.c.b16 %v120, %v119
  %v150 = vpack.c.b16 %v122, %v121
  %v151 = vpack.c.b16 %v124, %v123
  %v152 = vpack.c.b16 %v126, %v125
  %v153 = vpack.c.b16 %v128, %v127
  %v154 = vpack.c.b16 %v130, %v129
  %v155 = vpack.c.b16 %v132, %v131
  %v156 = vpack.c.b16 %v134, %v133
  %v157 = vpack.c.b16 %v136, %v135
  %v158 = vpack.c.b16 %v138, %v137
  %v159 = vpack.c.b16 %v140, %v139
  %v160 = vpack.c.b16 %v142, %v141
  %v161 = vpack.c.b16 %v144, %v143
  %v162 = vpack.c.b16 %v146, %v145
  %179 = vmatprep.subr.bf16.mxu0 0
  %180 = vmatpush1.bf16.xpose.msra.mxu0 %v147
  %181 = vmatprep.subr.bf16.mxu0 0
  %182 = vmatpush1.bf16.xpose.msra.mxu0 %v148
  %183 = vmatprep.subr.bf16.mxu0 0
  %184 = vmatpush1.bf16.xpose.msra.mxu0 %v149
  %185 = vmatprep.subr.bf16.mxu0 0
  %186 = vmatpush1.bf16.xpose.msra.mxu0 %v150
  %187 = vmatprep.subr.bf16.mxu0 0
  %188 = vmatpush1.bf16.xpose.msra.mxu0 %v151
  %189 = vmatprep.subr.bf16.mxu0 0
  %190 = vmatpush1.bf16.xpose.msra.mxu0 %v152
  %191 = vmatprep.subr.bf16.mxu0 0
  %192 = vmatpush1.bf16.xpose.msra.mxu0 %v153
  %193 = vmatprep.subr.bf16.mxu0 0
  %194 = vmatpush1.bf16.xpose.msra.mxu0 %v154
  %195 = vmatprep.subr.bf16.mxu0 0
  %196 = vmatpush1.bf16.xpose.msra.mxu0 %v155
  %197 = vmatprep.subr.bf16.mxu0 0
  %198 = vmatpush1.bf16.xpose.msra.mxu0 %v156
  %199 = vmatprep.subr.bf16.mxu0 0
  %200 = vmatpush1.bf16.xpose.msra.mxu0 %v157
  %201 = vmatprep.subr.bf16.mxu0 0
  %202 = vmatpush1.bf16.xpose.msra.mxu0 %v158
  %203 = vmatprep.subr.bf16.mxu0 0
  %204 = vmatpush1.bf16.xpose.msra.mxu0 %v159
  %205 = vmatprep.subr.bf16.mxu0 0
  %206 = vmatpush1.bf16.xpose.msra.mxu0 %v160
  %207 = vmatprep.subr.bf16.mxu0 0
  %208 = vmatpush1.bf16.xpose.msra.mxu0 %v161
  %209 = vmatprep.subr.bf16.mxu0 0
  %210 = vmatpush1.bf16.xpose.msra.mxu0 %v162
  %211 = vmatprep.mubr.bf16.mxu0 0
  %212 = vmatmul.mubr.bf16.gmra.mrb[0].mxu0 %v79
  %v213 = vpop.f32.mrb[0].mxu0
  %v214 = vadd.f32 0.0, %v213
  %v215 = vpop.f32.mrb[0].mxu0
  %v216 = vadd.f32 0.0, %v215
  %v217 = vpop.f32.mrb[0].mxu0
  %v218 = vadd.f32 0.0, %v217
  %v219 = vpop.f32.mrb[0].mxu0
  %v220 = vadd.f32 0.0, %v219
  %221 = vmatprep.mubr.bf16.mxu0 0
  %222 = vmatmul.mubr.bf16.gmra.mrb[0].mxu0 %v80
  %v223 = vpop.f32.mrb[0].mxu0
  %v224 = vadd.f32 0.0, %v223
  %v225 = vpop.f32.mrb[0].mxu0
  %v226 = vadd.f32 0.0, %v225
  %v227 = vpop.f32.mrb[0].mxu0
  %v228 = vadd.f32 0.0, %v227
  %v229 = vpop.f32.mrb[0].mxu0
  %v230 = vadd.f32 0.0, %v229
  %231 = vdwg.mxu0
  %v232 = vadd.f32 %v27, %v214
  %v233 = vadd.f32 %v28, %v216
  %v234 = vadd.f32 %v29, %v218
  %v235 = vadd.f32 %v30, %v220
  %v236 = vadd.f32 %v31, %v224
  %v237 = vadd.f32 %v32, %v226
  %v238 = vadd.f32 %v33, %v228
  %v239 = vadd.f32 %v34, %v230
  %240 = vst [vmem:[#allocation2] sm:$0xff] %v232
  %241 = vst [vmem:[#allocation2 + $0x8] sm:$0xff] %v233
  %242 = vst [vmem:[#allocation2 + $0x10] sm:$0xff] %v234
  %243 = vst [vmem:[#allocation2 + $0x18] sm:$0xff] %v235
  %244 = vst [vmem:[#allocation2 + $0x20] sm:$0xff] %v236
  %245 = vst [vmem:[#allocation2 + $0x28] sm:$0xff] %v237
  %246 = vst [vmem:[#allocation2 + $0x30] sm:$0xff] %v238
  %247 = vst [vmem:[#allocation2 + $0x38] sm:$0xff] %v239
  // Predicated region
  $region18: #{llama_model2_forward.48} parent=0 // pred_check
    %p248 = pneg %p15
  $region19: #{llama_model2_forward.48} parent=0 // pred_check_branch
    %250 = sbr.rel (%p248) target = $region21
  $region20: #{llama_model2_forward.48} parent=0 // pred_region
    %v251 = vld [vmem:[#allocation2] sm:$0xff]
    %v252 = vld [vmem:[#allocation2 + $0x8] sm:$0xff]
    %v253 = vld [vmem:[#allocation2 + $0x10] sm:$0xff]
    %v254 = vld [vmem:[#allocation2 + $0x18] sm:$0xff]
    %v255 = vld [vmem:[#allocation2 + $0x20] sm:$0xff]
    %v256 = vld [vmem:[#allocation2 + $0x28] sm:$0xff]
    %v257 = vld [vmem:[#allocation2 + $0x30] sm:$0xff]
    %v258 = vld [vmem:[#allocation2 + $0x38] sm:$0xff]
    %v259 = vld [vmem:[%s2] sm:$0x3]
    %v261 = vlaneseq
    %v262 = vshrl.u32 %v261, 7
    %v263 = vsub.s32 0, %v262
    %v264 = vrot.slane %v259, %v263
    %v265 = vlaneseq
    %v266 = vshrl.u32 %v265, 7
    %v267 = vsub.s32 1, %v266
    %v268 = vrot.slane %v259, %v267
    %v271 = vadd.f32 %v251, %v264
    %v272 = vadd.f32 %v252, %v268
    %v273 = vadd.f32 %v253, %v264
    %v274 = vadd.f32 %v254, %v268
    %v275 = vadd.f32 %v255, %v264
    %v276 = vadd.f32 %v256, %v268
    %v277 = vadd.f32 %v257, %v264
    %v278 = vadd.f32 %v258, %v268
    %v279 = vpack.c.bf16 %v273, %v271
    %v280 = vpack.c.bf16 %v274, %v272
    %v281 = vpack.c.bf16 %v277, %v275
    %v282 = vpack.c.bf16 %v278, %v276
    %v287 = vunpack.c.l.b16 %v279
    %v288 = vunpack.c.l.b16 %v280
    %v289 = vunpack.c.h.b16 %v279
    %v290 = vunpack.c.h.b16 %v280
    %v291 = vunpack.c.l.b16 %v281
    %v292 = vunpack.c.l.b16 %v282
    %v293 = vunpack.c.h.b16 %v281
    %v294 = vunpack.c.h.b16 %v282
    %v295 = vpack.c.b16 %v288, %v287
    %v296 = vpack.c.b16 %v290, %v289
    %v297 = vpack.c.b16 %v292, %v291
    %v298 = vpack.c.b16 %v294, %v293
    %303 = vst [vmem:[%s3] sm:$0xff] %v295
    %304 = vst [vmem:[%s3 + $0x8] sm:$0xff] %v296
    %305 = vst [vmem:[%s3 + $0x10] sm:$0xff] %v297
    %306 = vst [vmem:[%s3 + $0x18] sm:$0xff] %v298
  $region21: #{llama_model2_forward.48} parent=0 // pred_fallthru
    _
  // Predicated region
  $region22: #{llama_model2_forward.48} parent=0 // pred_check
    _
  $region23: #{llama_model2_forward.48} parent=0 // pred_check_branch
    %308 = sbr.rel (0) target = $region25
  $region24: #{llama_model2_forward.48} parent=0 // pred_region
    _
  $region25: #{llama_model2_forward.48} parent=0 // pred_fallthru
    _
  // Predicated region
  $region26: #{llama_model2_forward.48} parent=0 // pred_check
    _
  $region27: #{llama_model2_forward.48} parent=0 // pred_check_branch
    %310 = sbr.rel (0) target = $region29
  $region28: #{llama_model2_forward.48} parent=0 // pred_region
    _
  $region29: #{llama_model2_forward.48} parent=0 // pred_fallthru
    _

</llo_original>
